<compile_context>
chip_gen: v6e
topology: v6e:2x2x1
jax: 0.10.0
libtpu: 0.0.40
codegen_flags: <defaults>
</compile_context>

<pallas_src>
import functools

import jax
import jax.numpy as jnp
from jax.experimental import pallas as pl
from jax.experimental.pallas import tpu as pltpu

LANE = 128


def _round_up(x, m):
    return ((x + m - 1) // m) * m


def _conv3x3_kernel(x_ref, w_ref, b_ref, o_ref, *, th, ow, stride):
    """One grid step: TH output rows x OW cols x 128 output channels.

    x_ref: (1, s, s, L_h_tile, L_w, Cinp)  phase-decomposed padded input tile
           x_ref[0, p, q, i, j, c] == x_padded[s*i + p, s*j + q, c]
    w_ref: (9, Cinp, TCOUT)   taps flattened as kh*3 + kw
    b_ref: (1, TCOUT)
    o_ref: (1, th, ow, TCOUT)
    """
    s = stride
    tcout = o_ref.shape[-1]
    cinp = x_ref.shape[-1]

    # Load all 9 taps once (no per-tap ref slices / re-broadcasts).
    w = w_ref[...]                                      # (9, Cinp, TCOUT)

    # One partial accumulator per kernel row -> ILP on the add chain.
    accs = [jnp.zeros((th * ow, tcout), jnp.float32) for _ in range(3)]

    for ph in range(s):
        khs = [kh for kh in range(3) if kh % s == ph]
        if not khs:
            continue
        for pw in range(s):
            kws = [kw for kw in range(3) if kw % s == pw]
            if not kws:
                continue
            # Load this phase plane once; taps are static shifted slices of it.
            xpp = x_ref[0, ph, pw]                      # (L_h_tile, L_w, Cinp)
            for kh in khs:
                bh = kh // s
                rows = xpp[bh:bh + th]                  # (th, L_w, Cinp)
                for kw in kws:
                    bw = kw // s
                    win = rows[:, bw:bw + ow, :].reshape(th * ow, cinp)
                    accs[kh] += jnp.dot(
                        win, w[kh * 3 + kw],
                        preferred_element_type=jnp.float32)

    acc = (accs[0] + accs[1]) + accs[2]
    acc = acc + b_ref[...].astype(jnp.float32)          # (1, TCOUT) broadcast
    o_ref[0] = acc.reshape(th, ow, tcout).astype(o_ref.dtype)


def conv3x3(x_nchw, weight_oihw, bias, stride=1, padding=1):
    """Pallas TPU equivalent of nn.Conv2d(Cin, Cout, 3, stride, padding).

    x_nchw:      (N, Cin, H, W)
    weight_oihw: (Cout, Cin, 3, 3)   (torch OIHW layout)
    bias:        (Cout,)
    returns:     (N, Cout, OH, OW)   float32
    """
    # TODO(synk): groups > 1 is not implemented (module default is groups=1).
    N, Cin, H, W = x_nchw.shape
    Cout = weight_oihw.shape[0]
    s = int(stride)
    p = int(padding)
    K = 3
    OH = (H + 2 * p - K) // s + 1
    OW = (W + 2 * p - K) // s + 1

    # Lane-dense channel padding (128-lane axis), output channel tile = 128.
    Cinp = _round_up(Cin, LANE)
    Coutp = _round_up(Cout, LANE)
    TCOUT = LANE

    halo = (K - 1) // s                              # extra phase rows/cols

    # ---- choose the output-row tile TH from a VMEM budget ----------------
    L_w = max(OW + halo, -(-(W + 2 * p) // s))
    in_bytes_per_phase_row = s * s * L_w * Cinp * 4
    IN_BUDGET = 6 * 1024 * 1024
    OUT_BUDGET = 4 * 1024 * 1024
    th_in = max(1, IN_BUDGET // in_bytes_per_phase_row - halo)
    th_out = max(1, OUT_BUDGET // (OW * TCOUT * 4))
    TH = max(1, min(OH, th_in, th_out))
    NT = -(-OH // TH)                                # ceil(OH / TH)
    L_h_tile = TH + halo
    L_h = max(NT * TH + halo, -(-(H + 2 * p) // s))

    # ---- wrapper-side layout: NCHW -> NHWC, pad, (phase-decompose) -------
    x = jnp.transpose(x_nchw, (0, 2, 3, 1)).astype(jnp.float32)     # NHWC
    xp = jnp.pad(x, ((0, 0),
                     (p, s * L_h - H - p),
                     (p, s * L_w - W - p),
                     (0, Cinp - Cin)))
    if s == 1:
        # stride 1: phase transform is an identity -> just add singleton dims.
        xph = xp[:, None, None]                      # (N, 1, 1, L_h, L_w, Cinp)
    else:
        xph = jnp.transpose(
            xp.reshape(N, L_h, s, L_w, s, Cinp), (0, 2, 4, 1, 3, 5))

    # Row tiles with a `halo`-row overlap, folded with batch into one axis.
    if NT == 1:
        x_tiles = xph[:, :, :, :L_h_tile]            # (N, s, s, L_h_tile, L_w, Cinp)
    else:
        row_idx = (jnp.arange(NT)[:, None] * TH
                   + jnp.arange(L_h_tile)[None, :]).reshape(-1)
        x_tiles = jnp.take(xph, row_idx, axis=3)
        x_tiles = x_tiles.reshape(N, s, s, NT, L_h_tile, L_w, Cinp)
        x_tiles = jnp.transpose(x_tiles, (0, 3, 1, 2, 4, 5, 6))
        x_tiles = x_tiles.reshape(N * NT, s, s, L_h_tile, L_w, Cinp)

    # Weights: (Cout, Cin, 3, 3) -> (9, Cinp, Coutp); tap index = kh*3 + kw.
    w = jnp.transpose(weight_oihw, (2, 3, 1, 0)).reshape(9, Cin, Cout)
    w = jnp.pad(w.astype(jnp.float32), ((0, 0), (0, Cinp - Cin), (0, Coutp - Cout)))
    b = jnp.pad(bias.astype(jnp.float32), (0, Coutp - Cout)).reshape(1, Coutp)

    # ---- VMEM sizing (double-buffered in/out + weights) -------------------
    in_blk = s * s * L_h_tile * L_w * Cinp * 4
    out_blk = TH * OW * TCOUT * 4
    w_blk = 9 * Cinp * TCOUT * 4
    need = 2 * (in_blk + out_blk + w_blk) + out_blk + 4 * TCOUT
    vmem_limit = int(min(56 * 2**20, max(need + 8 * 2**20, 16 * 2**20)))

    n_co = Coutp // TCOUT
    kernel = functools.partial(_conv3x3_kernel, th=TH, ow=OW, stride=s)

    out_full = pl.pallas_call(
        kernel,
        out_shape=jax.ShapeDtypeStruct((N, NT * TH, OW, Coutp), jnp.float32),
        grid=(N, NT, n_co),
        in_specs=[
            pl.BlockSpec((1, s, s, L_h_tile, L_w, Cinp),
                         lambda n, t, co: (n * NT + t, 0, 0, 0, 0, 0)),
            pl.BlockSpec((9, Cinp, TCOUT), lambda n, t, co: (0, 0, co)),
            pl.BlockSpec((1, TCOUT), lambda n, t, co: (0, co)),
        ],
        out_specs=pl.BlockSpec((1, TH, OW, TCOUT),
                               lambda n, t, co: (n, t, 0, co)),
        compiler_params=pltpu.CompilerParams(
            dimension_semantics=("parallel", "parallel", "parallel"),
            vmem_limit_bytes=vmem_limit,
        ),
    )(x_tiles, w, b)

    out = out_full[:, :OH, :, :Cout]                 # drop row / channel padding
    return jnp.transpose(out, (0, 3, 1, 2))          # back to NCHW


def _reference(x_nchw, weight_oihw, bias, stride, padding):
    out = jax.lax.conv_general_dilated(
        x_nchw, weight_oihw,
        window_strides=(stride, stride),
        padding=((padding, padding), (padding, padding)),
        dimension_numbers=("NCHW", "OIHW", "NCHW"),
        feature_group_count=1,
    )
    return out + bias[None, :, None, None]


if __name__ == "__main__":
    N, Cin, Cout, H, W = 2, 4, 8, 16, 16
    key = jax.random.PRNGKey(0)
    kx, kw, kb = jax.random.split(key, 3)

    x = jax.random.normal(kx, (N, Cin, H, W), dtype=jnp.float32)
    weight = 0.1 * jax.random.normal(kw, (Cout, Cin, 3, 3), dtype=jnp.float32)
    bias = 0.1 * jax.random.normal(kb, (Cout,), dtype=jnp.float32)

    ok = True
    for stride in (1, 2):                            # module default stride=1
        out = conv3x3(x, weight, bias, stride=stride, padding=1)
        out = jax.block_until_ready(out)
        ref = _reference(x, weight, bias, stride, 1)
        if out.shape != ref.shape or not jnp.allclose(out, ref, atol=1e-4, rtol=1e-4):
            ok = False
            print(f"MISMATCH at stride={stride}: "
                  f"max_err={float(jnp.max(jnp.abs(out - ref)))}")

    if ok:
        print("KERNEL_OK")
</pallas_src>

<mosaic_0001>
module attributes {stable_mosaic.version = 11 : i64} {
  func.func @_conv3x3_kernel(%arg0: i32, %arg1: i32, %arg2: i32, %arg3: memref<1x1x1x18x18x128xf32, #tpu.memory_space<vmem>>, %arg4: memref<9x128x128xf32, #tpu.memory_space<vmem>>, %arg5: memref<1x128xf32, #tpu.memory_space<vmem>>, %arg6: memref<1x16x16x128xf32, #tpu.memory_space<vmem>>) attributes {dimension_semantics = [#tpu.dimension_semantics<parallel>, #tpu.dimension_semantics<parallel>, #tpu.dimension_semantics<parallel>], iteration_bounds = array<i64: 2, 1, 1>, scalar_prefetch = 0 : i64, scratch_operands = 0 : i64, tpu.core_type = #tpu.core_type<tc>, window_params = [{transform_indices = @transform_0, window_bounds = array<i64: 1, 1, 1, 18, 18, 128>}, {transform_indices = @transform_1, window_bounds = array<i64: 9, 128, 128>}, {transform_indices = @transform_2, window_bounds = array<i64: 1, 128>}, {transform_indices = @transform_3, window_bounds = array<i64: 1, 16, 16, 128>}]} {
    %c0 = arith.constant 0 : index
    %c0_0 = arith.constant 0 : index
    %c0_1 = arith.constant 0 : index
    %0 = vector.load %arg4[%c0, %c0_0, %c0_1] : memref<9x128x128xf32, #tpu.memory_space<vmem>>, vector<9x128x128xf32>
    %cst = arith.constant 0.000000e+00 : f32
    %1 = vector.broadcast %cst : f32 to vector<256x128xf32>
    %cst_2 = arith.constant 0.000000e+00 : f32
    %2 = vector.broadcast %cst_2 : f32 to vector<256x128xf32>
    %cst_3 = arith.constant 0.000000e+00 : f32
    %3 = vector.broadcast %cst_3 : f32 to vector<256x128xf32>
    %c0_4 = arith.constant 0 : index
    %c0_5 = arith.constant 0 : index
    %c0_6 = arith.constant 0 : index
    %c0_7 = arith.constant 0 : index
    %c0_8 = arith.constant 0 : index
    %c0_9 = arith.constant 0 : index
    %4 = vector.load %arg3[%c0_4, %c0_5, %c0_6, %c0_7, %c0_8, %c0_9] : memref<1x1x1x18x18x128xf32, #tpu.memory_space<vmem>>, vector<1x1x1x18x18x128xf32>
    %5 = vector.shape_cast %4 : vector<1x1x1x18x18x128xf32> to vector<18x18x128xf32>
    %6 = vector.extract_strided_slice %5 {offsets = [0, 0, 0], sizes = [16, 18, 128], strides = [1, 1, 1]} : vector<18x18x128xf32> to vector<16x18x128xf32>
    %7 = vector.extract_strided_slice %6 {offsets = [0, 0, 0], sizes = [16, 16, 128], strides = [1, 1, 1]} : vector<16x18x128xf32> to vector<16x16x128xf32>
    %8 = vector.shape_cast %7 : vector<16x16x128xf32> to vector<256x128xf32>
    %9 = vector.extract_strided_slice %0 {offsets = [0, 0, 0], sizes = [1, 128, 128], strides = [1, 1, 1]} : vector<9x128x128xf32> to vector<1x128x128xf32>
    %10 = vector.shape_cast %9 : vector<1x128x128xf32> to vector<128x128xf32>
    %cst_10 = arith.constant dense<0.000000e+00> : vector<256x128xf32>
    %11 = tpu.matmul %8, %10, %cst_10 {dimension_numbers = #tpu.dot_dimension_numbers<[1], [0], [0], [1], [0, 0, 1, 1], [], []>} : vector<256x128xf32>, vector<128x128xf32>, vector<256x128xf32> -> vector<256x128xf32>
    %12 = arith.addf %1, %11 : vector<256x128xf32>
    %13 = vector.extract_strided_slice %6 {offsets = [0, 1, 0], sizes = [16, 16, 128], strides = [1, 1, 1]} : vector<16x18x128xf32> to vector<16x16x128xf32>
    %14 = vector.shape_cast %13 : vector<16x16x128xf32> to vector<256x128xf32>
    %15 = vector.extract_strided_slice %0 {offsets = [1, 0, 0], sizes = [1, 128, 128], strides = [1, 1, 1]} : vector<9x128x128xf32> to vector<1x128x128xf32>
    %16 = vector.shape_cast %15 : vector<1x128x128xf32> to vector<128x128xf32>
    %cst_11 = arith.constant dense<0.000000e+00> : vector<256x128xf32>
    %17 = tpu.matmul %14, %16, %cst_11 {dimension_numbers = #tpu.dot_dimension_numbers<[1], [0], [0], [1], [0, 0, 1, 1], [], []>} : vector<256x128xf32>, vector<128x128xf32>, vector<256x128xf32> -> vector<256x128xf32>
    %18 = arith.addf %12, %17 : vector<256x128xf32>
    %19 = vector.extract_strided_slice %6 {offsets = [0, 2, 0], sizes = [16, 16, 128], strides = [1, 1, 1]} : vector<16x18x128xf32> to vector<16x16x128xf32>
    %20 = vector.shape_cast %19 : vector<16x16x128xf32> to vector<256x128xf32>
    %21 = vector.extract_strided_slice %0 {offsets = [2, 0, 0], sizes = [1, 128, 128], strides = [1, 1, 1]} : vector<9x128x128xf32> to vector<1x128x128xf32>
    %22 = vector.shape_cast %21 : vector<1x128x128xf32> to vector<128x128xf32>
    %cst_12 = arith.constant dense<0.000000e+00> : vector<256x128xf32>
    %23 = tpu.matmul %20, %22, %cst_12 {dimension_numbers = #tpu.dot_dimension_numbers<[1], [0], [0], [1], [0, 0, 1, 1], [], []>} : vector<256x128xf32>, vector<128x128xf32>, vector<256x128xf32> -> vector<256x128xf32>
    %24 = arith.addf %18, %23 : vector<256x128xf32>
    %25 = vector.extract_strided_slice %5 {offsets = [1, 0, 0], sizes = [16, 18, 128], strides = [1, 1, 1]} : vector<18x18x128xf32> to vector<16x18x128xf32>
    %26 = vector.extract_strided_slice %25 {offsets = [0, 0, 0], sizes = [16, 16, 128], strides = [1, 1, 1]} : vector<16x18x128xf32> to vector<16x16x128xf32>
    %27 = vector.shape_cast %26 : vector<16x16x128xf32> to vector<256x128xf32>
    %28 = vector.extract_strided_slice %0 {offsets = [3, 0, 0], sizes = [1, 128, 128], strides = [1, 1, 1]} : vector<9x128x128xf32> to vector<1x128x128xf32>
    %29 = vector.shape_cast %28 : vector<1x128x128xf32> to vector<128x128xf32>
    %cst_13 = arith.constant dense<0.000000e+00> : vector<256x128xf32>
    %30 = tpu.matmul %27, %29, %cst_13 {dimension_numbers = #tpu.dot_dimension_numbers<[1], [0], [0], [1], [0, 0, 1, 1], [], []>} : vector<256x128xf32>, vector<128x128xf32>, vector<256x128xf32> -> vector<256x128xf32>
    %31 = arith.addf %2, %30 : vector<256x128xf32>
    %32 = vector.extract_strided_slice %25 {offsets = [0, 1, 0], sizes = [16, 16, 128], strides = [1, 1, 1]} : vector<16x18x128xf32> to vector<16x16x128xf32>
    %33 = vector.shape_cast %32 : vector<16x16x128xf32> to vector<256x128xf32>
    %34 = vector.extract_strided_slice %0 {offsets = [4, 0, 0], sizes = [1, 128, 128], strides = [1, 1, 1]} : vector<9x128x128xf32> to vector<1x128x128xf32>
    %35 = vector.shape_cast %34 : vector<1x128x128xf32> to vector<128x128xf32>
    %cst_14 = arith.constant dense<0.000000e+00> : vector<256x128xf32>
    %36 = tpu.matmul %33, %35, %cst_14 {dimension_numbers = #tpu.dot_dimension_numbers<[1], [0], [0], [1], [0, 0, 1, 1], [], []>} : vector<256x128xf32>, vector<128x128xf32>, vector<256x128xf32> -> vector<256x128xf32>
    %37 = arith.addf %31, %36 : vector<256x128xf32>
    %38 = vector.extract_strided_slice %25 {offsets = [0, 2, 0], sizes = [16, 16, 128], strides = [1, 1, 1]} : vector<16x18x128xf32> to vector<16x16x128xf32>
    %39 = vector.shape_cast %38 : vector<16x16x128xf32> to vector<256x128xf32>
    %40 = vector.extract_strided_slice %0 {offsets = [5, 0, 0], sizes = [1, 128, 128], strides = [1, 1, 1]} : vector<9x128x128xf32> to vector<1x128x128xf32>
    %41 = vector.shape_cast %40 : vector<1x128x128xf32> to vector<128x128xf32>
    %cst_15 = arith.constant dense<0.000000e+00> : vector<256x128xf32>
    %42 = tpu.matmul %39, %41, %cst_15 {dimension_numbers = #tpu.dot_dimension_numbers<[1], [0], [0], [1], [0, 0, 1, 1], [], []>} : vector<256x128xf32>, vector<128x128xf32>, vector<256x128xf32> -> vector<256x128xf32>
    %43 = arith.addf %37, %42 : vector<256x128xf32>
    %44 = vector.extract_strided_slice %5 {offsets = [2, 0, 0], sizes = [16, 18, 128], strides = [1, 1, 1]} : vector<18x18x128xf32> to vector<16x18x128xf32>
    %45 = vector.extract_strided_slice %44 {offsets = [0, 0, 0], sizes = [16, 16, 128], strides = [1, 1, 1]} : vector<16x18x128xf32> to vector<16x16x128xf32>
    %46 = vector.shape_cast %45 : vector<16x16x128xf32> to vector<256x128xf32>
    %47 = vector.extract_strided_slice %0 {offsets = [6, 0, 0], sizes = [1, 128, 128], strides = [1, 1, 1]} : vector<9x128x128xf32> to vector<1x128x128xf32>
    %48 = vector.shape_cast %47 : vector<1x128x128xf32> to vector<128x128xf32>
    %cst_16 = arith.constant dense<0.000000e+00> : vector<256x128xf32>
    %49 = tpu.matmul %46, %48, %cst_16 {dimension_numbers = #tpu.dot_dimension_numbers<[1], [0], [0], [1], [0, 0, 1, 1], [], []>} : vector<256x128xf32>, vector<128x128xf32>, vector<256x128xf32> -> vector<256x128xf32>
    %50 = arith.addf %3, %49 : vector<256x128xf32>
    %51 = vector.extract_strided_slice %44 {offsets = [0, 1, 0], sizes = [16, 16, 128], strides = [1, 1, 1]} : vector<16x18x128xf32> to vector<16x16x128xf32>
    %52 = vector.shape_cast %51 : vector<16x16x128xf32> to vector<256x128xf32>
    %53 = vector.extract_strided_slice %0 {offsets = [7, 0, 0], sizes = [1, 128, 128], strides = [1, 1, 1]} : vector<9x128x128xf32> to vector<1x128x128xf32>
    %54 = vector.shape_cast %53 : vector<1x128x128xf32> to vector<128x128xf32>
    %cst_17 = arith.constant dense<0.000000e+00> : vector<256x128xf32>
    %55 = tpu.matmul %52, %54, %cst_17 {dimension_numbers = #tpu.dot_dimension_numbers<[1], [0], [0], [1], [0, 0, 1, 1], [], []>} : vector<256x128xf32>, vector<128x128xf32>, vector<256x128xf32> -> vector<256x128xf32>
    %56 = arith.addf %50, %55 : vector<256x128xf32>
    %57 = vector.extract_strided_slice %44 {offsets = [0, 2, 0], sizes = [16, 16, 128], strides = [1, 1, 1]} : vector<16x18x128xf32> to vector<16x16x128xf32>
    %58 = vector.shape_cast %57 : vector<16x16x128xf32> to vector<256x128xf32>
    %59 = vector.extract_strided_slice %0 {offsets = [8, 0, 0], sizes = [1, 128, 128], strides = [1, 1, 1]} : vector<9x128x128xf32> to vector<1x128x128xf32>
    %60 = vector.shape_cast %59 : vector<1x128x128xf32> to vector<128x128xf32>
    %cst_18 = arith.constant dense<0.000000e+00> : vector<256x128xf32>
    %61 = tpu.matmul %58, %60, %cst_18 {dimension_numbers = #tpu.dot_dimension_numbers<[1], [0], [0], [1], [0, 0, 1, 1], [], []>} : vector<256x128xf32>, vector<128x128xf32>, vector<256x128xf32> -> vector<256x128xf32>
    %62 = arith.addf %56, %61 : vector<256x128xf32>
    %63 = arith.addf %24, %43 : vector<256x128xf32>
    %64 = arith.addf %63, %62 : vector<256x128xf32>
    %c0_19 = arith.constant 0 : index
    %c0_20 = arith.constant 0 : index
    %65 = vector.load %arg5[%c0_19, %c0_20] : memref<1x128xf32, #tpu.memory_space<vmem>>, vector<1x128xf32>
    %66 = vector.broadcast %65 : vector<1x128xf32> to vector<256x128xf32>
    %67 = arith.addf %64, %66 : vector<256x128xf32>
    %68 = vector.shape_cast %67 : vector<256x128xf32> to vector<16x16x128xf32>
    %c0_21 = arith.constant 0 : index
    %c0_22 = arith.constant 0 : index
    %c0_23 = arith.constant 0 : index
    %c0_24 = arith.constant 0 : index
    %69 = vector.load %arg6[%c0_21, %c0_22, %c0_23, %c0_24] : memref<1x16x16x128xf32, #tpu.memory_space<vmem>>, vector<1x16x16x128xf32>
    %70 = vector.shape_cast %69 : vector<1x16x16x128xf32> to vector<16x16x128xf32>
    %71 = vector.shape_cast %68 : vector<16x16x128xf32> to vector<1x16x16x128xf32>
    tpu.vector_store %arg6[%c0_21, %c0_22, %c0_23, %c0_24], %71 {strides = array<i32>} : memref<1x16x16x128xf32, #tpu.memory_space<vmem>>, vector<1x16x16x128xf32>,
    return
  }
  func.func @transform_0(%arg0: i32, %arg1: i32, %arg2: i32) -> (i32, i32, i32, i32, i32, i32) {
    %c1_i32 = arith.constant 1 : i32
    %0 = arith.muli %arg0, %c1_i32 : i32
    %1 = arith.addi %0, %arg1 : i32
    %c0_i32 = arith.constant 0 : i32
    %c0_i32_0 = arith.constant 0 : i32
    %c0_i32_1 = arith.constant 0 : i32
    %c0_i32_2 = arith.constant 0 : i32
    %c0_i32_3 = arith.constant 0 : i32
    %c0_i32_4 = arith.constant 0 : i32
    return %1, %c0_i32, %c0_i32_0, %c0_i32_1, %c0_i32_2, %c0_i32_3 : i32, i32, i32, i32, i32, i32
  }
  func.func @transform_1(%arg0: i32, %arg1: i32, %arg2: i32) -> (i32, i32, i32) {
    %c0_i32 = arith.constant 0 : i32
    %c0_i32_0 = arith.constant 0 : i32
    %c0_i32_1 = arith.constant 0 : i32
    return %c0_i32, %c0_i32_0, %arg2 : i32, i32, i32
  }
  func.func @transform_2(%arg0: i32, %arg1: i32, %arg2: i32) -> (i32, i32) {
    %c0_i32 = arith.constant 0 : i32
    %c0_i32_0 = arith.constant 0 : i32
    return %c0_i32, %arg2 : i32, i32
  }
  func.func @transform_3(%arg0: i32, %arg1: i32, %arg2: i32) -> (i32, i32, i32, i32) {
    %c0_i32 = arith.constant 0 : i32
    %c0_i32_0 = arith.constant 0 : i32
    return %arg0, %arg1, %c0_i32, %arg2 : i32, i32, i32, i32
  }
}

</mosaic_0001>

<llo_original>
// kernel: tpu_custom_call.1
$region0: #{tpu_custom_call.1}
  #allocation0 [shape = 'u32[]', space=smem, size = 0x4, offset = 0x4, fixed_abs, tag = 'smem constant byte address 0x4 - core index']
  #allocation1 [shape = 'u32[144,128]{1,0:T(1,128)}', space=vmem, size = 0x12000, scoped, tag = 'internal scratch']
  %s0 = inlined_call_operand.vmem [shape: f32[2,1,1,18,18,128], index: 0, kind: input, shape index: {}]
  %s1 = inlined_call_operand.vmem [shape: f32[9,128,128], index: 1, kind: input, shape index: {}]
  %s2 = inlined_call_operand.vmem [shape: f32[1,128], index: 2, kind: input, shape index: {}]
  %s3 = inlined_call_operand.hbm [shape: f32[2,16,16,128], index: 3, kind: output, shape index: {}]
  %s4 = sld [smem:[#allocation0]]
  $region45: #{tpu_custom_call.1} parent=0
    _
  %s6 = ssub.s32 1, %s4
  %s7 = scalar_select 0, %s6, %s4
  $region1: #{tpu_custom_call.1} parent=0
    #allocation2 [shape = 'u8[262144]{0}', space=vmem, size = 0x40000, scoped, tag = 'output window, operand 0']
    #allocation3 [shape = 's32[2]{0}', space=sflag, size = 0x8, scoped, tag = 'scoped memory for tpu_custom_call.1']
    %8 = vsyncpa [#allocation3], 0
    %s9 = scalar_lea.sflag [#allocation3], 1
    %10 = vsyncpa %s9, 0
    loop: start=0, step=1, limit=4
    $region2: #{tpu_custom_call.1} parent=1 // loop_pre_header
      _
    $region3: #{tpu_custom_call.1} parent=1 // loop_header
      %s12 = sphi 0, %s16
      %p13 = scmp.ge.s32.totalorder %s12, 4
      %s19 = sphi 0, %s38
      %s20 = sphi 0, %s34
      %s21 = sphi 0, %s30
      %s22 = sphi 0, %s19
      %s23 = sphi 0, %s20
      %s24 = sphi 0, %s21
      %s25 = sphi 0, %s22
      %s26 = sphi 0, %s23
      %s27 = sphi 0, %s24
      %s43 = sphi 0, %s45
      %s46 = sphi 0, %s43
      %s47 = sphi 0, %s46
      %s63 = sphi 0, %s47
      %s69 = sphi 0, %s71
      %s72 = sphi 0, %s69
      %s73 = sphi 0, %s72
      %s89 = sphi 0, %s73
      %s95 = sphi 0, %s97
      %s98 = sphi 0, %s95
      %s99 = sphi 0, %s98
      %s115 = sphi 0, %s99
      %s125 = sphi 0, %s127
      %s128 = sphi 0, %s125
      %s129 = sphi 0, %s128
      %s145 = sphi 0, %s129
    $region4: #{tpu_custom_call.1} parent=1 // loop_header_branch
      %15 = sbr.rel (%p13) target = $region8
    $region5: #{tpu_custom_call.1} parent=1 // loop_body
      %s17 = ssub.s32 %s12, 1
      %s18 = ssub.s32 %s12, 2
      %s28 = sadd.s32 1, %s21
      %p29 = scmp.ge.s32.totalorder %s28, 1
      %s30 = scalar_select %p29, 0, %s28
      %s31 = sadd.s32 1, %s20
      %s32 = scalar_select %p29, %s31, %s20
      %p33 = scmp.ge.s32.totalorder %s32, 1
      %s34 = scalar_select %p33, 0, %s32
      %s35 = sadd.s32 1, %s19
      %s36 = scalar_select %p33, %s35, %s19
      %p37 = scmp.ge.s32.totalorder %s36, 2
      %s38 = scalar_select %p37, 0, %s36
      %s39 = sadd.s32 %s19, %s20
      %s40 = sadd.s32 %s38, %s34
      %s41 = ssub.s32 %s39, %s40
      %p42 = scmp.eq.s32.totalorder %s41, 0
      %s44 = sadd.s32 %s43, 1
      %s45 = scalar_select %p42, %s43, %s44
      %p48 = pneg %p42
      %p49 = scmp.eq.s32.totalorder %s12, 1
      %p50 = por %p48, %p49
      %p51 = scmp.ne.s32.totalorder %s43, %s46
      %p52 = scmp.eq.s32.totalorder %s12, 0
      %p53 = por %p51, %p52
      %p54 = scmp.ne.s32.totalorder %s43, %s46
      %p55 = scmp.eq.s32.totalorder %s17, 1
      %p56 = por %p54, %p55
      %p57 = scmp.ne.s32.totalorder %s46, %s47
      %p58 = scmp.eq.s32.totalorder %s17, 0
      %p59 = por %p57, %p58
      %p60 = scmp.ne.s32.totalorder %s46, %s47
      %p61 = scmp.eq.s32.totalorder %s18, 1
      %p62 = por %p60, %p61
      %p64 = scmp.ne.s32.totalorder %s47, %s63
      %p65 = scmp.eq.s32.totalorder %s18, 0
      %p66 = por %p64, %p65
      %s67 = ssub.s32 %s21, %s30
      %p68 = scmp.eq.s32.totalorder %s67, 0
      %s70 = sadd.s32 %s69, 1
      %s71 = scalar_select %p68, %s69, %s70
      %p74 = pneg %p68
      %p75 = scmp.eq.s32.totalorder %s12, 1
      %p76 = por %p74, %p75
      %p77 = scmp.ne.s32.totalorder %s69, %s72
      %p78 = scmp.eq.s32.totalorder %s12, 0
      %p79 = por %p77, %p78
      %p80 = scmp.ne.s32.totalorder %s69, %s72
      %p81 = scmp.eq.s32.totalorder %s17, 1
      %p82 = por %p80, %p81
      %p83 = scmp.ne.s32.totalorder %s72, %s73
      %p84 = scmp.eq.s32.totalorder %s17, 0
      %p85 = por %p83, %p84
      %p86 = scmp.ne.s32.totalorder %s72, %s73
      %p87 = scmp.eq.s32.totalorder %s18, 1
      %p88 = por %p86, %p87
      %p90 = scmp.ne.s32.totalorder %s73, %s89
      %p91 = scmp.eq.s32.totalorder %s18, 0
      %p92 = por %p90, %p91
      %s93 = ssub.s32 %s21, %s30
      %p94 = scmp.eq.s32.totalorder %s93, 0
      %s96 = sadd.s32 %s95, 1
      %s97 = scalar_select %p94, %s95, %s96
      %p100 = pneg %p94
      %p101 = scmp.eq.s32.totalorder %s12, 1
      %p102 = por %p100, %p101
      %p103 = scmp.ne.s32.totalorder %s95, %s98
      %p104 = scmp.eq.s32.totalorder %s12, 0
      %p105 = por %p103, %p104
      %p106 = scmp.ne.s32.totalorder %s95, %s98
      %p107 = scmp.eq.s32.totalorder %s17, 1
      %p108 = por %p106, %p107
      %p109 = scmp.ne.s32.totalorder %s98, %s99
      %p110 = scmp.eq.s32.totalorder %s17, 0
      %p111 = por %p109, %p110
      %p112 = scmp.ne.s32.totalorder %s98, %s99
      %p113 = scmp.eq.s32.totalorder %s18, 1
      %p114 = por %p112, %p113
      %p116 = scmp.ne.s32.totalorder %s99, %s115
      %p117 = scmp.eq.s32.totalorder %s18, 0
      %p118 = por %p116, %p117
      %s119 = ssub.s32 %s19, %s38
      %s120 = ssub.s32 %s20, %s34
      %s121 = sor.u32 %s119, %s120
      %s122 = ssub.s32 %s21, %s30
      %s123 = sor.u32 %s121, %s122
      %p124 = scmp.eq.s32.totalorder %s123, 0
      %s126 = sadd.s32 %s125, 1
      %s127 = scalar_select %p124, %s125, %s126
      %p130 = pneg %p124
      %p131 = scmp.eq.s32.totalorder %s12, 1
      %p132 = por %p130, %p131
      %p133 = scmp.ne.s32.totalorder %s125, %s128
      %p134 = scmp.eq.s32.totalorder %s12, 0
      %p135 = por %p133, %p134
      %p136 = scmp.ne.s32.totalorder %s125, %s128
      %p137 = scmp.eq.s32.totalorder %s17, 1
      %p138 = por %p136, %p137
      %p139 = scmp.ne.s32.totalorder %s128, %s129
      %p140 = scmp.eq.s32.totalorder %s17, 0
      %p141 = por %p139, %p140
      %p142 = scmp.ne.s32.totalorder %s128, %s129
      %p143 = scmp.eq.s32.totalorder %s18, 1
      %p144 = por %p142, %p143
      %p146 = scmp.ne.s32.totalorder %s129, %s145
      %p147 = scmp.eq.s32.totalorder %s18, 0
      %p148 = por %p146, %p147
      %p149 = scmp.le.s32.totalorder 1, %s12
      %p150 = scmp.lt.s32.totalorder %s12, 3
      %p151 = pnand %p149, %p150
      %p152 = pneg %p151
      // Predicated region
      $region9: #{tpu_custom_call.1} parent=5 // pred_check
        _
      $region10: #{tpu_custom_call.1} parent=5 // pred_check_branch
        %154 = sbr.rel (%p151) target = $region12
      $region11: #{tpu_custom_call.1} parent=5 // pred_region
        %s155 = ssub.s32 %s12, 1
        // Predicated region
        $region13: #{tpu_custom_call.1} parent=11 // pred_check
          %p156 = pneg %p85
        $region14: #{tpu_custom_call.1} parent=11 // pred_check_branch
          %158 = sbr.rel (%p156) target = $region16
        $region15: #{tpu_custom_call.1} parent=11 // pred_region
          %p159 = scmp.lt.s32.totalorder %s24, 0
          %s160 = scalar_select %p159, %s24, 0
          %s161 = smul.addr %s160, 8
          %s162 = scalar_lea.vmem %s1, %s161
        $region16: #{tpu_custom_call.1} parent=11 // pred_fallthru
          _
        // Predicated region
        $region17: #{tpu_custom_call.1} parent=11 // pred_check
          %p163 = pneg %p111
        $region18: #{tpu_custom_call.1} parent=11 // pred_check_branch
          %165 = sbr.rel (%p163) target = $region20
        $region19: #{tpu_custom_call.1} parent=11 // pred_region
          %p166 = scmp.lt.s32.totalorder %s24, 0
          %s167 = scalar_select %p166, %s24, 0
          %s168 = scalar_lea.vmem %s2, %s167
        $region20: #{tpu_custom_call.1} parent=11 // pred_fallthru
          _
      $region12: #{tpu_custom_call.1} parent=5 // pred_fallthru
        _
      %p169 = scmp.lt.s32.totalorder %s12, 2
      // Predicated region
      $region21: #{tpu_custom_call.1} parent=5 // pred_check
        %p170 = pneg %p169
      $region22: #{tpu_custom_call.1} parent=5 // pred_check_branch
        %172 = sbr.rel (%p170) target = $region24
      $region23: #{tpu_custom_call.1} parent=5 // pred_region
        // Predicated region
        $region25: #{tpu_custom_call.1} parent=23 // pred_check
          %p173 = pneg %p53
        $region26: #{tpu_custom_call.1} parent=23 // pred_check_branch
          %175 = sbr.rel (%p173) target = $region28
        $region27: #{tpu_custom_call.1} parent=23 // pred_region
          %s176 = sadd.s32 %s19, %s20
          %p177 = scmp.lt.s32.totalorder %s176, 1
          %s178 = scalar_select %p177, %s176, 1
          %s179 = smul.addr %s178, 54
          %s180 = smul.addr %s179, 8
          %s181 = scalar_lea.vmem %s0, %s180
          %s182 = sadd.s32 %s19, %s20
        $region28: #{tpu_custom_call.1} parent=23 // pred_fallthru
          _
      $region24: #{tpu_custom_call.1} parent=5 // pred_fallthru
        _
      %p183 = scmp.le.s32.totalorder 1, %s12
      %p184 = scmp.lt.s32.totalorder %s12, 3
      %p185 = pnand %p183, %p184
      %p186 = pneg %p185
      // Predicated region
      $region29: #{tpu_custom_call.1} parent=5 // pred_check
        _
      $region30: #{tpu_custom_call.1} parent=5 // pred_check_branch
        %188 = sbr.rel (%p185) target = $region32
      $region31: #{tpu_custom_call.1} parent=5 // pred_region
        %s189 = ssub.s32 %s12, 1
        %s190 = sadd.s32 %s22, %s23
        %p191 = scmp.lt.s32.totalorder %s190, 1
        %s192 = scalar_select %p191, %s190, 1
        %s193 = smul.addr %s192, 54
        %s194 = smul.addr %s193, 8
        %s195 = scalar_lea.vmem %s0, %s194
        %p196 = pneg %p59
        %p197 = pneg %p56
        %p198 = scmp.lt.s32.totalorder %s24, 0
        %s199 = scalar_select %p198, %s24, 0
        %s200 = smul.addr %s199, 8
        %s201 = scalar_lea.vmem %s1, %s200
        %p202 = pneg %p85
        %p203 = pneg %p82
        %p204 = scmp.lt.s32.totalorder %s24, 0
        %s205 = scalar_select %p204, %s24, 0
        %s206 = scalar_lea.vmem %s2, %s205
        %p207 = pneg %p111
        %p208 = pneg %p108
        %p209 = pneg %p141
        %p210 = pneg %p138
        %s211 = sand.u32 %s128, 1
        %s212 = scalar_lea.sflag [#allocation3], %s211
        %s213 = sand.u32 %s128, 1
        %s214 = smul.addr %s213, 256
        %s215 = scalar_lea.vmem [#allocation2], %s214
        %s216 = sadd.s32 %s22, %s23
        %p217 = scmp.lt.s32.totalorder %s216, 1
        %s218 = scalar_select %p217, %s216, 1
        %s219 = smul.addr %s218, 54
        %s220 = smul.addr %s219, 8
        %s221 = scalar_lea.vmem %s0, %s220
        %s222 = sadd.s32 %s22, %s23
        %p223 = scmp.lt.s32.totalorder %s24, 0
        %s224 = scalar_select %p223, %s24, 0
        %s225 = smul.addr %s224, 8
        %s226 = scalar_lea.vmem %s1, %s225
        %p227 = scmp.lt.s32.totalorder %s24, 0
        %s228 = scalar_select %p227, %s24, 0
        %s229 = scalar_lea.vmem %s2, %s228
        %s230 = smul.u32 16, %s23
        %v231 = vld [vmem:[%s226] sm:$0xff]
        %v232 = vld [vmem:[%s226 + $0x8] sm:$0xff]
        %v233 = vld [vmem:[%s226 + $0x10] sm:$0xff]
        %v234 = vld [vmem:[%s226 + $0x18] sm:$0xff]
        %v235 = vld [vmem:[%s226 + $0x20] sm:$0xff]
        %v236 = vld [vmem:[%s226 + $0x28] sm:$0xff]
        %v237 = vld [vmem:[%s226 + $0x30] sm:$0xff]
        %v238 = vld [vmem:[%s226 + $0x38] sm:$0xff]
        %v239 = vld [vmem:[%s226 + $0x40] sm:$0xff]
        %v240 = vld [vmem:[%s226 + $0x48] sm:$0xff]
        %v241 = vld [vmem:[%s226 + $0x50] sm:$0xff]
        %v242 = vld [vmem:[%s226 + $0x58] sm:$0xff]
        %v243 = vld [vmem:[%s226 + $0x60] sm:$0xff]
        %v244 = vld [vmem:[%s226 + $0x68] sm:$0xff]
        %v245 = vld [vmem:[%s226 + $0x70] sm:$0xff]
        %v246 = vld [vmem:[%s226 + $0x78] sm:$0xff]
        %v247 = vld [vmem:[%s226 + $0x80] sm:$0xff]
        %v248 = vld [vmem:[%s226 + $0x88] sm:$0xff]
        %v249 = vld [vmem:[%s226 + $0x90] sm:$0xff]
        %v250 = vld [vmem:[%s226 + $0x98] sm:$0xff]
        %v251 = vld [vmem:[%s226 + $0xa0] sm:$0xff]
        %v252 = vld [vmem:[%s226 + $0xa8] sm:$0xff]
        %v253 = vld [vmem:[%s226 + $0xb0] sm:$0xff]
        %v254 = vld [vmem:[%s226 + $0xb8] sm:$0xff]
        %v255 = vld [vmem:[%s226 + $0xc0] sm:$0xff]
        %v256 = vld [vmem:[%s226 + $0xc8] sm:$0xff]
        %v257 = vld [vmem:[%s226 + $0xd0] sm:$0xff]
        %v258 = vld [vmem:[%s226 + $0xd8] sm:$0xff]
        %v259 = vld [vmem:[%s226 + $0xe0] sm:$0xff]
        %v260 = vld [vmem:[%s226 + $0xe8] sm:$0xff]
        %v261 = vld [vmem:[%s226 + $0xf0] sm:$0xff]
        %v262 = vld [vmem:[%s226 + $0xf8] sm:$0xff]
        %v263 = vld [vmem:[%s226 + $0x100] sm:$0xff]
        %v264 = vld [vmem:[%s226 + $0x108] sm:$0xff]
        %v265 = vld [vmem:[%s226 + $0x110] sm:$0xff]
        %v266 = vld [vmem:[%s226 + $0x118] sm:$0xff]
        %v267 = vld [vmem:[%s226 + $0x120] sm:$0xff]
        %v268 = vld [vmem:[%s226 + $0x128] sm:$0xff]
        %v269 = vld [vmem:[%s226 + $0x130] sm:$0xff]
        %v270 = vld [vmem:[%s226 + $0x138] sm:$0xff]
        %v271 = vld [vmem:[%s226 + $0x140] sm:$0xff]
        %v272 = vld [vmem:[%s226 + $0x148] sm:$0xff]
        %v273 = vld [vmem:[%s226 + $0x150] sm:$0xff]
        %v274 = vld [vmem:[%s226 + $0x158] sm:$0xff]
        %v275 = vld [vmem:[%s226 + $0x160] sm:$0xff]
        %v276 = vld [vmem:[%s226 + $0x168] sm:$0xff]
        %v277 = vld [vmem:[%s226 + $0x170] sm:$0xff]
        %v278 = vld [vmem:[%s226 + $0x178] sm:$0xff]
        %v279 = vld [vmem:[%s226 + $0x180] sm:$0xff]
        %v280 = vld [vmem:[%s226 + $0x188] sm:$0xff]
        %v281 = vld [vmem:[%s226 + $0x190] sm:$0xff]
        %v282 = vld [vmem:[%s226 + $0x198] sm:$0xff]
        %v283 = vld [vmem:[%s226 + $0x1a0] sm:$0xff]
        %v284 = vld [vmem:[%s226 + $0x1a8] sm:$0xff]
        %v285 = vld [vmem:[%s226 + $0x1b0] sm:$0xff]
        %v286 = vld [vmem:[%s226 + $0x1b8] sm:$0xff]
        %v287 = vld [vmem:[%s226 + $0x1c0] sm:$0xff]
        %v288 = vld [vmem:[%s226 + $0x1c8] sm:$0xff]
        %v289 = vld [vmem:[%s226 + $0x1d0] sm:$0xff]
        %v290 = vld [vmem:[%s226 + $0x1d8] sm:$0xff]
        %v291 = vld [vmem:[%s226 + $0x1e0] sm:$0xff]
        %v292 = vld [vmem:[%s226 + $0x1e8] sm:$0xff]
        %v293 = vld [vmem:[%s226 + $0x1f0] sm:$0xff]
        %v294 = vld [vmem:[%s226 + $0x1f8] sm:$0xff]
        %v295 = vld [vmem:[%s226 + $0x200] sm:$0xff]
        %v296 = vld [vmem:[%s226 + $0x208] sm:$0xff]
        %v297 = vld [vmem:[%s226 + $0x210] sm:$0xff]
        %v298 = vld [vmem:[%s226 + $0x218] sm:$0xff]
        %v299 = vld [vmem:[%s226 + $0x220] sm:$0xff]
        %v300 = vld [vmem:[%s226 + $0x228] sm:$0xff]
        %v301 = vld [vmem:[%s226 + $0x230] sm:$0xff]
        %v302 = vld [vmem:[%s226 + $0x238] sm:$0xff]
        %v303 = vld [vmem:[%s226 + $0x240] sm:$0xff]
        %v304 = vld [vmem:[%s226 + $0x248] sm:$0xff]
        %v305 = vld [vmem:[%s226 + $0x250] sm:$0xff]
        %v306 = vld [vmem:[%s226 + $0x258] sm:$0xff]
        %v307 = vld [vmem:[%s226 + $0x260] sm:$0xff]
        %v308 = vld [vmem:[%s226 + $0x268] sm:$0xff]
        %v309 = vld [vmem:[%s226 + $0x270] sm:$0xff]
        %v310 = vld [vmem:[%s226 + $0x278] sm:$0xff]
        %v311 = vld [vmem:[%s226 + $0x280] sm:$0xff]
        %v312 = vld [vmem:[%s226 + $0x288] sm:$0xff]
        %v313 = vld [vmem:[%s226 + $0x290] sm:$0xff]
        %v314 = vld [vmem:[%s226 + $0x298] sm:$0xff]
        %v315 = vld [vmem:[%s226 + $0x2a0] sm:$0xff]
        %v316 = vld [vmem:[%s226 + $0x2a8] sm:$0xff]
        %v317 = vld [vmem:[%s226 + $0x2b0] sm:$0xff]
        %v318 = vld [vmem:[%s226 + $0x2b8] sm:$0xff]
        %v319 = vld [vmem:[%s226 + $0x2c0] sm:$0xff]
        %v320 = vld [vmem:[%s226 + $0x2c8] sm:$0xff]
        %v321 = vld [vmem:[%s226 + $0x2d0] sm:$0xff]
        %v322 = vld [vmem:[%s226 + $0x2d8] sm:$0xff]
        %v323 = vld [vmem:[%s226 + $0x2e0] sm:$0xff]
        %v324 = vld [vmem:[%s226 + $0x2e8] sm:$0xff]
        %v325 = vld [vmem:[%s226 + $0x2f0] sm:$0xff]
        %v326 = vld [vmem:[%s226 + $0x2f8] sm:$0xff]
        %v327 = vld [vmem:[%s226 + $0x300] sm:$0xff]
        %v328 = vld [vmem:[%s226 + $0x308] sm:$0xff]
        %v329 = vld [vmem:[%s226 + $0x310] sm:$0xff]
        %v330 = vld [vmem:[%s226 + $0x318] sm:$0xff]
        %v331 = vld [vmem:[%s226 + $0x320] sm:$0xff]
        %v332 = vld [vmem:[%s226 + $0x328] sm:$0xff]
        %v333 = vld [vmem:[%s226 + $0x330] sm:$0xff]
        %v334 = vld [vmem:[%s226 + $0x338] sm:$0xff]
        %v335 = vld [vmem:[%s226 + $0x340] sm:$0xff]
        %v336 = vld [vmem:[%s226 + $0x348] sm:$0xff]
        %v337 = vld [vmem:[%s226 + $0x350] sm:$0xff]
        %v338 = vld [vmem:[%s226 + $0x358] sm:$0xff]
        %v339 = vld [vmem:[%s226 + $0x360] sm:$0xff]
        %v340 = vld [vmem:[%s226 + $0x368] sm:$0xff]
        %v341 = vld [vmem:[%s226 + $0x370] sm:$0xff]
        %v342 = vld [vmem:[%s226 + $0x378] sm:$0xff]
        %v343 = vld [vmem:[%s226 + $0x380] sm:$0xff]
        %v344 = vld [vmem:[%s226 + $0x388] sm:$0xff]
        %v345 = vld [vmem:[%s226 + $0x390] sm:$0xff]
        %v346 = vld [vmem:[%s226 + $0x398] sm:$0xff]
        %v347 = vld [vmem:[%s226 + $0x3a0] sm:$0xff]
        %v348 = vld [vmem:[%s226 + $0x3a8] sm:$0xff]
        %v349 = vld [vmem:[%s226 + $0x3b0] sm:$0xff]
        %v350 = vld [vmem:[%s226 + $0x3b8] sm:$0xff]
        %v351 = vld [vmem:[%s226 + $0x3c0] sm:$0xff]
        %v352 = vld [vmem:[%s226 + $0x3c8] sm:$0xff]
        %v353 = vld [vmem:[%s226 + $0x3d0] sm:$0xff]
        %v354 = vld [vmem:[%s226 + $0x3d8] sm:$0xff]
        %v355 = vld [vmem:[%s226 + $0x3e0] sm:$0xff]
        %v356 = vld [vmem:[%s226 + $0x3e8] sm:$0xff]
        %v357 = vld [vmem:[%s226 + $0x3f0] sm:$0xff]
        %v358 = vld [vmem:[%s226 + $0x3f8] sm:$0xff]
        %v359 = vld [vmem:[%s226 + $0x400] sm:$0xff]
        %v360 = vld [vmem:[%s226 + $0x408] sm:$0xff]
        %v361 = vld [vmem:[%s226 + $0x410] sm:$0xff]
        %v362 = vld [vmem:[%s226 + $0x418] sm:$0xff]
        %v363 = vld [vmem:[%s226 + $0x420] sm:$0xff]
        %v364 = vld [vmem:[%s226 + $0x428] sm:$0xff]
        %v365 = vld [vmem:[%s226 + $0x430] sm:$0xff]
        %v366 = vld [vmem:[%s226 + $0x438] sm:$0xff]
        %v367 = vld [vmem:[%s226 + $0x440] sm:$0xff]
        %v368 = vld [vmem:[%s226 + $0x448] sm:$0xff]
        %v369 = vld [vmem:[%s226 + $0x450] sm:$0xff]
        %v370 = vld [vmem:[%s226 + $0x458] sm:$0xff]
        %v371 = vld [vmem:[%s226 + $0x460] sm:$0xff]
        %v372 = vld [vmem:[%s226 + $0x468] sm:$0xff]
        %v373 = vld [vmem:[%s226 + $0x470] sm:$0xff]
        %v374 = vld [vmem:[%s226 + $0x478] sm:$0xff]
        %v375 = vld [vmem:[%s221] sm:$0xff]
        %v376 = vld [vmem:[%s221 + $0x8] sm:$0xff]
        %v377 = vld [vmem:[%s221 + $0x10] sm:$0x3]
        %v378 = vld [vmem:[%s221 + $0x18] sm:$0xff]
        %v379 = vld [vmem:[%s221 + $0x20] sm:$0xff]
        %v380 = vld [vmem:[%s221 + $0x28] sm:$0x3]
        %v381 = vld [vmem:[%s221 + $0x30] sm:$0xff]
        %v382 = vld [vmem:[%s221 + $0x38] sm:$0xff]
        %v383 = vld [vmem:[%s221 + $0x40] sm:$0x3]
        %v384 = vld [vmem:[%s221 + $0x48] sm:$0xff]
        %v385 = vld [vmem:[%s221 + $0x50] sm:$0xff]
        %v386 = vld [vmem:[%s221 + $0x58] sm:$0x3]
        %v387 = vld [vmem:[%s221 + $0x60] sm:$0xff]
        %v388 = vld [vmem:[%s221 + $0x68] sm:$0xff]
        %v389 = vld [vmem:[%s221 + $0x70] sm:$0x3]
        %v390 = vld [vmem:[%s221 + $0x78] sm:$0xff]
        %v391 = vld [vmem:[%s221 + $0x80] sm:$0xff]
        %v392 = vld [vmem:[%s221 + $0x88] sm:$0x3]
        %v393 = vld [vmem:[%s221 + $0x90] sm:$0xff]
        %v394 = vld [vmem:[%s221 + $0x98] sm:$0xff]
        %v395 = vld [vmem:[%s221 + $0xa0] sm:$0x3]
        %v396 = vld [vmem:[%s221 + $0xa8] sm:$0xff]
        %v397 = vld [vmem:[%s221 + $0xb0] sm:$0xff]
        %v398 = vld [vmem:[%s221 + $0xb8] sm:$0x3]
        %v399 = vld [vmem:[%s221 + $0xc0] sm:$0xff]
        %v400 = vld [vmem:[%s221 + $0xc8] sm:$0xff]
        %v401 = vld [vmem:[%s221 + $0xd0] sm:$0x3]
        %v402 = vld [vmem:[%s221 + $0xd8] sm:$0xff]
        %v403 = vld [vmem:[%s221 + $0xe0] sm:$0xff]
        %v404 = vld [vmem:[%s221 + $0xe8] sm:$0x3]
        %v405 = vld [vmem:[%s221 + $0xf0] sm:$0xff]
        %v406 = vld [vmem:[%s221 + $0xf8] sm:$0xff]
        %v407 = vld [vmem:[%s221 + $0x100] sm:$0x3]
        %v408 = vld [vmem:[%s221 + $0x108] sm:$0xff]
        %v409 = vld [vmem:[%s221 + $0x110] sm:$0xff]
        %v410 = vld [vmem:[%s221 + $0x118] sm:$0x3]
        %v411 = vld [vmem:[%s221 + $0x120] sm:$0xff]
        %v412 = vld [vmem:[%s221 + $0x128] sm:$0xff]
        %v413 = vld [vmem:[%s221 + $0x130] sm:$0x3]
        %v414 = vld [vmem:[%s221 + $0x138] sm:$0xff]
        %v415 = vld [vmem:[%s221 + $0x140] sm:$0xff]
        %v416 = vld [vmem:[%s221 + $0x148] sm:$0x3]
        %v417 = vld [vmem:[%s221 + $0x150] sm:$0xff]
        %v418 = vld [vmem:[%s221 + $0x158] sm:$0xff]
        %v419 = vld [vmem:[%s221 + $0x160] sm:$0x3]
        %v420 = vld [vmem:[%s221 + $0x168] sm:$0xff]
        %v421 = vld [vmem:[%s221 + $0x170] sm:$0xff]
        %v422 = vld [vmem:[%s221 + $0x178] sm:$0x3]
        %v423 = vld [vmem:[%s221 + $0x180] sm:$0xff]
        %v424 = vld [vmem:[%s221 + $0x188] sm:$0xff]
        %v425 = vld [vmem:[%s221 + $0x190] sm:$0x3]
        %v426 = vld [vmem:[%s221 + $0x198] sm:$0xff]
        %v427 = vld [vmem:[%s221 + $0x1a0] sm:$0xff]
        %v428 = vld [vmem:[%s221 + $0x1a8] sm:$0x3]
        %vm477 = vcmask 1046528
        %v478 = vrot.slane %v375, 1
        %v479 = vrot.slane %v376, 1
        %v480 = vsel %vm477, %v478, %v479
        %v481 = vrot.slane %v377, 1
        %v482 = vsel %vm477, %v479, %v481
        %v483 = vrot.slane %v378, 1
        %v484 = vrot.slane %v379, 1
        %v485 = vsel %vm477, %v483, %v484
        %v486 = vrot.slane %v380, 1
        %v487 = vsel %vm477, %v484, %v486
        %v488 = vrot.slane %v381, 1
        %v489 = vrot.slane %v382, 1
        %v490 = vsel %vm477, %v488, %v489
        %v491 = vrot.slane %v383, 1
        %v492 = vsel %vm477, %v489, %v491
        %v493 = vrot.slane %v384, 1
        %v494 = vrot.slane %v385, 1
        %v495 = vsel %vm477, %v493, %v494
        %v496 = vrot.slane %v386, 1
        %v497 = vsel %vm477, %v494, %v496
        %v498 = vrot.slane %v387, 1
        %v499 = vrot.slane %v388, 1
        %v500 = vsel %vm477, %v498, %v499
        %v501 = vrot.slane %v389, 1
        %v502 = vsel %vm477, %v499, %v501
        %v503 = vrot.slane %v390, 1
        %v504 = vrot.slane %v391, 1
        %v505 = vsel %vm477, %v503, %v504
        %v506 = vrot.slane %v392, 1
        %v507 = vsel %vm477, %v504, %v506
        %v508 = vrot.slane %v393, 1
        %v509 = vrot.slane %v394, 1
        %v510 = vsel %vm477, %v508, %v509
        %v511 = vrot.slane %v395, 1
        %v512 = vsel %vm477, %v509, %v511
        %v513 = vrot.slane %v396, 1
        %v514 = vrot.slane %v397, 1
        %v515 = vsel %vm477, %v513, %v514
        %v516 = vrot.slane %v398, 1
        %v517 = vsel %vm477, %v514, %v516
        %v518 = vrot.slane %v399, 1
        %v519 = vrot.slane %v400, 1
        %v520 = vsel %vm477, %v518, %v519
        %v521 = vrot.slane %v401, 1
        %v522 = vsel %vm477, %v519, %v521
        %v523 = vrot.slane %v402, 1
        %v524 = vrot.slane %v403, 1
        %v525 = vsel %vm477, %v523, %v524
        %v526 = vrot.slane %v404, 1
        %v527 = vsel %vm477, %v524, %v526
        %v528 = vrot.slane %v405, 1
        %v529 = vrot.slane %v406, 1
        %v530 = vsel %vm477, %v528, %v529
        %v531 = vrot.slane %v407, 1
        %v532 = vsel %vm477, %v529, %v531
        %v533 = vrot.slane %v408, 1
        %v534 = vrot.slane %v409, 1
        %v535 = vsel %vm477, %v533, %v534
        %v536 = vrot.slane %v410, 1
        %v537 = vsel %vm477, %v534, %v536
        %v538 = vrot.slane %v411, 1
        %v539 = vrot.slane %v412, 1
        %v540 = vsel %vm477, %v538, %v539
        %v541 = vrot.slane %v413, 1
        %v542 = vsel %vm477, %v539, %v541
        %v543 = vrot.slane %v414, 1
        %v544 = vrot.slane %v415, 1
        %v545 = vsel %vm477, %v543, %v544
        %v546 = vrot.slane %v416, 1
        %v547 = vsel %vm477, %v544, %v546
        %v548 = vrot.slane %v417, 1
        %v549 = vrot.slane %v418, 1
        %v550 = vsel %vm477, %v548, %v549
        %v551 = vrot.slane %v419, 1
        %v552 = vsel %vm477, %v549, %v551
        %v553 = vrot.slane %v420, 1
        %v554 = vrot.slane %v421, 1
        %v555 = vsel %vm477, %v553, %v554
        %v556 = vrot.slane %v422, 1
        %v557 = vsel %vm477, %v554, %v556
        %590 = vmatprep.subr.mxu0 0.0
        %591 = vmatpush1.msra.mxu0 %v262
        %592 = vmatprep.subr.mxu0 0.0
        %593 = vmatpush1.msra.mxu0 %v261
        %594 = vmatprep.subr.mxu0 0.0
        %595 = vmatpush1.msra.mxu0 %v260
        %596 = vmatprep.subr.mxu0 0.0
        %597 = vmatpush1.msra.mxu0 %v259
        %598 = vmatprep.subr.mxu0 0.0
        %599 = vmatpush1.msra.mxu0 %v258
        %600 = vmatprep.subr.mxu0 0.0
        %601 = vmatpush1.msra.mxu0 %v257
        %602 = vmatprep.subr.mxu0 0.0
        %603 = vmatpush1.msra.mxu0 %v256
        %604 = vmatprep.subr.mxu0 0.0
        %605 = vmatpush1.msra.mxu0 %v255
        %606 = vmatprep.subr.mxu0 0.0
        %607 = vmatpush1.msra.mxu0 %v254
        %608 = vmatprep.subr.mxu0 0.0
        %609 = vmatpush1.msra.mxu0 %v253
        %610 = vmatprep.subr.mxu0 0.0
        %611 = vmatpush1.msra.mxu0 %v252
        %612 = vmatprep.subr.mxu0 0.0
        %613 = vmatpush1.msra.mxu0 %v251
        %614 = vmatprep.subr.mxu0 0.0
        %615 = vmatpush1.msra.mxu0 %v250
        %616 = vmatprep.subr.mxu0 0.0
        %617 = vmatpush1.msra.mxu0 %v249
        %618 = vmatprep.subr.mxu0 0.0
        %619 = vmatpush1.msra.mxu0 %v248
        %620 = vmatprep.subr.mxu0 0.0
        %621 = vmatpush1.msra.mxu0 %v247
        %622 = vmatprep.subr.mxu0 0.0
        %623 = vmatpush2.msra.mxu0 0.0
        %624 = vmatprep.subr.mxu0 0.0
        %625 = vmatpush2.msra.mxu0 0.0
        %626 = vmatprep.subr.mxu0 0.0
        %627 = vmatpush2.msra.mxu0 0.0
        %628 = vmatprep.subr.mxu0 0.0
        %629 = vmatpush2.msra.mxu0 0.0
        %630 = vmatprep.subr.mxu0 0.0
        %631 = vmatpush2.msra.mxu0 0.0
        %632 = vmatprep.subr.mxu0 0.0
        %633 = vmatpush2.msra.mxu0 0.0
        %634 = vmatprep.subr.mxu0 0.0
        %635 = vmatpush2.msra.mxu0 0.0
        %636 = vmatprep.subr.mxu0 0.0
        %637 = vmatpush2.msra.mxu0 0.0
        %638 = vmatprep.subr.mxu0 0.0
        %639 = vmatpush2.msra.mxu0 0.0
        %640 = vmatprep.subr.mxu0 0.0
        %641 = vmatpush2.msra.mxu0 0.0
        %642 = vmatprep.subr.mxu0 0.0
        %643 = vmatpush2.msra.mxu0 0.0
        %644 = vmatprep.subr.mxu0 0.0
        %645 = vmatpush2.msra.mxu0 0.0
        %646 = vmatprep.subr.mxu0 0.0
        %647 = vmatpush2.msra.mxu0 0.0
        %648 = vmatprep.subr.mxu0 0.0
        %649 = vmatpush2.msra.mxu0 0.0
        %650 = vmatprep.subr.mxu0 0.0
        %651 = vmatpush2.msra.mxu0 0.0
        %652 = vmatprep.subr.mxu0 0.0
        %653 = vmatpush2.msra.mxu0 0.0
        %654 = vmatprep.mubr.f32.mxu0 0.0
        %655 = vmatmul.mubr.f32.gmra.mxu0 %v480
        %v656 = vpop.f32.mrf.mxu0
        %v657 = vadd.f32 0.0, %v656
        %v658 = vpop.f32.mrf.mxu0
        %659 = vmatprep.mubr.f32.mxu0 0.0
        %660 = vmatmul.mubr.f32.gmra.mxu0 %v482
        %v661 = vpop.f32.mrf.mxu0
        %v662 = vadd.f32 0.0, %v661
        %v663 = vpop.f32.mrf.mxu0
        %664 = vmatprep.mubr.f32.mxu0 0.0
        %665 = vmatmul.mubr.f32.gmra.mxu0 %v485
        %v666 = vpop.f32.mrf.mxu0
        %v667 = vadd.f32 0.0, %v666
        %v668 = vpop.f32.mrf.mxu0
        %669 = vmatprep.mubr.f32.mxu0 0.0
        %670 = vmatmul.mubr.f32.gmra.mxu0 %v487
        %v671 = vpop.f32.mrf.mxu0
        %v672 = vadd.f32 0.0, %v671
        %v673 = vpop.f32.mrf.mxu0
        %674 = vmatprep.mubr.f32.mxu0 0.0
        %675 = vmatmul.mubr.f32.gmra.mxu0 %v490
        %v676 = vpop.f32.mrf.mxu0
        %v677 = vadd.f32 0.0, %v676
        %v678 = vpop.f32.mrf.mxu0
        %679 = vmatprep.mubr.f32.mxu0 0.0
        %680 = vmatmul.mubr.f32.gmra.mxu0 %v492
        %v681 = vpop.f32.mrf.mxu0
        %v682 = vadd.f32 0.0, %v681
        %v683 = vpop.f32.mrf.mxu0
        %684 = vmatprep.mubr.f32.mxu0 0.0
        %685 = vmatmul.mubr.f32.gmra.mxu0 %v495
        %v686 = vpop.f32.mrf.mxu0
        %v687 = vadd.f32 0.0, %v686
        %v688 = vpop.f32.mrf.mxu0
        %689 = vmatprep.mubr.f32.mxu0 0.0
        %690 = vmatmul.mubr.f32.gmra.mxu0 %v497
        %v691 = vpop.f32.mrf.mxu0
        %v692 = vadd.f32 0.0, %v691
        %v693 = vpop.f32.mrf.mxu0
        %694 = vmatprep.mubr.f32.mxu0 0.0
        %695 = vmatmul.mubr.f32.gmra.mxu0 %v500
        %v696 = vpop.f32.mrf.mxu0
        %v697 = vadd.f32 0.0, %v696
        %v698 = vpop.f32.mrf.mxu0
        %699 = vmatprep.mubr.f32.mxu0 0.0
        %700 = vmatmul.mubr.f32.gmra.mxu0 %v502
        %v701 = vpop.f32.mrf.mxu0
        %v702 = vadd.f32 0.0, %v701
        %v703 = vpop.f32.mrf.mxu0
        %704 = vmatprep.mubr.f32.mxu0 0.0
        %705 = vmatmul.mubr.f32.gmra.mxu0 %v505
        %v706 = vpop.f32.mrf.mxu0
        %v707 = vadd.f32 0.0, %v706
        %v708 = vpop.f32.mrf.mxu0
        %709 = vmatprep.mubr.f32.mxu0 0.0
        %710 = vmatmul.mubr.f32.gmra.mxu0 %v507
        %v711 = vpop.f32.mrf.mxu0
        %v712 = vadd.f32 0.0, %v711
        %v713 = vpop.f32.mrf.mxu0
        %714 = vmatprep.mubr.f32.mxu0 0.0
        %715 = vmatmul.mubr.f32.gmra.mxu0 %v510
        %v716 = vpop.f32.mrf.mxu0
        %v717 = vadd.f32 0.0, %v716
        %v718 = vpop.f32.mrf.mxu0
        %719 = vmatprep.mubr.f32.mxu0 0.0
        %720 = vmatmul.mubr.f32.gmra.mxu0 %v512
        %v721 = vpop.f32.mrf.mxu0
        %v722 = vadd.f32 0.0, %v721
        %v723 = vpop.f32.mrf.mxu0
        %724 = vmatprep.mubr.f32.mxu0 0.0
        %725 = vmatmul.mubr.f32.gmra.mxu0 %v515
        %v726 = vpop.f32.mrf.mxu0
        %v727 = vadd.f32 0.0, %v726
        %v728 = vpop.f32.mrf.mxu0
        %729 = vmatprep.mubr.f32.mxu0 0.0
        %730 = vmatmul.mubr.f32.gmra.mxu0 %v517
        %v731 = vpop.f32.mrf.mxu0
        %v732 = vadd.f32 0.0, %v731
        %v733 = vpop.f32.mrf.mxu0
        %734 = vmatprep.mubr.f32.mxu0 0.0
        %735 = vmatmul.mubr.f32.gmra.mxu0 %v520
        %v736 = vpop.f32.mrf.mxu0
        %v737 = vadd.f32 0.0, %v736
        %v738 = vpop.f32.mrf.mxu0
        %739 = vmatprep.mubr.f32.mxu0 0.0
        %740 = vmatmul.mubr.f32.gmra.mxu0 %v522
        %v741 = vpop.f32.mrf.mxu0
        %v742 = vadd.f32 0.0, %v741
        %v743 = vpop.f32.mrf.mxu0
        %744 = vmatprep.mubr.f32.mxu0 0.0
        %745 = vmatmul.mubr.f32.gmra.mxu0 %v525
        %v746 = vpop.f32.mrf.mxu0
        %v747 = vadd.f32 0.0, %v746
        %v748 = vpop.f32.mrf.mxu0
        %749 = vmatprep.mubr.f32.mxu0 0.0
        %750 = vmatmul.mubr.f32.gmra.mxu0 %v527
        %v751 = vpop.f32.mrf.mxu0
        %v752 = vadd.f32 0.0, %v751
        %v753 = vpop.f32.mrf.mxu0
        %754 = vmatprep.mubr.f32.mxu0 0.0
        %755 = vmatmul.mubr.f32.gmra.mxu0 %v530
        %v756 = vpop.f32.mrf.mxu0
        %v757 = vadd.f32 0.0, %v756
        %v758 = vpop.f32.mrf.mxu0
        %759 = vmatprep.mubr.f32.mxu0 0.0
        %760 = vmatmul.mubr.f32.gmra.mxu0 %v532
        %v761 = vpop.f32.mrf.mxu0
        %v762 = vadd.f32 0.0, %v761
        %v763 = vpop.f32.mrf.mxu0
        %764 = vmatprep.mubr.f32.mxu0 0.0
        %765 = vmatmul.mubr.f32.gmra.mxu0 %v535
        %v766 = vpop.f32.mrf.mxu0
        %v767 = vadd.f32 0.0, %v766
        %v768 = vpop.f32.mrf.mxu0
        %769 = vmatprep.mubr.f32.mxu0 0.0
        %770 = vmatmul.mubr.f32.gmra.mxu0 %v537
        %v771 = vpop.f32.mrf.mxu0
        %v772 = vadd.f32 0.0, %v771
        %v773 = vpop.f32.mrf.mxu0
        %774 = vmatprep.mubr.f32.mxu0 0.0
        %775 = vmatmul.mubr.f32.gmra.mxu0 %v540
        %v776 = vpop.f32.mrf.mxu0
        %v777 = vadd.f32 0.0, %v776
        %v778 = vpop.f32.mrf.mxu0
        %779 = vmatprep.mubr.f32.mxu0 0.0
        %780 = vmatmul.mubr.f32.gmra.mxu0 %v542
        %v781 = vpop.f32.mrf.mxu0
        %v782 = vadd.f32 0.0, %v781
        %v783 = vpop.f32.mrf.mxu0
        %784 = vmatprep.mubr.f32.mxu0 0.0
        %785 = vmatmul.mubr.f32.gmra.mxu0 %v545
        %v786 = vpop.f32.mrf.mxu0
        %v787 = vadd.f32 0.0, %v786
        %v788 = vpop.f32.mrf.mxu0
        %789 = vmatprep.mubr.f32.mxu0 0.0
        %790 = vmatmul.mubr.f32.gmra.mxu0 %v547
        %v791 = vpop.f32.mrf.mxu0
        %v792 = vadd.f32 0.0, %v791
        %v793 = vpop.f32.mrf.mxu0
        %794 = vmatprep.mubr.f32.mxu0 0.0
        %795 = vmatmul.mubr.f32.gmra.mxu0 %v550
        %v796 = vpop.f32.mrf.mxu0
        %v797 = vadd.f32 0.0, %v796
        %v798 = vpop.f32.mrf.mxu0
        %799 = vmatprep.mubr.f32.mxu0 0.0
        %800 = vmatmul.mubr.f32.gmra.mxu0 %v552
        %v801 = vpop.f32.mrf.mxu0
        %v802 = vadd.f32 0.0, %v801
        %v803 = vpop.f32.mrf.mxu0
        %804 = vmatprep.mubr.f32.mxu0 0.0
        %805 = vmatmul.mubr.f32.gmra.mxu0 %v555
        %v806 = vpop.f32.mrf.mxu0
        %v807 = vadd.f32 0.0, %v806
        %v808 = vpop.f32.mrf.mxu0
        %809 = vmatprep.mubr.f32.mxu0 0.0
        %810 = vmatmul.mubr.f32.gmra.mxu0 %v557
        %v811 = vpop.f32.mrf.mxu0
        %v812 = vadd.f32 0.0, %v811
        %v813 = vpop.f32.mrf.mxu0
        %814 = vdwg.mxu0
        %815 = vmatprep.subr.mxu0 0.0
        %816 = vmatpush1.msra.mxu0 %v246
        %817 = vmatprep.subr.mxu0 0.0
        %818 = vmatpush1.msra.mxu0 %v245
        %819 = vmatprep.subr.mxu0 0.0
        %820 = vmatpush1.msra.mxu0 %v244
        %821 = vmatprep.subr.mxu0 0.0
        %822 = vmatpush1.msra.mxu0 %v243
        %823 = vmatprep.subr.mxu0 0.0
        %824 = vmatpush1.msra.mxu0 %v242
        %825 = vmatprep.subr.mxu0 0.0
        %826 = vmatpush1.msra.mxu0 %v241
        %827 = vmatprep.subr.mxu0 0.0
        %828 = vmatpush1.msra.mxu0 %v240
        %829 = vmatprep.subr.mxu0 0.0
        %830 = vmatpush1.msra.mxu0 %v239
        %831 = vmatprep.subr.mxu0 0.0
        %832 = vmatpush1.msra.mxu0 %v238
        %833 = vmatprep.subr.mxu0 0.0
        %834 = vmatpush1.msra.mxu0 %v237
        %835 = vmatprep.subr.mxu0 0.0
        %836 = vmatpush1.msra.mxu0 %v236
        %837 = vmatprep.subr.mxu0 0.0
        %838 = vmatpush1.msra.mxu0 %v235
        %839 = vmatprep.subr.mxu0 0.0
        %840 = vmatpush1.msra.mxu0 %v234
        %841 = vmatprep.subr.mxu0 0.0
        %842 = vmatpush1.msra.mxu0 %v233
        %843 = vmatprep.subr.mxu0 0.0
        %844 = vmatpush1.msra.mxu0 %v232
        %845 = vmatprep.subr.mxu0 0.0
        %846 = vmatpush1.msra.mxu0 %v231
        %847 = vmatprep.subr.mxu0 0.0
        %848 = vmatpush2.msra.mxu0 0.0
        %849 = vmatprep.subr.mxu0 0.0
        %850 = vmatpush2.msra.mxu0 0.0
        %851 = vmatprep.subr.mxu0 0.0
        %852 = vmatpush2.msra.mxu0 0.0
        %853 = vmatprep.subr.mxu0 0.0
        %854 = vmatpush2.msra.mxu0 0.0
        %855 = vmatprep.subr.mxu0 0.0
        %856 = vmatpush2.msra.mxu0 0.0
        %857 = vmatprep.subr.mxu0 0.0
        %858 = vmatpush2.msra.mxu0 0.0
        %859 = vmatprep.subr.mxu0 0.0
        %860 = vmatpush2.msra.mxu0 0.0
        %861 = vmatprep.subr.mxu0 0.0
        %862 = vmatpush2.msra.mxu0 0.0
        %863 = vmatprep.subr.mxu0 0.0
        %864 = vmatpush2.msra.mxu0 0.0
        %865 = vmatprep.subr.mxu0 0.0
        %866 = vmatpush2.msra.mxu0 0.0
        %867 = vmatprep.subr.mxu0 0.0
        %868 = vmatpush2.msra.mxu0 0.0
        %869 = vmatprep.subr.mxu0 0.0
        %870 = vmatpush2.msra.mxu0 0.0
        %871 = vmatprep.subr.mxu0 0.0
        %872 = vmatpush2.msra.mxu0 0.0
        %873 = vmatprep.subr.mxu0 0.0
        %874 = vmatpush2.msra.mxu0 0.0
        %875 = vmatprep.subr.mxu0 0.0
        %876 = vmatpush2.msra.mxu0 0.0
        %877 = vmatprep.subr.mxu0 0.0
        %878 = vmatpush2.msra.mxu0 0.0
        %879 = vmatprep.mubr.f32.mxu0 0.0
        %880 = vmatmul.mubr.f32.gmra.mxu0 %v375
        %v881 = vpop.f32.mrf.mxu0
        %v882 = vadd.f32 %v657, %v881
        %v883 = vpop.f32.mrf.mxu0
        %884 = vmatprep.mubr.f32.mxu0 0.0
        %885 = vmatmul.mubr.f32.gmra.mxu0 %v376
        %v886 = vpop.f32.mrf.mxu0
        %v887 = vadd.f32 %v662, %v886
        %v888 = vpop.f32.mrf.mxu0
        %889 = vmatprep.mubr.f32.mxu0 0.0
        %890 = vmatmul.mubr.f32.gmra.mxu0 %v378
        %v891 = vpop.f32.mrf.mxu0
        %v892 = vadd.f32 %v667, %v891
        %v893 = vpop.f32.mrf.mxu0
        %894 = vmatprep.mubr.f32.mxu0 0.0
        %895 = vmatmul.mubr.f32.gmra.mxu0 %v379
        %v896 = vpop.f32.mrf.mxu0
        %v897 = vadd.f32 %v672, %v896
        %v898 = vpop.f32.mrf.mxu0
        %899 = vmatprep.mubr.f32.mxu0 0.0
        %900 = vmatmul.mubr.f32.gmra.mxu0 %v381
        %v901 = vpop.f32.mrf.mxu0
        %v902 = vadd.f32 %v677, %v901
        %v903 = vpop.f32.mrf.mxu0
        %904 = vmatprep.mubr.f32.mxu0 0.0
        %905 = vmatmul.mubr.f32.gmra.mxu0 %v382
        %v906 = vpop.f32.mrf.mxu0
        %v907 = vadd.f32 %v682, %v906
        %v908 = vpop.f32.mrf.mxu0
        %909 = vmatprep.mubr.f32.mxu0 0.0
        %910 = vmatmul.mubr.f32.gmra.mxu0 %v384
        %v911 = vpop.f32.mrf.mxu0
        %v912 = vadd.f32 %v687, %v911
        %v913 = vpop.f32.mrf.mxu0
        %914 = vmatprep.mubr.f32.mxu0 0.0
        %915 = vmatmul.mubr.f32.gmra.mxu0 %v385
        %v916 = vpop.f32.mrf.mxu0
        %v917 = vadd.f32 %v692, %v916
        %v918 = vpop.f32.mrf.mxu0
        %919 = vmatprep.mubr.f32.mxu0 0.0
        %920 = vmatmul.mubr.f32.gmra.mxu0 %v387
        %v921 = vpop.f32.mrf.mxu0
        %v922 = vadd.f32 %v697, %v921
        %v923 = vpop.f32.mrf.mxu0
        %924 = vmatprep.mubr.f32.mxu0 0.0
        %925 = vmatmul.mubr.f32.gmra.mxu0 %v388
        %v926 = vpop.f32.mrf.mxu0
        %v927 = vadd.f32 %v702, %v926
        %v928 = vpop.f32.mrf.mxu0
        %929 = vmatprep.mubr.f32.mxu0 0.0
        %930 = vmatmul.mubr.f32.gmra.mxu0 %v390
        %v931 = vpop.f32.mrf.mxu0
        %v932 = vadd.f32 %v707, %v931
        %v933 = vpop.f32.mrf.mxu0
        %934 = vmatprep.mubr.f32.mxu0 0.0
        %935 = vmatmul.mubr.f32.gmra.mxu0 %v391
        %v936 = vpop.f32.mrf.mxu0
        %v937 = vadd.f32 %v712, %v936
        %v938 = vpop.f32.mrf.mxu0
        %939 = vmatprep.mubr.f32.mxu0 0.0
        %940 = vmatmul.mubr.f32.gmra.mxu0 %v393
        %v941 = vpop.f32.mrf.mxu0
        %v942 = vadd.f32 %v717, %v941
        %v943 = vpop.f32.mrf.mxu0
        %944 = vmatprep.mubr.f32.mxu0 0.0
        %945 = vmatmul.mubr.f32.gmra.mxu0 %v394
        %v946 = vpop.f32.mrf.mxu0
        %v947 = vadd.f32 %v722, %v946
        %v948 = vpop.f32.mrf.mxu0
        %949 = vmatprep.mubr.f32.mxu0 0.0
        %950 = vmatmul.mubr.f32.gmra.mxu0 %v396
        %v951 = vpop.f32.mrf.mxu0
        %v952 = vadd.f32 %v727, %v951
        %v953 = vpop.f32.mrf.mxu0
        %954 = vmatprep.mubr.f32.mxu0 0.0
        %955 = vmatmul.mubr.f32.gmra.mxu0 %v397
        %v956 = vpop.f32.mrf.mxu0
        %v957 = vadd.f32 %v732, %v956
        %v958 = vpop.f32.mrf.mxu0
        %959 = vmatprep.mubr.f32.mxu0 0.0
        %960 = vmatmul.mubr.f32.gmra.mxu0 %v399
        %v961 = vpop.f32.mrf.mxu0
        %v962 = vadd.f32 %v737, %v961
        %v963 = vpop.f32.mrf.mxu0
        %964 = vmatprep.mubr.f32.mxu0 0.0
        %965 = vmatmul.mubr.f32.gmra.mxu0 %v400
        %v966 = vpop.f32.mrf.mxu0
        %v967 = vadd.f32 %v742, %v966
        %v968 = vpop.f32.mrf.mxu0
        %969 = vmatprep.mubr.f32.mxu0 0.0
        %970 = vmatmul.mubr.f32.gmra.mxu0 %v402
        %v971 = vpop.f32.mrf.mxu0
        %v972 = vadd.f32 %v747, %v971
        %v973 = vpop.f32.mrf.mxu0
        %974 = vmatprep.mubr.f32.mxu0 0.0
        %975 = vmatmul.mubr.f32.gmra.mxu0 %v403
        %v976 = vpop.f32.mrf.mxu0
        %v977 = vadd.f32 %v752, %v976
        %v978 = vpop.f32.mrf.mxu0
        %979 = vmatprep.mubr.f32.mxu0 0.0
        %980 = vmatmul.mubr.f32.gmra.mxu0 %v405
        %v981 = vpop.f32.mrf.mxu0
        %v982 = vadd.f32 %v757, %v981
        %v983 = vpop.f32.mrf.mxu0
        %984 = vmatprep.mubr.f32.mxu0 0.0
        %985 = vmatmul.mubr.f32.gmra.mxu0 %v406
        %v986 = vpop.f32.mrf.mxu0
        %v987 = vadd.f32 %v762, %v986
        %v988 = vpop.f32.mrf.mxu0
        %989 = vmatprep.mubr.f32.mxu0 0.0
        %990 = vmatmul.mubr.f32.gmra.mxu0 %v408
        %v991 = vpop.f32.mrf.mxu0
        %v992 = vadd.f32 %v767, %v991
        %v993 = vpop.f32.mrf.mxu0
        %994 = vmatprep.mubr.f32.mxu0 0.0
        %995 = vmatmul.mubr.f32.gmra.mxu0 %v409
        %v996 = vpop.f32.mrf.mxu0
        %v997 = vadd.f32 %v772, %v996
        %v998 = vpop.f32.mrf.mxu0
        %999 = vmatprep.mubr.f32.mxu0 0.0
        %1000 = vmatmul.mubr.f32.gmra.mxu0 %v411
        %v1001 = vpop.f32.mrf.mxu0
        %v1002 = vadd.f32 %v777, %v1001
        %v1003 = vpop.f32.mrf.mxu0
        %1004 = vmatprep.mubr.f32.mxu0 0.0
        %1005 = vmatmul.mubr.f32.gmra.mxu0 %v412
        %v1006 = vpop.f32.mrf.mxu0
        %v1007 = vadd.f32 %v782, %v1006
        %v1008 = vpop.f32.mrf.mxu0
        %1009 = vmatprep.mubr.f32.mxu0 0.0
        %1010 = vmatmul.mubr.f32.gmra.mxu0 %v414
        %v1011 = vpop.f32.mrf.mxu0
        %v1012 = vadd.f32 %v787, %v1011
        %v1013 = vpop.f32.mrf.mxu0
        %1014 = vmatprep.mubr.f32.mxu0 0.0
        %1015 = vmatmul.mubr.f32.gmra.mxu0 %v415
        %v1016 = vpop.f32.mrf.mxu0
        %v1017 = vadd.f32 %v792, %v1016
        %v1018 = vpop.f32.mrf.mxu0
        %1019 = vmatprep.mubr.f32.mxu0 0.0
        %1020 = vmatmul.mubr.f32.gmra.mxu0 %v417
        %v1021 = vpop.f32.mrf.mxu0
        %v1022 = vadd.f32 %v797, %v1021
        %v1023 = vpop.f32.mrf.mxu0
        %1024 = vmatprep.mubr.f32.mxu0 0.0
        %1025 = vmatmul.mubr.f32.gmra.mxu0 %v418
        %v1026 = vpop.f32.mrf.mxu0
        %v1027 = vadd.f32 %v802, %v1026
        %v1028 = vpop.f32.mrf.mxu0
        %1029 = vmatprep.mubr.f32.mxu0 0.0
        %1030 = vmatmul.mubr.f32.gmra.mxu0 %v420
        %v1031 = vpop.f32.mrf.mxu0
        %v1032 = vadd.f32 %v807, %v1031
        %v1033 = vpop.f32.mrf.mxu0
        %1034 = vmatprep.mubr.f32.mxu0 0.0
        %1035 = vmatmul.mubr.f32.gmra.mxu0 %v421
        %v1036 = vpop.f32.mrf.mxu0
        %v1037 = vadd.f32 %v812, %v1036
        %v1038 = vpop.f32.mrf.mxu0
        %1039 = vdwg.mxu0
        %vm1040 = vcmask 1045504
        %v1041 = vrot.slane %v375, 2
        %v1042 = vrot.slane %v376, 2
        %v1043 = vsel %vm1040, %v1041, %v1042
        %v1044 = vrot.slane %v377, 2
        %v1045 = vsel %vm1040, %v1042, %v1044
        %v1046 = vrot.slane %v378, 2
        %v1047 = vrot.slane %v379, 2
        %v1048 = vsel %vm1040, %v1046, %v1047
        %v1049 = vrot.slane %v380, 2
        %v1050 = vsel %vm1040, %v1047, %v1049
        %v1051 = vrot.slane %v381, 2
        %v1052 = vrot.slane %v382, 2
        %v1053 = vsel %vm1040, %v1051, %v1052
        %v1054 = vrot.slane %v383, 2
        %v1055 = vsel %vm1040, %v1052, %v1054
        %v1056 = vrot.slane %v384, 2
        %v1057 = vrot.slane %v385, 2
        %v1058 = vsel %vm1040, %v1056, %v1057
        %v1059 = vrot.slane %v386, 2
        %v1060 = vsel %vm1040, %v1057, %v1059
        %v1061 = vrot.slane %v387, 2
        %v1062 = vrot.slane %v388, 2
        %v1063 = vsel %vm1040, %v1061, %v1062
        %v1064 = vrot.slane %v389, 2
        %v1065 = vsel %vm1040, %v1062, %v1064
        %v1066 = vrot.slane %v390, 2
        %v1067 = vrot.slane %v391, 2
        %v1068 = vsel %vm1040, %v1066, %v1067
        %v1069 = vrot.slane %v392, 2
        %v1070 = vsel %vm1040, %v1067, %v1069
        %v1071 = vrot.slane %v393, 2
        %v1072 = vrot.slane %v394, 2
        %v1073 = vsel %vm1040, %v1071, %v1072
        %v1074 = vrot.slane %v395, 2
        %v1075 = vsel %vm1040, %v1072, %v1074
        %v1076 = vrot.slane %v396, 2
        %v1077 = vrot.slane %v397, 2
        %v1078 = vsel %vm1040, %v1076, %v1077
        %v1079 = vrot.slane %v398, 2
        %v1080 = vsel %vm1040, %v1077, %v1079
        %v1081 = vrot.slane %v399, 2
        %v1082 = vrot.slane %v400, 2
        %v1083 = vsel %vm1040, %v1081, %v1082
        %v1084 = vrot.slane %v401, 2
        %v1085 = vsel %vm1040, %v1082, %v1084
        %v1086 = vrot.slane %v402, 2
        %v1087 = vrot.slane %v403, 2
        %v1088 = vsel %vm1040, %v1086, %v1087
        %v1089 = vrot.slane %v404, 2
        %v1090 = vsel %vm1040, %v1087, %v1089
        %v1091 = vrot.slane %v405, 2
        %v1092 = vrot.slane %v406, 2
        %v1093 = vsel %vm1040, %v1091, %v1092
        %v1094 = vrot.slane %v407, 2
        %v1095 = vsel %vm1040, %v1092, %v1094
        %v1096 = vrot.slane %v408, 2
        %v1097 = vrot.slane %v409, 2
        %v1098 = vsel %vm1040, %v1096, %v1097
        %v1099 = vrot.slane %v410, 2
        %v1100 = vsel %vm1040, %v1097, %v1099
        %v1101 = vrot.slane %v411, 2
        %v1102 = vrot.slane %v412, 2
        %v1103 = vsel %vm1040, %v1101, %v1102
        %v1104 = vrot.slane %v413, 2
        %v1105 = vsel %vm1040, %v1102, %v1104
        %v1106 = vrot.slane %v414, 2
        %v1107 = vrot.slane %v415, 2
        %v1108 = vsel %vm1040, %v1106, %v1107
        %v1109 = vrot.slane %v416, 2
        %v1110 = vsel %vm1040, %v1107, %v1109
        %v1111 = vrot.slane %v417, 2
        %v1112 = vrot.slane %v418, 2
        %v1113 = vsel %vm1040, %v1111, %v1112
        %v1114 = vrot.slane %v419, 2
        %v1115 = vsel %vm1040, %v1112, %v1114
        %v1116 = vrot.slane %v420, 2
        %v1117 = vrot.slane %v421, 2
        %v1118 = vsel %vm1040, %v1116, %v1117
        %v1119 = vrot.slane %v422, 2
        %v1120 = vsel %vm1040, %v1117, %v1119
        %1153 = vmatprep.subr.mxu0 0.0
        %1154 = vmatpush1.msra.mxu0 %v278
        %1155 = vmatprep.subr.mxu0 0.0
        %1156 = vmatpush1.msra.mxu0 %v277
        %1157 = vmatprep.subr.mxu0 0.0
        %1158 = vmatpush1.msra.mxu0 %v276
        %1159 = vmatprep.subr.mxu0 0.0
        %1160 = vmatpush1.msra.mxu0 %v275
        %1161 = vmatprep.subr.mxu0 0.0
        %1162 = vmatpush1.msra.mxu0 %v274
        %1163 = vmatprep.subr.mxu0 0.0
        %1164 = vmatpush1.msra.mxu0 %v273
        %1165 = vmatprep.subr.mxu0 0.0
        %1166 = vmatpush1.msra.mxu0 %v272
        %1167 = vmatprep.subr.mxu0 0.0
        %1168 = vmatpush1.msra.mxu0 %v271
        %1169 = vmatprep.subr.mxu0 0.0
        %1170 = vmatpush1.msra.mxu0 %v270
        %1171 = vmatprep.subr.mxu0 0.0
        %1172 = vmatpush1.msra.mxu0 %v269
        %1173 = vmatprep.subr.mxu0 0.0
        %1174 = vmatpush1.msra.mxu0 %v268
        %1175 = vmatprep.subr.mxu0 0.0
        %1176 = vmatpush1.msra.mxu0 %v267
        %1177 = vmatprep.subr.mxu0 0.0
        %1178 = vmatpush1.msra.mxu0 %v266
        %1179 = vmatprep.subr.mxu0 0.0
        %1180 = vmatpush1.msra.mxu0 %v265
        %1181 = vmatprep.subr.mxu0 0.0
        %1182 = vmatpush1.msra.mxu0 %v264
        %1183 = vmatprep.subr.mxu0 0.0
        %1184 = vmatpush1.msra.mxu0 %v263
        %1185 = vmatprep.subr.mxu0 0.0
        %1186 = vmatpush2.msra.mxu0 0.0
        %1187 = vmatprep.subr.mxu0 0.0
        %1188 = vmatpush2.msra.mxu0 0.0
        %1189 = vmatprep.subr.mxu0 0.0
        %1190 = vmatpush2.msra.mxu0 0.0
        %1191 = vmatprep.subr.mxu0 0.0
        %1192 = vmatpush2.msra.mxu0 0.0
        %1193 = vmatprep.subr.mxu0 0.0
        %1194 = vmatpush2.msra.mxu0 0.0
        %1195 = vmatprep.subr.mxu0 0.0
        %1196 = vmatpush2.msra.mxu0 0.0
        %1197 = vmatprep.subr.mxu0 0.0
        %1198 = vmatpush2.msra.mxu0 0.0
        %1199 = vmatprep.subr.mxu0 0.0
        %1200 = vmatpush2.msra.mxu0 0.0
        %1201 = vmatprep.subr.mxu0 0.0
        %1202 = vmatpush2.msra.mxu0 0.0
        %1203 = vmatprep.subr.mxu0 0.0
        %1204 = vmatpush2.msra.mxu0 0.0
        %1205 = vmatprep.subr.mxu0 0.0
        %1206 = vmatpush2.msra.mxu0 0.0
        %1207 = vmatprep.subr.mxu0 0.0
        %1208 = vmatpush2.msra.mxu0 0.0
        %1209 = vmatprep.subr.mxu0 0.0
        %1210 = vmatpush2.msra.mxu0 0.0
        %1211 = vmatprep.subr.mxu0 0.0
        %1212 = vmatpush2.msra.mxu0 0.0
        %1213 = vmatprep.subr.mxu0 0.0
        %1214 = vmatpush2.msra.mxu0 0.0
        %1215 = vmatprep.subr.mxu0 0.0
        %1216 = vmatpush2.msra.mxu0 0.0
        %1217 = vmatprep.mubr.f32.mxu0 0.0
        %1218 = vmatmul.mubr.f32.gmra.mxu0 %v1043
        %v1219 = vpop.f32.mrf.mxu0
        %v1220 = vadd.f32 0.0, %v1219
        %v1221 = vpop.f32.mrf.mxu0
        %1222 = vmatprep.mubr.f32.mxu0 0.0
        %1223 = vmatmul.mubr.f32.gmra.mxu0 %v1045
        %v1224 = vpop.f32.mrf.mxu0
        %v1225 = vadd.f32 0.0, %v1224
        %v1226 = vpop.f32.mrf.mxu0
        %1227 = vmatprep.mubr.f32.mxu0 0.0
        %1228 = vmatmul.mubr.f32.gmra.mxu0 %v1048
        %v1229 = vpop.f32.mrf.mxu0
        %v1230 = vadd.f32 0.0, %v1229
        %v1231 = vpop.f32.mrf.mxu0
        %1232 = vmatprep.mubr.f32.mxu0 0.0
        %1233 = vmatmul.mubr.f32.gmra.mxu0 %v1050
        %v1234 = vpop.f32.mrf.mxu0
        %v1235 = vadd.f32 0.0, %v1234
        %v1236 = vpop.f32.mrf.mxu0
        %1237 = vmatprep.mubr.f32.mxu0 0.0
        %1238 = vmatmul.mubr.f32.gmra.mxu0 %v1053
        %v1239 = vpop.f32.mrf.mxu0
        %v1240 = vadd.f32 0.0, %v1239
        %v1241 = vpop.f32.mrf.mxu0
        %1242 = vmatprep.mubr.f32.mxu0 0.0
        %1243 = vmatmul.mubr.f32.gmra.mxu0 %v1055
        %v1244 = vpop.f32.mrf.mxu0
        %v1245 = vadd.f32 0.0, %v1244
        %v1246 = vpop.f32.mrf.mxu0
        %1247 = vmatprep.mubr.f32.mxu0 0.0
        %1248 = vmatmul.mubr.f32.gmra.mxu0 %v1058
        %v1249 = vpop.f32.mrf.mxu0
        %v1250 = vadd.f32 0.0, %v1249
        %v1251 = vpop.f32.mrf.mxu0
        %1252 = vmatprep.mubr.f32.mxu0 0.0
        %1253 = vmatmul.mubr.f32.gmra.mxu0 %v1060
        %v1254 = vpop.f32.mrf.mxu0
        %v1255 = vadd.f32 0.0, %v1254
        %v1256 = vpop.f32.mrf.mxu0
        %1257 = vmatprep.mubr.f32.mxu0 0.0
        %1258 = vmatmul.mubr.f32.gmra.mxu0 %v1063
        %v1259 = vpop.f32.mrf.mxu0
        %v1260 = vadd.f32 0.0, %v1259
        %v1261 = vpop.f32.mrf.mxu0
        %1262 = vmatprep.mubr.f32.mxu0 0.0
        %1263 = vmatmul.mubr.f32.gmra.mxu0 %v1065
        %v1264 = vpop.f32.mrf.mxu0
        %v1265 = vadd.f32 0.0, %v1264
        %v1266 = vpop.f32.mrf.mxu0
        %1267 = vmatprep.mubr.f32.mxu0 0.0
        %1268 = vmatmul.mubr.f32.gmra.mxu0 %v1068
        %v1269 = vpop.f32.mrf.mxu0
        %v1270 = vadd.f32 0.0, %v1269
        %v1271 = vpop.f32.mrf.mxu0
        %1272 = vmatprep.mubr.f32.mxu0 0.0
        %1273 = vmatmul.mubr.f32.gmra.mxu0 %v1070
        %v1274 = vpop.f32.mrf.mxu0
        %v1275 = vadd.f32 0.0, %v1274
        %v1276 = vpop.f32.mrf.mxu0
        %1277 = vmatprep.mubr.f32.mxu0 0.0
        %1278 = vmatmul.mubr.f32.gmra.mxu0 %v1073
        %v1279 = vpop.f32.mrf.mxu0
        %v1280 = vadd.f32 0.0, %v1279
        %v1281 = vpop.f32.mrf.mxu0
        %1282 = vmatprep.mubr.f32.mxu0 0.0
        %1283 = vmatmul.mubr.f32.gmra.mxu0 %v1075
        %v1284 = vpop.f32.mrf.mxu0
        %v1285 = vadd.f32 0.0, %v1284
        %v1286 = vpop.f32.mrf.mxu0
        %1287 = vmatprep.mubr.f32.mxu0 0.0
        %1288 = vmatmul.mubr.f32.gmra.mxu0 %v1078
        %v1289 = vpop.f32.mrf.mxu0
        %v1290 = vadd.f32 0.0, %v1289
        %v1291 = vpop.f32.mrf.mxu0
        %1292 = vmatprep.mubr.f32.mxu0 0.0
        %1293 = vmatmul.mubr.f32.gmra.mxu0 %v1080
        %v1294 = vpop.f32.mrf.mxu0
        %v1295 = vadd.f32 0.0, %v1294
        %v1296 = vpop.f32.mrf.mxu0
        %1297 = vmatprep.mubr.f32.mxu0 0.0
        %1298 = vmatmul.mubr.f32.gmra.mxu0 %v1083
        %v1299 = vpop.f32.mrf.mxu0
        %v1300 = vadd.f32 0.0, %v1299
        %v1301 = vpop.f32.mrf.mxu0
        %1302 = vmatprep.mubr.f32.mxu0 0.0
        %1303 = vmatmul.mubr.f32.gmra.mxu0 %v1085
        %v1304 = vpop.f32.mrf.mxu0
        %v1305 = vadd.f32 0.0, %v1304
        %v1306 = vpop.f32.mrf.mxu0
        %1307 = vmatprep.mubr.f32.mxu0 0.0
        %1308 = vmatmul.mubr.f32.gmra.mxu0 %v1088
        %v1309 = vpop.f32.mrf.mxu0
        %v1310 = vadd.f32 0.0, %v1309
        %v1311 = vpop.f32.mrf.mxu0
        %1312 = vmatprep.mubr.f32.mxu0 0.0
        %1313 = vmatmul.mubr.f32.gmra.mxu0 %v1090
        %v1314 = vpop.f32.mrf.mxu0
        %v1315 = vadd.f32 0.0, %v1314
        %v1316 = vpop.f32.mrf.mxu0
        %1317 = vmatprep.mubr.f32.mxu0 0.0
        %1318 = vmatmul.mubr.f32.gmra.mxu0 %v1093
        %v1319 = vpop.f32.mrf.mxu0
        %v1320 = vadd.f32 0.0, %v1319
        %v1321 = vpop.f32.mrf.mxu0
        %1322 = vmatprep.mubr.f32.mxu0 0.0
        %1323 = vmatmul.mubr.f32.gmra.mxu0 %v1095
        %v1324 = vpop.f32.mrf.mxu0
        %v1325 = vadd.f32 0.0, %v1324
        %v1326 = vpop.f32.mrf.mxu0
        %1327 = vmatprep.mubr.f32.mxu0 0.0
        %1328 = vmatmul.mubr.f32.gmra.mxu0 %v1098
        %v1329 = vpop.f32.mrf.mxu0
        %v1330 = vadd.f32 0.0, %v1329
        %v1331 = vpop.f32.mrf.mxu0
        %1332 = vmatprep.mubr.f32.mxu0 0.0
        %1333 = vmatmul.mubr.f32.gmra.mxu0 %v1100
        %v1334 = vpop.f32.mrf.mxu0
        %v1335 = vadd.f32 0.0, %v1334
        %v1336 = vpop.f32.mrf.mxu0
        %1337 = vmatprep.mubr.f32.mxu0 0.0
        %1338 = vmatmul.mubr.f32.gmra.mxu0 %v1103
        %v1339 = vpop.f32.mrf.mxu0
        %v1340 = vadd.f32 0.0, %v1339
        %v1341 = vpop.f32.mrf.mxu0
        %1342 = vmatprep.mubr.f32.mxu0 0.0
        %1343 = vmatmul.mubr.f32.gmra.mxu0 %v1105
        %v1344 = vpop.f32.mrf.mxu0
        %v1345 = vadd.f32 0.0, %v1344
        %v1346 = vpop.f32.mrf.mxu0
        %1347 = vmatprep.mubr.f32.mxu0 0.0
        %1348 = vmatmul.mubr.f32.gmra.mxu0 %v1108
        %v1349 = vpop.f32.mrf.mxu0
        %v1350 = vadd.f32 0.0, %v1349
        %v1351 = vpop.f32.mrf.mxu0
        %1352 = vmatprep.mubr.f32.mxu0 0.0
        %1353 = vmatmul.mubr.f32.gmra.mxu0 %v1110
        %v1354 = vpop.f32.mrf.mxu0
        %v1355 = vadd.f32 0.0, %v1354
        %v1356 = vpop.f32.mrf.mxu0
        %1357 = vmatprep.mubr.f32.mxu0 0.0
        %1358 = vmatmul.mubr.f32.gmra.mxu0 %v1113
        %v1359 = vpop.f32.mrf.mxu0
        %v1360 = vadd.f32 0.0, %v1359
        %v1361 = vpop.f32.mrf.mxu0
        %1362 = vmatprep.mubr.f32.mxu0 0.0
        %1363 = vmatmul.mubr.f32.gmra.mxu0 %v1115
        %v1364 = vpop.f32.mrf.mxu0
        %v1365 = vadd.f32 0.0, %v1364
        %v1366 = vpop.f32.mrf.mxu0
        %1367 = vmatprep.mubr.f32.mxu0 0.0
        %1368 = vmatmul.mubr.f32.gmra.mxu0 %v1118
        %v1369 = vpop.f32.mrf.mxu0
        %v1370 = vadd.f32 0.0, %v1369
        %v1371 = vpop.f32.mrf.mxu0
        %1372 = vmatprep.mubr.f32.mxu0 0.0
        %1373 = vmatmul.mubr.f32.gmra.mxu0 %v1120
        %v1374 = vpop.f32.mrf.mxu0
        %v1375 = vadd.f32 0.0, %v1374
        %v1376 = vpop.f32.mrf.mxu0
        %1377 = vdwg.mxu0
        %v1378 = vadd.f32 %v882, %v1220
        %v1379 = vadd.f32 %v887, %v1225
        %v1380 = vadd.f32 %v892, %v1230
        %v1381 = vadd.f32 %v897, %v1235
        %v1382 = vadd.f32 %v902, %v1240
        %v1383 = vadd.f32 %v907, %v1245
        %v1384 = vadd.f32 %v912, %v1250
        %v1385 = vadd.f32 %v917, %v1255
        %v1386 = vadd.f32 %v922, %v1260
        %v1387 = vadd.f32 %v927, %v1265
        %v1388 = vadd.f32 %v932, %v1270
        %v1389 = vadd.f32 %v937, %v1275
        %v1390 = vadd.f32 %v942, %v1280
        %v1391 = vadd.f32 %v947, %v1285
        %v1392 = vadd.f32 %v952, %v1290
        %v1393 = vadd.f32 %v957, %v1295
        %v1394 = vadd.f32 %v962, %v1300
        %v1395 = vadd.f32 %v967, %v1305
        %v1396 = vadd.f32 %v972, %v1310
        %v1397 = vadd.f32 %v977, %v1315
        %v1398 = vadd.f32 %v982, %v1320
        %v1399 = vadd.f32 %v987, %v1325
        %v1400 = vadd.f32 %v992, %v1330
        %v1401 = vadd.f32 %v997, %v1335
        %v1402 = vadd.f32 %v1002, %v1340
        %v1403 = vadd.f32 %v1007, %v1345
        %v1404 = vadd.f32 %v1012, %v1350
        %v1405 = vadd.f32 %v1017, %v1355
        %v1406 = vadd.f32 %v1022, %v1360
        %v1407 = vadd.f32 %v1027, %v1365
        %v1408 = vadd.f32 %v1032, %v1370
        %v1409 = vadd.f32 %v1037, %v1375
        %v1413 = vrot.slane %v423, 1
        %v1414 = vrot.slane %v424, 1
        %v1415 = vsel %vm477, %v1413, %v1414
        %v1416 = vrot.slane %v425, 1
        %v1417 = vsel %vm477, %v1414, %v1416
        %1420 = vmatprep.subr.mxu0 0.0
        %1421 = vmatpush1.msra.mxu0 %v310
        %1422 = vmatprep.subr.mxu0 0.0
        %1423 = vmatpush1.msra.mxu0 %v309
        %1424 = vmatprep.subr.mxu0 0.0
        %1425 = vmatpush1.msra.mxu0 %v308
        %1426 = vmatprep.subr.mxu0 0.0
        %1427 = vmatpush1.msra.mxu0 %v307
        %1428 = vmatprep.subr.mxu0 0.0
        %1429 = vmatpush1.msra.mxu0 %v306
        %1430 = vmatprep.subr.mxu0 0.0
        %1431 = vmatpush1.msra.mxu0 %v305
        %1432 = vmatprep.subr.mxu0 0.0
        %1433 = vmatpush1.msra.mxu0 %v304
        %1434 = vmatprep.subr.mxu0 0.0
        %1435 = vmatpush1.msra.mxu0 %v303
        %1436 = vmatprep.subr.mxu0 0.0
        %1437 = vmatpush1.msra.mxu0 %v302
        %1438 = vmatprep.subr.mxu0 0.0
        %1439 = vmatpush1.msra.mxu0 %v301
        %1440 = vmatprep.subr.mxu0 0.0
        %1441 = vmatpush1.msra.mxu0 %v300
        %1442 = vmatprep.subr.mxu0 0.0
        %1443 = vmatpush1.msra.mxu0 %v299
        %1444 = vmatprep.subr.mxu0 0.0
        %1445 = vmatpush1.msra.mxu0 %v298
        %1446 = vmatprep.subr.mxu0 0.0
        %1447 = vmatpush1.msra.mxu0 %v297
        %1448 = vmatprep.subr.mxu0 0.0
        %1449 = vmatpush1.msra.mxu0 %v296
        %1450 = vmatprep.subr.mxu0 0.0
        %1451 = vmatpush1.msra.mxu0 %v295
        %1452 = vmatprep.subr.mxu0 0.0
        %1453 = vmatpush2.msra.mxu0 0.0
        %1454 = vmatprep.subr.mxu0 0.0
        %1455 = vmatpush2.msra.mxu0 0.0
        %1456 = vmatprep.subr.mxu0 0.0
        %1457 = vmatpush2.msra.mxu0 0.0
        %1458 = vmatprep.subr.mxu0 0.0
        %1459 = vmatpush2.msra.mxu0 0.0
        %1460 = vmatprep.subr.mxu0 0.0
        %1461 = vmatpush2.msra.mxu0 0.0
        %1462 = vmatprep.subr.mxu0 0.0
        %1463 = vmatpush2.msra.mxu0 0.0
        %1464 = vmatprep.subr.mxu0 0.0
        %1465 = vmatpush2.msra.mxu0 0.0
        %1466 = vmatprep.subr.mxu0 0.0
        %1467 = vmatpush2.msra.mxu0 0.0
        %1468 = vmatprep.subr.mxu0 0.0
        %1469 = vmatpush2.msra.mxu0 0.0
        %1470 = vmatprep.subr.mxu0 0.0
        %1471 = vmatpush2.msra.mxu0 0.0
        %1472 = vmatprep.subr.mxu0 0.0
        %1473 = vmatpush2.msra.mxu0 0.0
        %1474 = vmatprep.subr.mxu0 0.0
        %1475 = vmatpush2.msra.mxu0 0.0
        %1476 = vmatprep.subr.mxu0 0.0
        %1477 = vmatpush2.msra.mxu0 0.0
        %1478 = vmatprep.subr.mxu0 0.0
        %1479 = vmatpush2.msra.mxu0 0.0
        %1480 = vmatprep.subr.mxu0 0.0
        %1481 = vmatpush2.msra.mxu0 0.0
        %1482 = vmatprep.subr.mxu0 0.0
        %1483 = vmatpush2.msra.mxu0 0.0
        %1484 = vmatprep.mubr.f32.mxu0 0.0
        %1485 = vmatmul.mubr.f32.gmra.mxu0 %v485
        %v1486 = vpop.f32.mrf.mxu0
        %v1487 = vadd.f32 0.0, %v1486
        %v1488 = vpop.f32.mrf.mxu0
        %1489 = vmatprep.mubr.f32.mxu0 0.0
        %1490 = vmatmul.mubr.f32.gmra.mxu0 %v487
        %v1491 = vpop.f32.mrf.mxu0
        %v1492 = vadd.f32 0.0, %v1491
        %v1493 = vpop.f32.mrf.mxu0
        %1494 = vmatprep.mubr.f32.mxu0 0.0
        %1495 = vmatmul.mubr.f32.gmra.mxu0 %v490
        %v1496 = vpop.f32.mrf.mxu0
        %v1497 = vadd.f32 0.0, %v1496
        %v1498 = vpop.f32.mrf.mxu0
        %1499 = vmatprep.mubr.f32.mxu0 0.0
        %1500 = vmatmul.mubr.f32.gmra.mxu0 %v492
        %v1501 = vpop.f32.mrf.mxu0
        %v1502 = vadd.f32 0.0, %v1501
        %v1503 = vpop.f32.mrf.mxu0
        %1504 = vmatprep.mubr.f32.mxu0 0.0
        %1505 = vmatmul.mubr.f32.gmra.mxu0 %v495
        %v1506 = vpop.f32.mrf.mxu0
        %v1507 = vadd.f32 0.0, %v1506
        %v1508 = vpop.f32.mrf.mxu0
        %1509 = vmatprep.mubr.f32.mxu0 0.0
        %1510 = vmatmul.mubr.f32.gmra.mxu0 %v497
        %v1511 = vpop.f32.mrf.mxu0
        %v1512 = vadd.f32 0.0, %v1511
        %v1513 = vpop.f32.mrf.mxu0
        %1514 = vmatprep.mubr.f32.mxu0 0.0
        %1515 = vmatmul.mubr.f32.gmra.mxu0 %v500
        %v1516 = vpop.f32.mrf.mxu0
        %v1517 = vadd.f32 0.0, %v1516
        %v1518 = vpop.f32.mrf.mxu0
        %1519 = vmatprep.mubr.f32.mxu0 0.0
        %1520 = vmatmul.mubr.f32.gmra.mxu0 %v502
        %v1521 = vpop.f32.mrf.mxu0
        %v1522 = vadd.f32 0.0, %v1521
        %v1523 = vpop.f32.mrf.mxu0
        %1524 = vmatprep.mubr.f32.mxu0 0.0
        %1525 = vmatmul.mubr.f32.gmra.mxu0 %v505
        %v1526 = vpop.f32.mrf.mxu0
        %v1527 = vadd.f32 0.0, %v1526
        %v1528 = vpop.f32.mrf.mxu0
        %1529 = vmatprep.mubr.f32.mxu0 0.0
        %1530 = vmatmul.mubr.f32.gmra.mxu0 %v507
        %v1531 = vpop.f32.mrf.mxu0
        %v1532 = vadd.f32 0.0, %v1531
        %v1533 = vpop.f32.mrf.mxu0
        %1534 = vmatprep.mubr.f32.mxu0 0.0
        %1535 = vmatmul.mubr.f32.gmra.mxu0 %v510
        %v1536 = vpop.f32.mrf.mxu0
        %v1537 = vadd.f32 0.0, %v1536
        %v1538 = vpop.f32.mrf.mxu0
        %1539 = vmatprep.mubr.f32.mxu0 0.0
        %1540 = vmatmul.mubr.f32.gmra.mxu0 %v512
        %v1541 = vpop.f32.mrf.mxu0
        %v1542 = vadd.f32 0.0, %v1541
        %v1543 = vpop.f32.mrf.mxu0
        %1544 = vmatprep.mubr.f32.mxu0 0.0
        %1545 = vmatmul.mubr.f32.gmra.mxu0 %v515
        %v1546 = vpop.f32.mrf.mxu0
        %v1547 = vadd.f32 0.0, %v1546
        %v1548 = vpop.f32.mrf.mxu0
        %1549 = vmatprep.mubr.f32.mxu0 0.0
        %1550 = vmatmul.mubr.f32.gmra.mxu0 %v517
        %v1551 = vpop.f32.mrf.mxu0
        %v1552 = vadd.f32 0.0, %v1551
        %v1553 = vpop.f32.mrf.mxu0
        %1554 = vmatprep.mubr.f32.mxu0 0.0
        %1555 = vmatmul.mubr.f32.gmra.mxu0 %v520
        %v1556 = vpop.f32.mrf.mxu0
        %v1557 = vadd.f32 0.0, %v1556
        %v1558 = vpop.f32.mrf.mxu0
        %1559 = vmatprep.mubr.f32.mxu0 0.0
        %1560 = vmatmul.mubr.f32.gmra.mxu0 %v522
        %v1561 = vpop.f32.mrf.mxu0
        %v1562 = vadd.f32 0.0, %v1561
        %v1563 = vpop.f32.mrf.mxu0
        %1564 = vmatprep.mubr.f32.mxu0 0.0
        %1565 = vmatmul.mubr.f32.gmra.mxu0 %v525
        %v1566 = vpop.f32.mrf.mxu0
        %v1567 = vadd.f32 0.0, %v1566
        %v1568 = vpop.f32.mrf.mxu0
        %1569 = vmatprep.mubr.f32.mxu0 0.0
        %1570 = vmatmul.mubr.f32.gmra.mxu0 %v527
        %v1571 = vpop.f32.mrf.mxu0
        %v1572 = vadd.f32 0.0, %v1571
        %v1573 = vpop.f32.mrf.mxu0
        %1574 = vmatprep.mubr.f32.mxu0 0.0
        %1575 = vmatmul.mubr.f32.gmra.mxu0 %v530
        %v1576 = vpop.f32.mrf.mxu0
        %v1577 = vadd.f32 0.0, %v1576
        %v1578 = vpop.f32.mrf.mxu0
        %1579 = vmatprep.mubr.f32.mxu0 0.0
        %1580 = vmatmul.mubr.f32.gmra.mxu0 %v532
        %v1581 = vpop.f32.mrf.mxu0
        %v1582 = vadd.f32 0.0, %v1581
        %v1583 = vpop.f32.mrf.mxu0
        %1584 = vmatprep.mubr.f32.mxu0 0.0
        %1585 = vmatmul.mubr.f32.gmra.mxu0 %v535
        %v1586 = vpop.f32.mrf.mxu0
        %v1587 = vadd.f32 0.0, %v1586
        %v1588 = vpop.f32.mrf.mxu0
        %1589 = vmatprep.mubr.f32.mxu0 0.0
        %1590 = vmatmul.mubr.f32.gmra.mxu0 %v537
        %v1591 = vpop.f32.mrf.mxu0
        %v1592 = vadd.f32 0.0, %v1591
        %v1593 = vpop.f32.mrf.mxu0
        %1594 = vmatprep.mubr.f32.mxu0 0.0
        %1595 = vmatmul.mubr.f32.gmra.mxu0 %v540
        %v1596 = vpop.f32.mrf.mxu0
        %v1597 = vadd.f32 0.0, %v1596
        %v1598 = vpop.f32.mrf.mxu0
        %1599 = vmatprep.mubr.f32.mxu0 0.0
        %1600 = vmatmul.mubr.f32.gmra.mxu0 %v542
        %v1601 = vpop.f32.mrf.mxu0
        %v1602 = vadd.f32 0.0, %v1601
        %v1603 = vpop.f32.mrf.mxu0
        %1604 = vmatprep.mubr.f32.mxu0 0.0
        %1605 = vmatmul.mubr.f32.gmra.mxu0 %v545
        %v1606 = vpop.f32.mrf.mxu0
        %v1607 = vadd.f32 0.0, %v1606
        %v1608 = vpop.f32.mrf.mxu0
        %1609 = vmatprep.mubr.f32.mxu0 0.0
        %1610 = vmatmul.mubr.f32.gmra.mxu0 %v547
        %v1611 = vpop.f32.mrf.mxu0
        %v1612 = vadd.f32 0.0, %v1611
        %v1613 = vpop.f32.mrf.mxu0
        %1614 = vmatprep.mubr.f32.mxu0 0.0
        %1615 = vmatmul.mubr.f32.gmra.mxu0 %v550
        %v1616 = vpop.f32.mrf.mxu0
        %v1617 = vadd.f32 0.0, %v1616
        %v1618 = vpop.f32.mrf.mxu0
        %1619 = vmatprep.mubr.f32.mxu0 0.0
        %1620 = vmatmul.mubr.f32.gmra.mxu0 %v552
        %v1621 = vpop.f32.mrf.mxu0
        %v1622 = vadd.f32 0.0, %v1621
        %v1623 = vpop.f32.mrf.mxu0
        %1624 = vmatprep.mubr.f32.mxu0 0.0
        %1625 = vmatmul.mubr.f32.gmra.mxu0 %v555
        %v1626 = vpop.f32.mrf.mxu0
        %v1627 = vadd.f32 0.0, %v1626
        %v1628 = vpop.f32.mrf.mxu0
        %1629 = vmatprep.mubr.f32.mxu0 0.0
        %1630 = vmatmul.mubr.f32.gmra.mxu0 %v557
        %v1631 = vpop.f32.mrf.mxu0
        %v1632 = vadd.f32 0.0, %v1631
        %v1633 = vpop.f32.mrf.mxu0
        %1634 = vmatprep.mubr.f32.mxu0 0.0
        %1635 = vmatmul.mubr.f32.gmra.mxu0 %v1415
        %v1636 = vpop.f32.mrf.mxu0
        %v1637 = vadd.f32 0.0, %v1636
        %v1638 = vpop.f32.mrf.mxu0
        %1639 = vmatprep.mubr.f32.mxu0 0.0
        %1640 = vmatmul.mubr.f32.gmra.mxu0 %v1417
        %v1641 = vpop.f32.mrf.mxu0
        %v1642 = vadd.f32 0.0, %v1641
        %v1643 = vpop.f32.mrf.mxu0
        %1644 = vdwg.mxu0
        %1645 = vmatprep.subr.mxu0 0.0
        %1646 = vmatpush1.msra.mxu0 %v294
        %1647 = vmatprep.subr.mxu0 0.0
        %1648 = vmatpush1.msra.mxu0 %v293
        %1649 = vmatprep.subr.mxu0 0.0
        %1650 = vmatpush1.msra.mxu0 %v292
        %1651 = vmatprep.subr.mxu0 0.0
        %1652 = vmatpush1.msra.mxu0 %v291
        %1653 = vmatprep.subr.mxu0 0.0
        %1654 = vmatpush1.msra.mxu0 %v290
        %1655 = vmatprep.subr.mxu0 0.0
        %1656 = vmatpush1.msra.mxu0 %v289
        %1657 = vmatprep.subr.mxu0 0.0
        %1658 = vmatpush1.msra.mxu0 %v288
        %1659 = vmatprep.subr.mxu0 0.0
        %1660 = vmatpush1.msra.mxu0 %v287
        %1661 = vmatprep.subr.mxu0 0.0
        %1662 = vmatpush1.msra.mxu0 %v286
        %1663 = vmatprep.subr.mxu0 0.0
        %1664 = vmatpush1.msra.mxu0 %v285
        %1665 = vmatprep.subr.mxu0 0.0
        %1666 = vmatpush1.msra.mxu0 %v284
        %1667 = vmatprep.subr.mxu0 0.0
        %1668 = vmatpush1.msra.mxu0 %v283
        %1669 = vmatprep.subr.mxu0 0.0
        %1670 = vmatpush1.msra.mxu0 %v282
        %1671 = vmatprep.subr.mxu0 0.0
        %1672 = vmatpush1.msra.mxu0 %v281
        %1673 = vmatprep.subr.mxu0 0.0
        %1674 = vmatpush1.msra.mxu0 %v280
        %1675 = vmatprep.subr.mxu0 0.0
        %1676 = vmatpush1.msra.mxu0 %v279
        %1677 = vmatprep.subr.mxu0 0.0
        %1678 = vmatpush2.msra.mxu0 0.0
        %1679 = vmatprep.subr.mxu0 0.0
        %1680 = vmatpush2.msra.mxu0 0.0
        %1681 = vmatprep.subr.mxu0 0.0
        %1682 = vmatpush2.msra.mxu0 0.0
        %1683 = vmatprep.subr.mxu0 0.0
        %1684 = vmatpush2.msra.mxu0 0.0
        %1685 = vmatprep.subr.mxu0 0.0
        %1686 = vmatpush2.msra.mxu0 0.0
        %1687 = vmatprep.subr.mxu0 0.0
        %1688 = vmatpush2.msra.mxu0 0.0
        %1689 = vmatprep.subr.mxu0 0.0
        %1690 = vmatpush2.msra.mxu0 0.0
        %1691 = vmatprep.subr.mxu0 0.0
        %1692 = vmatpush2.msra.mxu0 0.0
        %1693 = vmatprep.subr.mxu0 0.0
        %1694 = vmatpush2.msra.mxu0 0.0
        %1695 = vmatprep.subr.mxu0 0.0
        %1696 = vmatpush2.msra.mxu0 0.0
        %1697 = vmatprep.subr.mxu0 0.0
        %1698 = vmatpush2.msra.mxu0 0.0
        %1699 = vmatprep.subr.mxu0 0.0
        %1700 = vmatpush2.msra.mxu0 0.0
        %1701 = vmatprep.subr.mxu0 0.0
        %1702 = vmatpush2.msra.mxu0 0.0
        %1703 = vmatprep.subr.mxu0 0.0
        %1704 = vmatpush2.msra.mxu0 0.0
        %1705 = vmatprep.subr.mxu0 0.0
        %1706 = vmatpush2.msra.mxu0 0.0
        %1707 = vmatprep.subr.mxu0 0.0
        %1708 = vmatpush2.msra.mxu0 0.0
        %1709 = vmatprep.mubr.f32.mxu0 0.0
        %1710 = vmatmul.mubr.f32.gmra.mxu0 %v378
        %v1711 = vpop.f32.mrf.mxu0
        %v1712 = vadd.f32 %v1487, %v1711
        %v1713 = vpop.f32.mrf.mxu0
        %1714 = vmatprep.mubr.f32.mxu0 0.0
        %1715 = vmatmul.mubr.f32.gmra.mxu0 %v379
        %v1716 = vpop.f32.mrf.mxu0
        %v1717 = vadd.f32 %v1492, %v1716
        %v1718 = vpop.f32.mrf.mxu0
        %1719 = vmatprep.mubr.f32.mxu0 0.0
        %1720 = vmatmul.mubr.f32.gmra.mxu0 %v381
        %v1721 = vpop.f32.mrf.mxu0
        %v1722 = vadd.f32 %v1497, %v1721
        %v1723 = vpop.f32.mrf.mxu0
        %1724 = vmatprep.mubr.f32.mxu0 0.0
        %1725 = vmatmul.mubr.f32.gmra.mxu0 %v382
        %v1726 = vpop.f32.mrf.mxu0
        %v1727 = vadd.f32 %v1502, %v1726
        %v1728 = vpop.f32.mrf.mxu0
        %1729 = vmatprep.mubr.f32.mxu0 0.0
        %1730 = vmatmul.mubr.f32.gmra.mxu0 %v384
        %v1731 = vpop.f32.mrf.mxu0
        %v1732 = vadd.f32 %v1507, %v1731
        %v1733 = vpop.f32.mrf.mxu0
        %1734 = vmatprep.mubr.f32.mxu0 0.0
        %1735 = vmatmul.mubr.f32.gmra.mxu0 %v385
        %v1736 = vpop.f32.mrf.mxu0
        %v1737 = vadd.f32 %v1512, %v1736
        %v1738 = vpop.f32.mrf.mxu0
        %1739 = vmatprep.mubr.f32.mxu0 0.0
        %1740 = vmatmul.mubr.f32.gmra.mxu0 %v387
        %v1741 = vpop.f32.mrf.mxu0
        %v1742 = vadd.f32 %v1517, %v1741
        %v1743 = vpop.f32.mrf.mxu0
        %1744 = vmatprep.mubr.f32.mxu0 0.0
        %1745 = vmatmul.mubr.f32.gmra.mxu0 %v388
        %v1746 = vpop.f32.mrf.mxu0
        %v1747 = vadd.f32 %v1522, %v1746
        %v1748 = vpop.f32.mrf.mxu0
        %1749 = vmatprep.mubr.f32.mxu0 0.0
        %1750 = vmatmul.mubr.f32.gmra.mxu0 %v390
        %v1751 = vpop.f32.mrf.mxu0
        %v1752 = vadd.f32 %v1527, %v1751
        %v1753 = vpop.f32.mrf.mxu0
        %1754 = vmatprep.mubr.f32.mxu0 0.0
        %1755 = vmatmul.mubr.f32.gmra.mxu0 %v391
        %v1756 = vpop.f32.mrf.mxu0
        %v1757 = vadd.f32 %v1532, %v1756
        %v1758 = vpop.f32.mrf.mxu0
        %1759 = vmatprep.mubr.f32.mxu0 0.0
        %1760 = vmatmul.mubr.f32.gmra.mxu0 %v393
        %v1761 = vpop.f32.mrf.mxu0
        %v1762 = vadd.f32 %v1537, %v1761
        %v1763 = vpop.f32.mrf.mxu0
        %1764 = vmatprep.mubr.f32.mxu0 0.0
        %1765 = vmatmul.mubr.f32.gmra.mxu0 %v394
        %v1766 = vpop.f32.mrf.mxu0
        %v1767 = vadd.f32 %v1542, %v1766
        %v1768 = vpop.f32.mrf.mxu0
        %1769 = vmatprep.mubr.f32.mxu0 0.0
        %1770 = vmatmul.mubr.f32.gmra.mxu0 %v396
        %v1771 = vpop.f32.mrf.mxu0
        %v1772 = vadd.f32 %v1547, %v1771
        %v1773 = vpop.f32.mrf.mxu0
        %1774 = vmatprep.mubr.f32.mxu0 0.0
        %1775 = vmatmul.mubr.f32.gmra.mxu0 %v397
        %v1776 = vpop.f32.mrf.mxu0
        %v1777 = vadd.f32 %v1552, %v1776
        %v1778 = vpop.f32.mrf.mxu0
        %1779 = vmatprep.mubr.f32.mxu0 0.0
        %1780 = vmatmul.mubr.f32.gmra.mxu0 %v399
        %v1781 = vpop.f32.mrf.mxu0
        %v1782 = vadd.f32 %v1557, %v1781
        %v1783 = vpop.f32.mrf.mxu0
        %1784 = vmatprep.mubr.f32.mxu0 0.0
        %1785 = vmatmul.mubr.f32.gmra.mxu0 %v400
        %v1786 = vpop.f32.mrf.mxu0
        %v1787 = vadd.f32 %v1562, %v1786
        %v1788 = vpop.f32.mrf.mxu0
        %1789 = vmatprep.mubr.f32.mxu0 0.0
        %1790 = vmatmul.mubr.f32.gmra.mxu0 %v402
        %v1791 = vpop.f32.mrf.mxu0
        %v1792 = vadd.f32 %v1567, %v1791
        %v1793 = vpop.f32.mrf.mxu0
        %1794 = vmatprep.mubr.f32.mxu0 0.0
        %1795 = vmatmul.mubr.f32.gmra.mxu0 %v403
        %v1796 = vpop.f32.mrf.mxu0
        %v1797 = vadd.f32 %v1572, %v1796
        %v1798 = vpop.f32.mrf.mxu0
        %1799 = vmatprep.mubr.f32.mxu0 0.0
        %1800 = vmatmul.mubr.f32.gmra.mxu0 %v405
        %v1801 = vpop.f32.mrf.mxu0
        %v1802 = vadd.f32 %v1577, %v1801
        %v1803 = vpop.f32.mrf.mxu0
        %1804 = vmatprep.mubr.f32.mxu0 0.0
        %1805 = vmatmul.mubr.f32.gmra.mxu0 %v406
        %v1806 = vpop.f32.mrf.mxu0
        %v1807 = vadd.f32 %v1582, %v1806
        %v1808 = vpop.f32.mrf.mxu0
        %1809 = vmatprep.mubr.f32.mxu0 0.0
        %1810 = vmatmul.mubr.f32.gmra.mxu0 %v408
        %v1811 = vpop.f32.mrf.mxu0
        %v1812 = vadd.f32 %v1587, %v1811
        %v1813 = vpop.f32.mrf.mxu0
        %1814 = vmatprep.mubr.f32.mxu0 0.0
        %1815 = vmatmul.mubr.f32.gmra.mxu0 %v409
        %v1816 = vpop.f32.mrf.mxu0
        %v1817 = vadd.f32 %v1592, %v1816
        %v1818 = vpop.f32.mrf.mxu0
        %1819 = vmatprep.mubr.f32.mxu0 0.0
        %1820 = vmatmul.mubr.f32.gmra.mxu0 %v411
        %v1821 = vpop.f32.mrf.mxu0
        %v1822 = vadd.f32 %v1597, %v1821
        %v1823 = vpop.f32.mrf.mxu0
        %1824 = vmatprep.mubr.f32.mxu0 0.0
        %1825 = vmatmul.mubr.f32.gmra.mxu0 %v412
        %v1826 = vpop.f32.mrf.mxu0
        %v1827 = vadd.f32 %v1602, %v1826
        %v1828 = vpop.f32.mrf.mxu0
        %1829 = vmatprep.mubr.f32.mxu0 0.0
        %1830 = vmatmul.mubr.f32.gmra.mxu0 %v414
        %v1831 = vpop.f32.mrf.mxu0
        %v1832 = vadd.f32 %v1607, %v1831
        %v1833 = vpop.f32.mrf.mxu0
        %1834 = vmatprep.mubr.f32.mxu0 0.0
        %1835 = vmatmul.mubr.f32.gmra.mxu0 %v415
        %v1836 = vpop.f32.mrf.mxu0
        %v1837 = vadd.f32 %v1612, %v1836
        %v1838 = vpop.f32.mrf.mxu0
        %1839 = vmatprep.mubr.f32.mxu0 0.0
        %1840 = vmatmul.mubr.f32.gmra.mxu0 %v417
        %v1841 = vpop.f32.mrf.mxu0
        %v1842 = vadd.f32 %v1617, %v1841
        %v1843 = vpop.f32.mrf.mxu0
        %1844 = vmatprep.mubr.f32.mxu0 0.0
        %1845 = vmatmul.mubr.f32.gmra.mxu0 %v418
        %v1846 = vpop.f32.mrf.mxu0
        %v1847 = vadd.f32 %v1622, %v1846
        %v1848 = vpop.f32.mrf.mxu0
        %1849 = vmatprep.mubr.f32.mxu0 0.0
        %1850 = vmatmul.mubr.f32.gmra.mxu0 %v420
        %v1851 = vpop.f32.mrf.mxu0
        %v1852 = vadd.f32 %v1627, %v1851
        %v1853 = vpop.f32.mrf.mxu0
        %1854 = vmatprep.mubr.f32.mxu0 0.0
        %1855 = vmatmul.mubr.f32.gmra.mxu0 %v421
        %v1856 = vpop.f32.mrf.mxu0
        %v1857 = vadd.f32 %v1632, %v1856
        %v1858 = vpop.f32.mrf.mxu0
        %1859 = vmatprep.mubr.f32.mxu0 0.0
        %1860 = vmatmul.mubr.f32.gmra.mxu0 %v423
        %v1861 = vpop.f32.mrf.mxu0
        %v1862 = vadd.f32 %v1637, %v1861
        %v1863 = vpop.f32.mrf.mxu0
        %1864 = vmatprep.mubr.f32.mxu0 0.0
        %1865 = vmatmul.mubr.f32.gmra.mxu0 %v424
        %v1866 = vpop.f32.mrf.mxu0
        %v1867 = vadd.f32 %v1642, %v1866
        %v1868 = vpop.f32.mrf.mxu0
        %1869 = vdwg.mxu0
        %v1870 = vrot.slane %v423, 2
        %v1871 = vrot.slane %v424, 2
        %v1872 = vsel %vm1040, %v1870, %v1871
        %v1873 = vrot.slane %v425, 2
        %v1874 = vsel %vm1040, %v1871, %v1873
        %1877 = vmatprep.subr.mxu0 0.0
        %1878 = vmatpush1.msra.mxu0 %v326
        %1879 = vmatprep.subr.mxu0 0.0
        %1880 = vmatpush1.msra.mxu0 %v325
        %1881 = vmatprep.subr.mxu0 0.0
        %1882 = vmatpush1.msra.mxu0 %v324
        %1883 = vmatprep.subr.mxu0 0.0
        %1884 = vmatpush1.msra.mxu0 %v323
        %1885 = vmatprep.subr.mxu0 0.0
        %1886 = vmatpush1.msra.mxu0 %v322
        %1887 = vmatprep.subr.mxu0 0.0
        %1888 = vmatpush1.msra.mxu0 %v321
        %1889 = vmatprep.subr.mxu0 0.0
        %1890 = vmatpush1.msra.mxu0 %v320
        %1891 = vmatprep.subr.mxu0 0.0
        %1892 = vmatpush1.msra.mxu0 %v319
        %1893 = vmatprep.subr.mxu0 0.0
        %1894 = vmatpush1.msra.mxu0 %v318
        %1895 = vmatprep.subr.mxu0 0.0
        %1896 = vmatpush1.msra.mxu0 %v317
        %1897 = vmatprep.subr.mxu0 0.0
        %1898 = vmatpush1.msra.mxu0 %v316
        %1899 = vmatprep.subr.mxu0 0.0
        %1900 = vmatpush1.msra.mxu0 %v315
        %1901 = vmatprep.subr.mxu0 0.0
        %1902 = vmatpush1.msra.mxu0 %v314
        %1903 = vmatprep.subr.mxu0 0.0
        %1904 = vmatpush1.msra.mxu0 %v313
        %1905 = vmatprep.subr.mxu0 0.0
        %1906 = vmatpush1.msra.mxu0 %v312
        %1907 = vmatprep.subr.mxu0 0.0
        %1908 = vmatpush1.msra.mxu0 %v311
        %1909 = vmatprep.subr.mxu0 0.0
        %1910 = vmatpush2.msra.mxu0 0.0
        %1911 = vmatprep.subr.mxu0 0.0
        %1912 = vmatpush2.msra.mxu0 0.0
        %1913 = vmatprep.subr.mxu0 0.0
        %1914 = vmatpush2.msra.mxu0 0.0
        %1915 = vmatprep.subr.mxu0 0.0
        %1916 = vmatpush2.msra.mxu0 0.0
        %1917 = vmatprep.subr.mxu0 0.0
        %1918 = vmatpush2.msra.mxu0 0.0
        %1919 = vmatprep.subr.mxu0 0.0
        %1920 = vmatpush2.msra.mxu0 0.0
        %1921 = vmatprep.subr.mxu0 0.0
        %1922 = vmatpush2.msra.mxu0 0.0
        %1923 = vmatprep.subr.mxu0 0.0
        %1924 = vmatpush2.msra.mxu0 0.0
        %1925 = vmatprep.subr.mxu0 0.0
        %1926 = vmatpush2.msra.mxu0 0.0
        %1927 = vmatprep.subr.mxu0 0.0
        %1928 = vmatpush2.msra.mxu0 0.0
        %1929 = vmatprep.subr.mxu0 0.0
        %1930 = vmatpush2.msra.mxu0 0.0
        %1931 = vmatprep.subr.mxu0 0.0
        %1932 = vmatpush2.msra.mxu0 0.0
        %1933 = vmatprep.subr.mxu0 0.0
        %1934 = vmatpush2.msra.mxu0 0.0
        %1935 = vmatprep.subr.mxu0 0.0
        %1936 = vmatpush2.msra.mxu0 0.0
        %1937 = vmatprep.subr.mxu0 0.0
        %1938 = vmatpush2.msra.mxu0 0.0
        %1939 = vmatprep.subr.mxu0 0.0
        %1940 = vmatpush2.msra.mxu0 0.0
        %1941 = vmatprep.mubr.f32.mxu0 0.0
        %1942 = vmatmul.mubr.f32.gmra.mxu0 %v1048
        %v1943 = vpop.f32.mrf.mxu0
        %v1944 = vadd.f32 0.0, %v1943
        %v1945 = vpop.f32.mrf.mxu0
        %1946 = vmatprep.mubr.f32.mxu0 0.0
        %1947 = vmatmul.mubr.f32.gmra.mxu0 %v1050
        %v1948 = vpop.f32.mrf.mxu0
        %v1949 = vadd.f32 0.0, %v1948
        %v1950 = vpop.f32.mrf.mxu0
        %1951 = vmatprep.mubr.f32.mxu0 0.0
        %1952 = vmatmul.mubr.f32.gmra.mxu0 %v1053
        %v1953 = vpop.f32.mrf.mxu0
        %v1954 = vadd.f32 0.0, %v1953
        %v1955 = vpop.f32.mrf.mxu0
        %1956 = vmatprep.mubr.f32.mxu0 0.0
        %1957 = vmatmul.mubr.f32.gmra.mxu0 %v1055
        %v1958 = vpop.f32.mrf.mxu0
        %v1959 = vadd.f32 0.0, %v1958
        %v1960 = vpop.f32.mrf.mxu0
        %1961 = vmatprep.mubr.f32.mxu0 0.0
        %1962 = vmatmul.mubr.f32.gmra.mxu0 %v1058
        %v1963 = vpop.f32.mrf.mxu0
        %v1964 = vadd.f32 0.0, %v1963
        %v1965 = vpop.f32.mrf.mxu0
        %1966 = vmatprep.mubr.f32.mxu0 0.0
        %1967 = vmatmul.mubr.f32.gmra.mxu0 %v1060
        %v1968 = vpop.f32.mrf.mxu0
        %v1969 = vadd.f32 0.0, %v1968
        %v1970 = vpop.f32.mrf.mxu0
        %1971 = vmatprep.mubr.f32.mxu0 0.0
        %1972 = vmatmul.mubr.f32.gmra.mxu0 %v1063
        %v1973 = vpop.f32.mrf.mxu0
        %v1974 = vadd.f32 0.0, %v1973
        %v1975 = vpop.f32.mrf.mxu0
        %1976 = vmatprep.mubr.f32.mxu0 0.0
        %1977 = vmatmul.mubr.f32.gmra.mxu0 %v1065
        %v1978 = vpop.f32.mrf.mxu0
        %v1979 = vadd.f32 0.0, %v1978
        %v1980 = vpop.f32.mrf.mxu0
        %1981 = vmatprep.mubr.f32.mxu0 0.0
        %1982 = vmatmul.mubr.f32.gmra.mxu0 %v1068
        %v1983 = vpop.f32.mrf.mxu0
        %v1984 = vadd.f32 0.0, %v1983
        %v1985 = vpop.f32.mrf.mxu0
        %1986 = vmatprep.mubr.f32.mxu0 0.0
        %1987 = vmatmul.mubr.f32.gmra.mxu0 %v1070
        %v1988 = vpop.f32.mrf.mxu0
        %v1989 = vadd.f32 0.0, %v1988
        %v1990 = vpop.f32.mrf.mxu0
        %1991 = vmatprep.mubr.f32.mxu0 0.0
        %1992 = vmatmul.mubr.f32.gmra.mxu0 %v1073
        %v1993 = vpop.f32.mrf.mxu0
        %v1994 = vadd.f32 0.0, %v1993
        %v1995 = vpop.f32.mrf.mxu0
        %1996 = vmatprep.mubr.f32.mxu0 0.0
        %1997 = vmatmul.mubr.f32.gmra.mxu0 %v1075
        %v1998 = vpop.f32.mrf.mxu0
        %v1999 = vadd.f32 0.0, %v1998
        %v2000 = vpop.f32.mrf.mxu0
        %2001 = vmatprep.mubr.f32.mxu0 0.0
        %2002 = vmatmul.mubr.f32.gmra.mxu0 %v1078
        %v2003 = vpop.f32.mrf.mxu0
        %v2004 = vadd.f32 0.0, %v2003
        %v2005 = vpop.f32.mrf.mxu0
        %2006 = vmatprep.mubr.f32.mxu0 0.0
        %2007 = vmatmul.mubr.f32.gmra.mxu0 %v1080
        %v2008 = vpop.f32.mrf.mxu0
        %v2009 = vadd.f32 0.0, %v2008
        %v2010 = vpop.f32.mrf.mxu0
        %2011 = vmatprep.mubr.f32.mxu0 0.0
        %2012 = vmatmul.mubr.f32.gmra.mxu0 %v1083
        %v2013 = vpop.f32.mrf.mxu0
        %v2014 = vadd.f32 0.0, %v2013
        %v2015 = vpop.f32.mrf.mxu0
        %2016 = vmatprep.mubr.f32.mxu0 0.0
        %2017 = vmatmul.mubr.f32.gmra.mxu0 %v1085
        %v2018 = vpop.f32.mrf.mxu0
        %v2019 = vadd.f32 0.0, %v2018
        %v2020 = vpop.f32.mrf.mxu0
        %2021 = vmatprep.mubr.f32.mxu0 0.0
        %2022 = vmatmul.mubr.f32.gmra.mxu0 %v1088
        %v2023 = vpop.f32.mrf.mxu0
        %v2024 = vadd.f32 0.0, %v2023
        %v2025 = vpop.f32.mrf.mxu0
        %2026 = vmatprep.mubr.f32.mxu0 0.0
        %2027 = vmatmul.mubr.f32.gmra.mxu0 %v1090
        %v2028 = vpop.f32.mrf.mxu0
        %v2029 = vadd.f32 0.0, %v2028
        %v2030 = vpop.f32.mrf.mxu0
        %2031 = vmatprep.mubr.f32.mxu0 0.0
        %2032 = vmatmul.mubr.f32.gmra.mxu0 %v1093
        %v2033 = vpop.f32.mrf.mxu0
        %v2034 = vadd.f32 0.0, %v2033
        %v2035 = vpop.f32.mrf.mxu0
        %2036 = vmatprep.mubr.f32.mxu0 0.0
        %2037 = vmatmul.mubr.f32.gmra.mxu0 %v1095
        %v2038 = vpop.f32.mrf.mxu0
        %v2039 = vadd.f32 0.0, %v2038
        %v2040 = vpop.f32.mrf.mxu0
        %2041 = vmatprep.mubr.f32.mxu0 0.0
        %2042 = vmatmul.mubr.f32.gmra.mxu0 %v1098
        %v2043 = vpop.f32.mrf.mxu0
        %v2044 = vadd.f32 0.0, %v2043
        %v2045 = vpop.f32.mrf.mxu0
        %2046 = vmatprep.mubr.f32.mxu0 0.0
        %2047 = vmatmul.mubr.f32.gmra.mxu0 %v1100
        %v2048 = vpop.f32.mrf.mxu0
        %v2049 = vadd.f32 0.0, %v2048
        %v2050 = vpop.f32.mrf.mxu0
        %2051 = vmatprep.mubr.f32.mxu0 0.0
        %2052 = vmatmul.mubr.f32.gmra.mxu0 %v1103
        %v2053 = vpop.f32.mrf.mxu0
        %v2054 = vadd.f32 0.0, %v2053
        %v2055 = vpop.f32.mrf.mxu0
        %2056 = vmatprep.mubr.f32.mxu0 0.0
        %2057 = vmatmul.mubr.f32.gmra.mxu0 %v1105
        %v2058 = vpop.f32.mrf.mxu0
        %v2059 = vadd.f32 0.0, %v2058
        %v2060 = vpop.f32.mrf.mxu0
        %2061 = vmatprep.mubr.f32.mxu0 0.0
        %2062 = vmatmul.mubr.f32.gmra.mxu0 %v1108
        %v2063 = vpop.f32.mrf.mxu0
        %v2064 = vadd.f32 0.0, %v2063
        %v2065 = vpop.f32.mrf.mxu0
        %2066 = vmatprep.mubr.f32.mxu0 0.0
        %2067 = vmatmul.mubr.f32.gmra.mxu0 %v1110
        %v2068 = vpop.f32.mrf.mxu0
        %v2069 = vadd.f32 0.0, %v2068
        %v2070 = vpop.f32.mrf.mxu0
        %2071 = vmatprep.mubr.f32.mxu0 0.0
        %2072 = vmatmul.mubr.f32.gmra.mxu0 %v1113
        %v2073 = vpop.f32.mrf.mxu0
        %v2074 = vadd.f32 0.0, %v2073
        %v2075 = vpop.f32.mrf.mxu0
        %2076 = vmatprep.mubr.f32.mxu0 0.0
        %2077 = vmatmul.mubr.f32.gmra.mxu0 %v1115
        %v2078 = vpop.f32.mrf.mxu0
        %v2079 = vadd.f32 0.0, %v2078
        %v2080 = vpop.f32.mrf.mxu0
        %2081 = vmatprep.mubr.f32.mxu0 0.0
        %2082 = vmatmul.mubr.f32.gmra.mxu0 %v1118
        %v2083 = vpop.f32.mrf.mxu0
        %v2084 = vadd.f32 0.0, %v2083
        %v2085 = vpop.f32.mrf.mxu0
        %2086 = vmatprep.mubr.f32.mxu0 0.0
        %2087 = vmatmul.mubr.f32.gmra.mxu0 %v1120
        %v2088 = vpop.f32.mrf.mxu0
        %v2089 = vadd.f32 0.0, %v2088
        %v2090 = vpop.f32.mrf.mxu0
        %2091 = vmatprep.mubr.f32.mxu0 0.0
        %2092 = vmatmul.mubr.f32.gmra.mxu0 %v1872
        %v2093 = vpop.f32.mrf.mxu0
        %v2094 = vadd.f32 0.0, %v2093
        %v2095 = vpop.f32.mrf.mxu0
        %2096 = vmatprep.mubr.f32.mxu0 0.0
        %2097 = vmatmul.mubr.f32.gmra.mxu0 %v1874
        %v2098 = vpop.f32.mrf.mxu0
        %v2099 = vadd.f32 0.0, %v2098
        %v2100 = vpop.f32.mrf.mxu0
        %2101 = vdwg.mxu0
        %v2102 = vadd.f32 %v1712, %v1944
        %v2103 = vadd.f32 %v1717, %v1949
        %v2104 = vadd.f32 %v1722, %v1954
        %v2105 = vadd.f32 %v1727, %v1959
        %v2106 = vadd.f32 %v1732, %v1964
        %v2107 = vadd.f32 %v1737, %v1969
        %v2108 = vadd.f32 %v1742, %v1974
        %v2109 = vadd.f32 %v1747, %v1979
        %v2110 = vadd.f32 %v1752, %v1984
        %v2111 = vadd.f32 %v1757, %v1989
        %v2112 = vadd.f32 %v1762, %v1994
        %v2113 = vadd.f32 %v1767, %v1999
        %v2114 = vadd.f32 %v1772, %v2004
        %v2115 = vadd.f32 %v1777, %v2009
        %v2116 = vadd.f32 %v1782, %v2014
        %v2117 = vadd.f32 %v1787, %v2019
        %v2118 = vadd.f32 %v1792, %v2024
        %v2119 = vadd.f32 %v1797, %v2029
        %v2120 = vadd.f32 %v1802, %v2034
        %v2121 = vadd.f32 %v1807, %v2039
        %v2122 = vadd.f32 %v1812, %v2044
        %v2123 = vadd.f32 %v1817, %v2049
        %v2124 = vadd.f32 %v1822, %v2054
        %v2125 = vadd.f32 %v1827, %v2059
        %v2126 = vadd.f32 %v1832, %v2064
        %v2127 = vadd.f32 %v1837, %v2069
        %v2128 = vadd.f32 %v1842, %v2074
        %v2129 = vadd.f32 %v1847, %v2079
        %v2130 = vadd.f32 %v1852, %v2084
        %v2131 = vadd.f32 %v1857, %v2089
        %v2132 = vadd.f32 %v1862, %v2094
        %v2133 = vadd.f32 %v1867, %v2099
        %v2137 = vrot.slane %v426, 1
        %v2138 = vrot.slane %v427, 1
        %v2139 = vsel %vm477, %v2137, %v2138
        %v2140 = vrot.slane %v428, 1
        %v2141 = vsel %vm477, %v2138, %v2140
        %2144 = vmatprep.subr.mxu0 0.0
        %2145 = vmatpush1.msra.mxu0 %v358
        %2146 = vmatprep.subr.mxu0 0.0
        %2147 = vmatpush1.msra.mxu0 %v357
        %2148 = vmatprep.subr.mxu0 0.0
        %2149 = vmatpush1.msra.mxu0 %v356
        %2150 = vmatprep.subr.mxu0 0.0
        %2151 = vmatpush1.msra.mxu0 %v355
        %2152 = vmatprep.subr.mxu0 0.0
        %2153 = vmatpush1.msra.mxu0 %v354
        %2154 = vmatprep.subr.mxu0 0.0
        %2155 = vmatpush1.msra.mxu0 %v353
        %2156 = vmatprep.subr.mxu0 0.0
        %2157 = vmatpush1.msra.mxu0 %v352
        %2158 = vmatprep.subr.mxu0 0.0
        %2159 = vmatpush1.msra.mxu0 %v351
        %2160 = vmatprep.subr.mxu0 0.0
        %2161 = vmatpush1.msra.mxu0 %v350
        %2162 = vmatprep.subr.mxu0 0.0
        %2163 = vmatpush1.msra.mxu0 %v349
        %2164 = vmatprep.subr.mxu0 0.0
        %2165 = vmatpush1.msra.mxu0 %v348
        %2166 = vmatprep.subr.mxu0 0.0
        %2167 = vmatpush1.msra.mxu0 %v347
        %2168 = vmatprep.subr.mxu0 0.0
        %2169 = vmatpush1.msra.mxu0 %v346
        %2170 = vmatprep.subr.mxu0 0.0
        %2171 = vmatpush1.msra.mxu0 %v345
        %2172 = vmatprep.subr.mxu0 0.0
        %2173 = vmatpush1.msra.mxu0 %v344
        %2174 = vmatprep.subr.mxu0 0.0
        %2175 = vmatpush1.msra.mxu0 %v343
        %2176 = vmatprep.subr.mxu0 0.0
        %2177 = vmatpush2.msra.mxu0 0.0
        %2178 = vmatprep.subr.mxu0 0.0
        %2179 = vmatpush2.msra.mxu0 0.0
        %2180 = vmatprep.subr.mxu0 0.0
        %2181 = vmatpush2.msra.mxu0 0.0
        %2182 = vmatprep.subr.mxu0 0.0
        %2183 = vmatpush2.msra.mxu0 0.0
        %2184 = vmatprep.subr.mxu0 0.0
        %2185 = vmatpush2.msra.mxu0 0.0
        %2186 = vmatprep.subr.mxu0 0.0
        %2187 = vmatpush2.msra.mxu0 0.0
        %2188 = vmatprep.subr.mxu0 0.0
        %2189 = vmatpush2.msra.mxu0 0.0
        %2190 = vmatprep.subr.mxu0 0.0
        %2191 = vmatpush2.msra.mxu0 0.0
        %2192 = vmatprep.subr.mxu0 0.0
        %2193 = vmatpush2.msra.mxu0 0.0
        %2194 = vmatprep.subr.mxu0 0.0
        %2195 = vmatpush2.msra.mxu0 0.0
        %2196 = vmatprep.subr.mxu0 0.0
        %2197 = vmatpush2.msra.mxu0 0.0
        %2198 = vmatprep.subr.mxu0 0.0
        %2199 = vmatpush2.msra.mxu0 0.0
        %2200 = vmatprep.subr.mxu0 0.0
        %2201 = vmatpush2.msra.mxu0 0.0
        %2202 = vmatprep.subr.mxu0 0.0
        %2203 = vmatpush2.msra.mxu0 0.0
        %2204 = vmatprep.subr.mxu0 0.0
        %2205 = vmatpush2.msra.mxu0 0.0
        %2206 = vmatprep.subr.mxu0 0.0
        %2207 = vmatpush2.msra.mxu0 0.0
        %2208 = vmatprep.mubr.f32.mxu0 0.0
        %2209 = vmatmul.mubr.f32.gmra.mxu0 %v490
        %v2210 = vpop.f32.mrf.mxu0
        %v2211 = vadd.f32 0.0, %v2210
        %v2212 = vpop.f32.mrf.mxu0
        %2213 = vmatprep.mubr.f32.mxu0 0.0
        %2214 = vmatmul.mubr.f32.gmra.mxu0 %v492
        %v2215 = vpop.f32.mrf.mxu0
        %v2216 = vadd.f32 0.0, %v2215
        %v2217 = vpop.f32.mrf.mxu0
        %2218 = vmatprep.mubr.f32.mxu0 0.0
        %2219 = vmatmul.mubr.f32.gmra.mxu0 %v495
        %v2220 = vpop.f32.mrf.mxu0
        %v2221 = vadd.f32 0.0, %v2220
        %v2222 = vpop.f32.mrf.mxu0
        %2223 = vmatprep.mubr.f32.mxu0 0.0
        %2224 = vmatmul.mubr.f32.gmra.mxu0 %v497
        %v2225 = vpop.f32.mrf.mxu0
        %v2226 = vadd.f32 0.0, %v2225
        %v2227 = vpop.f32.mrf.mxu0
        %2228 = vmatprep.mubr.f32.mxu0 0.0
        %2229 = vmatmul.mubr.f32.gmra.mxu0 %v500
        %v2230 = vpop.f32.mrf.mxu0
        %v2231 = vadd.f32 0.0, %v2230
        %v2232 = vpop.f32.mrf.mxu0
        %2233 = vmatprep.mubr.f32.mxu0 0.0
        %2234 = vmatmul.mubr.f32.gmra.mxu0 %v502
        %v2235 = vpop.f32.mrf.mxu0
        %v2236 = vadd.f32 0.0, %v2235
        %v2237 = vpop.f32.mrf.mxu0
        %2238 = vmatprep.mubr.f32.mxu0 0.0
        %2239 = vmatmul.mubr.f32.gmra.mxu0 %v505
        %v2240 = vpop.f32.mrf.mxu0
        %v2241 = vadd.f32 0.0, %v2240
        %v2242 = vpop.f32.mrf.mxu0
        %2243 = vmatprep.mubr.f32.mxu0 0.0
        %2244 = vmatmul.mubr.f32.gmra.mxu0 %v507
        %v2245 = vpop.f32.mrf.mxu0
        %v2246 = vadd.f32 0.0, %v2245
        %v2247 = vpop.f32.mrf.mxu0
        %2248 = vmatprep.mubr.f32.mxu0 0.0
        %2249 = vmatmul.mubr.f32.gmra.mxu0 %v510
        %v2250 = vpop.f32.mrf.mxu0
        %v2251 = vadd.f32 0.0, %v2250
        %v2252 = vpop.f32.mrf.mxu0
        %2253 = vmatprep.mubr.f32.mxu0 0.0
        %2254 = vmatmul.mubr.f32.gmra.mxu0 %v512
        %v2255 = vpop.f32.mrf.mxu0
        %v2256 = vadd.f32 0.0, %v2255
        %v2257 = vpop.f32.mrf.mxu0
        %2258 = vmatprep.mubr.f32.mxu0 0.0
        %2259 = vmatmul.mubr.f32.gmra.mxu0 %v515
        %v2260 = vpop.f32.mrf.mxu0
        %v2261 = vadd.f32 0.0, %v2260
        %v2262 = vpop.f32.mrf.mxu0
        %2263 = vmatprep.mubr.f32.mxu0 0.0
        %2264 = vmatmul.mubr.f32.gmra.mxu0 %v517
        %v2265 = vpop.f32.mrf.mxu0
        %v2266 = vadd.f32 0.0, %v2265
        %v2267 = vpop.f32.mrf.mxu0
        %2268 = vmatprep.mubr.f32.mxu0 0.0
        %2269 = vmatmul.mubr.f32.gmra.mxu0 %v520
        %v2270 = vpop.f32.mrf.mxu0
        %v2271 = vadd.f32 0.0, %v2270
        %v2272 = vpop.f32.mrf.mxu0
        %2273 = vmatprep.mubr.f32.mxu0 0.0
        %2274 = vmatmul.mubr.f32.gmra.mxu0 %v522
        %v2275 = vpop.f32.mrf.mxu0
        %v2276 = vadd.f32 0.0, %v2275
        %v2277 = vpop.f32.mrf.mxu0
        %2278 = vmatprep.mubr.f32.mxu0 0.0
        %2279 = vmatmul.mubr.f32.gmra.mxu0 %v525
        %v2280 = vpop.f32.mrf.mxu0
        %v2281 = vadd.f32 0.0, %v2280
        %v2282 = vpop.f32.mrf.mxu0
        %2283 = vmatprep.mubr.f32.mxu0 0.0
        %2284 = vmatmul.mubr.f32.gmra.mxu0 %v527
        %v2285 = vpop.f32.mrf.mxu0
        %v2286 = vadd.f32 0.0, %v2285
        %v2287 = vpop.f32.mrf.mxu0
        %2288 = vmatprep.mubr.f32.mxu0 0.0
        %2289 = vmatmul.mubr.f32.gmra.mxu0 %v530
        %v2290 = vpop.f32.mrf.mxu0
        %v2291 = vadd.f32 0.0, %v2290
        %v2292 = vpop.f32.mrf.mxu0
        %2293 = vmatprep.mubr.f32.mxu0 0.0
        %2294 = vmatmul.mubr.f32.gmra.mxu0 %v532
        %v2295 = vpop.f32.mrf.mxu0
        %v2296 = vadd.f32 0.0, %v2295
        %v2297 = vpop.f32.mrf.mxu0
        %2298 = vmatprep.mubr.f32.mxu0 0.0
        %2299 = vmatmul.mubr.f32.gmra.mxu0 %v535
        %v2300 = vpop.f32.mrf.mxu0
        %v2301 = vadd.f32 0.0, %v2300
        %v2302 = vpop.f32.mrf.mxu0
        %2303 = vmatprep.mubr.f32.mxu0 0.0
        %2304 = vmatmul.mubr.f32.gmra.mxu0 %v537
        %v2305 = vpop.f32.mrf.mxu0
        %v2306 = vadd.f32 0.0, %v2305
        %v2307 = vpop.f32.mrf.mxu0
        %2308 = vmatprep.mubr.f32.mxu0 0.0
        %2309 = vmatmul.mubr.f32.gmra.mxu0 %v540
        %v2310 = vpop.f32.mrf.mxu0
        %v2311 = vadd.f32 0.0, %v2310
        %v2312 = vpop.f32.mrf.mxu0
        %2313 = vmatprep.mubr.f32.mxu0 0.0
        %2314 = vmatmul.mubr.f32.gmra.mxu0 %v542
        %v2315 = vpop.f32.mrf.mxu0
        %v2316 = vadd.f32 0.0, %v2315
        %v2317 = vpop.f32.mrf.mxu0
        %2318 = vmatprep.mubr.f32.mxu0 0.0
        %2319 = vmatmul.mubr.f32.gmra.mxu0 %v545
        %v2320 = vpop.f32.mrf.mxu0
        %v2321 = vadd.f32 0.0, %v2320
        %v2322 = vpop.f32.mrf.mxu0
        %2323 = vmatprep.mubr.f32.mxu0 0.0
        %2324 = vmatmul.mubr.f32.gmra.mxu0 %v547
        %v2325 = vpop.f32.mrf.mxu0
        %v2326 = vadd.f32 0.0, %v2325
        %v2327 = vpop.f32.mrf.mxu0
        %2328 = vmatprep.mubr.f32.mxu0 0.0
        %2329 = vmatmul.mubr.f32.gmra.mxu0 %v550
        %v2330 = vpop.f32.mrf.mxu0
        %v2331 = vadd.f32 0.0, %v2330
        %v2332 = vpop.f32.mrf.mxu0
        %2333 = vmatprep.mubr.f32.mxu0 0.0
        %2334 = vmatmul.mubr.f32.gmra.mxu0 %v552
        %v2335 = vpop.f32.mrf.mxu0
        %v2336 = vadd.f32 0.0, %v2335
        %v2337 = vpop.f32.mrf.mxu0
        %2338 = vmatprep.mubr.f32.mxu0 0.0
        %2339 = vmatmul.mubr.f32.gmra.mxu0 %v555
        %v2340 = vpop.f32.mrf.mxu0
        %v2341 = vadd.f32 0.0, %v2340
        %v2342 = vpop.f32.mrf.mxu0
        %2343 = vmatprep.mubr.f32.mxu0 0.0
        %2344 = vmatmul.mubr.f32.gmra.mxu0 %v557
        %v2345 = vpop.f32.mrf.mxu0
        %v2346 = vadd.f32 0.0, %v2345
        %v2347 = vpop.f32.mrf.mxu0
        %2348 = vmatprep.mubr.f32.mxu0 0.0
        %2349 = vmatmul.mubr.f32.gmra.mxu0 %v1415
        %v2350 = vpop.f32.mrf.mxu0
        %v2351 = vadd.f32 0.0, %v2350
        %v2352 = vpop.f32.mrf.mxu0
        %2353 = vmatprep.mubr.f32.mxu0 0.0
        %2354 = vmatmul.mubr.f32.gmra.mxu0 %v1417
        %v2355 = vpop.f32.mrf.mxu0
        %v2356 = vadd.f32 0.0, %v2355
        %v2357 = vpop.f32.mrf.mxu0
        %2358 = vmatprep.mubr.f32.mxu0 0.0
        %2359 = vmatmul.mubr.f32.gmra.mxu0 %v2139
        %v2360 = vpop.f32.mrf.mxu0
        %v2361 = vadd.f32 0.0, %v2360
        %v2362 = vpop.f32.mrf.mxu0
        %2363 = vmatprep.mubr.f32.mxu0 0.0
        %2364 = vmatmul.mubr.f32.gmra.mxu0 %v2141
        %v2365 = vpop.f32.mrf.mxu0
        %v2366 = vadd.f32 0.0, %v2365
        %v2367 = vpop.f32.mrf.mxu0
        %2368 = vdwg.mxu0
        %2369 = vmatprep.subr.mxu0 0.0
        %2370 = vmatpush1.msra.mxu0 %v342
        %2371 = vmatprep.subr.mxu0 0.0
        %2372 = vmatpush1.msra.mxu0 %v341
        %2373 = vmatprep.subr.mxu0 0.0
        %2374 = vmatpush1.msra.mxu0 %v340
        %2375 = vmatprep.subr.mxu0 0.0
        %2376 = vmatpush1.msra.mxu0 %v339
        %2377 = vmatprep.subr.mxu0 0.0
        %2378 = vmatpush1.msra.mxu0 %v338
        %2379 = vmatprep.subr.mxu0 0.0
        %2380 = vmatpush1.msra.mxu0 %v337
        %2381 = vmatprep.subr.mxu0 0.0
        %2382 = vmatpush1.msra.mxu0 %v336
        %2383 = vmatprep.subr.mxu0 0.0
        %2384 = vmatpush1.msra.mxu0 %v335
        %2385 = vmatprep.subr.mxu0 0.0
        %2386 = vmatpush1.msra.mxu0 %v334
        %2387 = vmatprep.subr.mxu0 0.0
        %2388 = vmatpush1.msra.mxu0 %v333
        %2389 = vmatprep.subr.mxu0 0.0
        %2390 = vmatpush1.msra.mxu0 %v332
        %2391 = vmatprep.subr.mxu0 0.0
        %2392 = vmatpush1.msra.mxu0 %v331
        %2393 = vmatprep.subr.mxu0 0.0
        %2394 = vmatpush1.msra.mxu0 %v330
        %2395 = vmatprep.subr.mxu0 0.0
        %2396 = vmatpush1.msra.mxu0 %v329
        %2397 = vmatprep.subr.mxu0 0.0
        %2398 = vmatpush1.msra.mxu0 %v328
        %2399 = vmatprep.subr.mxu0 0.0
        %2400 = vmatpush1.msra.mxu0 %v327
        %2401 = vmatprep.subr.mxu0 0.0
        %2402 = vmatpush2.msra.mxu0 0.0
        %2403 = vmatprep.subr.mxu0 0.0
        %2404 = vmatpush2.msra.mxu0 0.0
        %2405 = vmatprep.subr.mxu0 0.0
        %2406 = vmatpush2.msra.mxu0 0.0
        %2407 = vmatprep.subr.mxu0 0.0
        %2408 = vmatpush2.msra.mxu0 0.0
        %2409 = vmatprep.subr.mxu0 0.0
        %2410 = vmatpush2.msra.mxu0 0.0
        %2411 = vmatprep.subr.mxu0 0.0
        %2412 = vmatpush2.msra.mxu0 0.0
        %2413 = vmatprep.subr.mxu0 0.0
        %2414 = vmatpush2.msra.mxu0 0.0
        %2415 = vmatprep.subr.mxu0 0.0
        %2416 = vmatpush2.msra.mxu0 0.0
        %2417 = vmatprep.subr.mxu0 0.0
        %2418 = vmatpush2.msra.mxu0 0.0
        %2419 = vmatprep.subr.mxu0 0.0
        %2420 = vmatpush2.msra.mxu0 0.0
        %2421 = vmatprep.subr.mxu0 0.0
        %2422 = vmatpush2.msra.mxu0 0.0
        %2423 = vmatprep.subr.mxu0 0.0
        %2424 = vmatpush2.msra.mxu0 0.0
        %2425 = vmatprep.subr.mxu0 0.0
        %2426 = vmatpush2.msra.mxu0 0.0
        %2427 = vmatprep.subr.mxu0 0.0
        %2428 = vmatpush2.msra.mxu0 0.0
        %2429 = vmatprep.subr.mxu0 0.0
        %2430 = vmatpush2.msra.mxu0 0.0
        %2431 = vmatprep.subr.mxu0 0.0
        %2432 = vmatpush2.msra.mxu0 0.0
        %2433 = vmatprep.mubr.f32.mxu0 0.0
        %2434 = vmatmul.mubr.f32.gmra.mxu0 %v381
        %v2435 = vpop.f32.mrf.mxu0
        %v2436 = vadd.f32 %v2211, %v2435
        %v2437 = vpop.f32.mrf.mxu0
        %2438 = vmatprep.mubr.f32.mxu0 0.0
        %2439 = vmatmul.mubr.f32.gmra.mxu0 %v382
        %v2440 = vpop.f32.mrf.mxu0
        %v2441 = vadd.f32 %v2216, %v2440
        %v2442 = vpop.f32.mrf.mxu0
        %2443 = vmatprep.mubr.f32.mxu0 0.0
        %2444 = vmatmul.mubr.f32.gmra.mxu0 %v384
        %v2445 = vpop.f32.mrf.mxu0
        %v2446 = vadd.f32 %v2221, %v2445
        %v2447 = vpop.f32.mrf.mxu0
        %2448 = vmatprep.mubr.f32.mxu0 0.0
        %2449 = vmatmul.mubr.f32.gmra.mxu0 %v385
        %v2450 = vpop.f32.mrf.mxu0
        %v2451 = vadd.f32 %v2226, %v2450
        %v2452 = vpop.f32.mrf.mxu0
        %2453 = vmatprep.mubr.f32.mxu0 0.0
        %2454 = vmatmul.mubr.f32.gmra.mxu0 %v387
        %v2455 = vpop.f32.mrf.mxu0
        %v2456 = vadd.f32 %v2231, %v2455
        %v2457 = vpop.f32.mrf.mxu0
        %2458 = vmatprep.mubr.f32.mxu0 0.0
        %2459 = vmatmul.mubr.f32.gmra.mxu0 %v388
        %v2460 = vpop.f32.mrf.mxu0
        %v2461 = vadd.f32 %v2236, %v2460
        %v2462 = vpop.f32.mrf.mxu0
        %2463 = vmatprep.mubr.f32.mxu0 0.0
        %2464 = vmatmul.mubr.f32.gmra.mxu0 %v390
        %v2465 = vpop.f32.mrf.mxu0
        %v2466 = vadd.f32 %v2241, %v2465
        %v2467 = vpop.f32.mrf.mxu0
        %2468 = vmatprep.mubr.f32.mxu0 0.0
        %2469 = vmatmul.mubr.f32.gmra.mxu0 %v391
        %v2470 = vpop.f32.mrf.mxu0
        %v2471 = vadd.f32 %v2246, %v2470
        %v2472 = vpop.f32.mrf.mxu0
        %2473 = vmatprep.mubr.f32.mxu0 0.0
        %2474 = vmatmul.mubr.f32.gmra.mxu0 %v393
        %v2475 = vpop.f32.mrf.mxu0
        %v2476 = vadd.f32 %v2251, %v2475
        %v2477 = vpop.f32.mrf.mxu0
        %2478 = vmatprep.mubr.f32.mxu0 0.0
        %2479 = vmatmul.mubr.f32.gmra.mxu0 %v394
        %v2480 = vpop.f32.mrf.mxu0
        %v2481 = vadd.f32 %v2256, %v2480
        %v2482 = vpop.f32.mrf.mxu0
        %2483 = vmatprep.mubr.f32.mxu0 0.0
        %2484 = vmatmul.mubr.f32.gmra.mxu0 %v396
        %v2485 = vpop.f32.mrf.mxu0
        %v2486 = vadd.f32 %v2261, %v2485
        %v2487 = vpop.f32.mrf.mxu0
        %2488 = vmatprep.mubr.f32.mxu0 0.0
        %2489 = vmatmul.mubr.f32.gmra.mxu0 %v397
        %v2490 = vpop.f32.mrf.mxu0
        %v2491 = vadd.f32 %v2266, %v2490
        %v2492 = vpop.f32.mrf.mxu0
        %2493 = vmatprep.mubr.f32.mxu0 0.0
        %2494 = vmatmul.mubr.f32.gmra.mxu0 %v399
        %v2495 = vpop.f32.mrf.mxu0
        %v2496 = vadd.f32 %v2271, %v2495
        %v2497 = vpop.f32.mrf.mxu0
        %2498 = vmatprep.mubr.f32.mxu0 0.0
        %2499 = vmatmul.mubr.f32.gmra.mxu0 %v400
        %v2500 = vpop.f32.mrf.mxu0
        %v2501 = vadd.f32 %v2276, %v2500
        %v2502 = vpop.f32.mrf.mxu0
        %2503 = vmatprep.mubr.f32.mxu0 0.0
        %2504 = vmatmul.mubr.f32.gmra.mxu0 %v402
        %v2505 = vpop.f32.mrf.mxu0
        %v2506 = vadd.f32 %v2281, %v2505
        %v2507 = vpop.f32.mrf.mxu0
        %2508 = vmatprep.mubr.f32.mxu0 0.0
        %2509 = vmatmul.mubr.f32.gmra.mxu0 %v403
        %v2510 = vpop.f32.mrf.mxu0
        %v2511 = vadd.f32 %v2286, %v2510
        %v2512 = vpop.f32.mrf.mxu0
        %2513 = vmatprep.mubr.f32.mxu0 0.0
        %2514 = vmatmul.mubr.f32.gmra.mxu0 %v405
        %v2515 = vpop.f32.mrf.mxu0
        %v2516 = vadd.f32 %v2291, %v2515
        %v2517 = vpop.f32.mrf.mxu0
        %2518 = vmatprep.mubr.f32.mxu0 0.0
        %2519 = vmatmul.mubr.f32.gmra.mxu0 %v406
        %v2520 = vpop.f32.mrf.mxu0
        %v2521 = vadd.f32 %v2296, %v2520
        %v2522 = vpop.f32.mrf.mxu0
        %2523 = vmatprep.mubr.f32.mxu0 0.0
        %2524 = vmatmul.mubr.f32.gmra.mxu0 %v408
        %v2525 = vpop.f32.mrf.mxu0
        %v2526 = vadd.f32 %v2301, %v2525
        %v2527 = vpop.f32.mrf.mxu0
        %2528 = vmatprep.mubr.f32.mxu0 0.0
        %2529 = vmatmul.mubr.f32.gmra.mxu0 %v409
        %v2530 = vpop.f32.mrf.mxu0
        %v2531 = vadd.f32 %v2306, %v2530
        %v2532 = vpop.f32.mrf.mxu0
        %2533 = vmatprep.mubr.f32.mxu0 0.0
        %2534 = vmatmul.mubr.f32.gmra.mxu0 %v411
        %v2535 = vpop.f32.mrf.mxu0
        %v2536 = vadd.f32 %v2311, %v2535
        %v2537 = vpop.f32.mrf.mxu0
        %2538 = vmatprep.mubr.f32.mxu0 0.0
        %2539 = vmatmul.mubr.f32.gmra.mxu0 %v412
        %v2540 = vpop.f32.mrf.mxu0
        %v2541 = vadd.f32 %v2316, %v2540
        %v2542 = vpop.f32.mrf.mxu0
        %2543 = vmatprep.mubr.f32.mxu0 0.0
        %2544 = vmatmul.mubr.f32.gmra.mxu0 %v414
        %v2545 = vpop.f32.mrf.mxu0
        %v2546 = vadd.f32 %v2321, %v2545
        %v2547 = vpop.f32.mrf.mxu0
        %2548 = vmatprep.mubr.f32.mxu0 0.0
        %2549 = vmatmul.mubr.f32.gmra.mxu0 %v415
        %v2550 = vpop.f32.mrf.mxu0
        %v2551 = vadd.f32 %v2326, %v2550
        %v2552 = vpop.f32.mrf.mxu0
        %2553 = vmatprep.mubr.f32.mxu0 0.0
        %2554 = vmatmul.mubr.f32.gmra.mxu0 %v417
        %v2555 = vpop.f32.mrf.mxu0
        %v2556 = vadd.f32 %v2331, %v2555
        %v2557 = vpop.f32.mrf.mxu0
        %2558 = vmatprep.mubr.f32.mxu0 0.0
        %2559 = vmatmul.mubr.f32.gmra.mxu0 %v418
        %v2560 = vpop.f32.mrf.mxu0
        %v2561 = vadd.f32 %v2336, %v2560
        %v2562 = vpop.f32.mrf.mxu0
        %2563 = vmatprep.mubr.f32.mxu0 0.0
        %2564 = vmatmul.mubr.f32.gmra.mxu0 %v420
        %v2565 = vpop.f32.mrf.mxu0
        %v2566 = vadd.f32 %v2341, %v2565
        %v2567 = vpop.f32.mrf.mxu0
        %2568 = vmatprep.mubr.f32.mxu0 0.0
        %2569 = vmatmul.mubr.f32.gmra.mxu0 %v421
        %v2570 = vpop.f32.mrf.mxu0
        %v2571 = vadd.f32 %v2346, %v2570
        %v2572 = vpop.f32.mrf.mxu0
        %2573 = vmatprep.mubr.f32.mxu0 0.0
        %2574 = vmatmul.mubr.f32.gmra.mxu0 %v423
        %v2575 = vpop.f32.mrf.mxu0
        %v2576 = vadd.f32 %v2351, %v2575
        %v2577 = vpop.f32.mrf.mxu0
        %2578 = vmatprep.mubr.f32.mxu0 0.0
        %2579 = vmatmul.mubr.f32.gmra.mxu0 %v424
        %v2580 = vpop.f32.mrf.mxu0
        %v2581 = vadd.f32 %v2356, %v2580
        %v2582 = vpop.f32.mrf.mxu0
        %2583 = vmatprep.mubr.f32.mxu0 0.0
        %2584 = vmatmul.mubr.f32.gmra.mxu0 %v426
        %v2585 = vpop.f32.mrf.mxu0
        %v2586 = vadd.f32 %v2361, %v2585
        %v2587 = vpop.f32.mrf.mxu0
        %2588 = vmatprep.mubr.f32.mxu0 0.0
        %2589 = vmatmul.mubr.f32.gmra.mxu0 %v427
        %v2590 = vpop.f32.mrf.mxu0
        %v2591 = vadd.f32 %v2366, %v2590
        %v2592 = vpop.f32.mrf.mxu0
        %2593 = vdwg.mxu0
        %v2594 = vrot.slane %v426, 2
        %v2595 = vrot.slane %v427, 2
        %v2596 = vsel %vm1040, %v2594, %v2595
        %v2597 = vrot.slane %v428, 2
        %v2598 = vsel %vm1040, %v2595, %v2597
        %2601 = vmatprep.subr.mxu0 0.0
        %2602 = vmatpush1.msra.mxu0 %v374
        %2603 = vmatprep.subr.mxu0 0.0
        %2604 = vmatpush1.msra.mxu0 %v373
        %2605 = vmatprep.subr.mxu0 0.0
        %2606 = vmatpush1.msra.mxu0 %v372
        %2607 = vmatprep.subr.mxu0 0.0
        %2608 = vmatpush1.msra.mxu0 %v371
        %2609 = vmatprep.subr.mxu0 0.0
        %2610 = vmatpush1.msra.mxu0 %v370
        %2611 = vmatprep.subr.mxu0 0.0
        %2612 = vmatpush1.msra.mxu0 %v369
        %2613 = vmatprep.subr.mxu0 0.0
        %2614 = vmatpush1.msra.mxu0 %v368
        %2615 = vmatprep.subr.mxu0 0.0
        %2616 = vmatpush1.msra.mxu0 %v367
        %2617 = vmatprep.subr.mxu0 0.0
        %2618 = vmatpush1.msra.mxu0 %v366
        %2619 = vmatprep.subr.mxu0 0.0
        %2620 = vmatpush1.msra.mxu0 %v365
        %2621 = vmatprep.subr.mxu0 0.0
        %2622 = vmatpush1.msra.mxu0 %v364
        %2623 = vmatprep.subr.mxu0 0.0
        %2624 = vmatpush1.msra.mxu0 %v363
        %2625 = vmatprep.subr.mxu0 0.0
        %2626 = vmatpush1.msra.mxu0 %v362
        %2627 = vmatprep.subr.mxu0 0.0
        %2628 = vmatpush1.msra.mxu0 %v361
        %2629 = vmatprep.subr.mxu0 0.0
        %2630 = vmatpush1.msra.mxu0 %v360
        %2631 = vmatprep.subr.mxu0 0.0
        %2632 = vmatpush1.msra.mxu0 %v359
        %2633 = vmatprep.subr.mxu0 0.0
        %2634 = vmatpush2.msra.mxu0 0.0
        %2635 = vmatprep.subr.mxu0 0.0
        %2636 = vmatpush2.msra.mxu0 0.0
        %2637 = vmatprep.subr.mxu0 0.0
        %2638 = vmatpush2.msra.mxu0 0.0
        %2639 = vmatprep.subr.mxu0 0.0
        %2640 = vmatpush2.msra.mxu0 0.0
        %2641 = vmatprep.subr.mxu0 0.0
        %2642 = vmatpush2.msra.mxu0 0.0
        %2643 = vmatprep.subr.mxu0 0.0
        %2644 = vmatpush2.msra.mxu0 0.0
        %2645 = vmatprep.subr.mxu0 0.0
        %2646 = vmatpush2.msra.mxu0 0.0
        %2647 = vmatprep.subr.mxu0 0.0
        %2648 = vmatpush2.msra.mxu0 0.0
        %2649 = vmatprep.subr.mxu0 0.0
        %2650 = vmatpush2.msra.mxu0 0.0
        %2651 = vmatprep.subr.mxu0 0.0
        %2652 = vmatpush2.msra.mxu0 0.0
        %2653 = vmatprep.subr.mxu0 0.0
        %2654 = vmatpush2.msra.mxu0 0.0
        %2655 = vmatprep.subr.mxu0 0.0
        %2656 = vmatpush2.msra.mxu0 0.0
        %2657 = vmatprep.subr.mxu0 0.0
        %2658 = vmatpush2.msra.mxu0 0.0
        %2659 = vmatprep.subr.mxu0 0.0
        %2660 = vmatpush2.msra.mxu0 0.0
        %2661 = vmatprep.subr.mxu0 0.0
        %2662 = vmatpush2.msra.mxu0 0.0
        %2663 = vmatprep.subr.mxu0 0.0
        %2664 = vmatpush2.msra.mxu0 0.0
        %2665 = vmatprep.mubr.f32.mxu0 0.0
        %2666 = vmatmul.mubr.f32.gmra.mxu0 %v1053
        %v2667 = vpop.f32.mrf.mxu0
        %v2668 = vadd.f32 0.0, %v2667
        %v2669 = vpop.f32.mrf.mxu0
        %2670 = vmatprep.mubr.f32.mxu0 0.0
        %2671 = vmatmul.mubr.f32.gmra.mxu0 %v1055
        %v2672 = vpop.f32.mrf.mxu0
        %v2673 = vadd.f32 0.0, %v2672
        %v2674 = vpop.f32.mrf.mxu0
        %2675 = vmatprep.mubr.f32.mxu0 0.0
        %2676 = vmatmul.mubr.f32.gmra.mxu0 %v1058
        %v2677 = vpop.f32.mrf.mxu0
        %v2678 = vadd.f32 0.0, %v2677
        %v2679 = vpop.f32.mrf.mxu0
        %2680 = vmatprep.mubr.f32.mxu0 0.0
        %2681 = vmatmul.mubr.f32.gmra.mxu0 %v1060
        %v2682 = vpop.f32.mrf.mxu0
        %v2683 = vadd.f32 0.0, %v2682
        %v2684 = vpop.f32.mrf.mxu0
        %2685 = vmatprep.mubr.f32.mxu0 0.0
        %2686 = vmatmul.mubr.f32.gmra.mxu0 %v1063
        %v2687 = vpop.f32.mrf.mxu0
        %v2688 = vadd.f32 0.0, %v2687
        %v2689 = vpop.f32.mrf.mxu0
        %2690 = vmatprep.mubr.f32.mxu0 0.0
        %2691 = vmatmul.mubr.f32.gmra.mxu0 %v1065
        %v2692 = vpop.f32.mrf.mxu0
        %v2693 = vadd.f32 0.0, %v2692
        %v2694 = vpop.f32.mrf.mxu0
        %2695 = vmatprep.mubr.f32.mxu0 0.0
        %2696 = vmatmul.mubr.f32.gmra.mxu0 %v1068
        %v2697 = vpop.f32.mrf.mxu0
        %v2698 = vadd.f32 0.0, %v2697
        %v2699 = vpop.f32.mrf.mxu0
        %2700 = vmatprep.mubr.f32.mxu0 0.0
        %2701 = vmatmul.mubr.f32.gmra.mxu0 %v1070
        %v2702 = vpop.f32.mrf.mxu0
        %v2703 = vadd.f32 0.0, %v2702
        %v2704 = vpop.f32.mrf.mxu0
        %2705 = vmatprep.mubr.f32.mxu0 0.0
        %2706 = vmatmul.mubr.f32.gmra.mxu0 %v1073
        %v2707 = vpop.f32.mrf.mxu0
        %v2708 = vadd.f32 0.0, %v2707
        %v2709 = vpop.f32.mrf.mxu0
        %2710 = vmatprep.mubr.f32.mxu0 0.0
        %2711 = vmatmul.mubr.f32.gmra.mxu0 %v1075
        %v2712 = vpop.f32.mrf.mxu0
        %v2713 = vadd.f32 0.0, %v2712
        %v2714 = vpop.f32.mrf.mxu0
        %2715 = vmatprep.mubr.f32.mxu0 0.0
        %2716 = vmatmul.mubr.f32.gmra.mxu0 %v1078
        %v2717 = vpop.f32.mrf.mxu0
        %v2718 = vadd.f32 0.0, %v2717
        %v2719 = vpop.f32.mrf.mxu0
        %2720 = vmatprep.mubr.f32.mxu0 0.0
        %2721 = vmatmul.mubr.f32.gmra.mxu0 %v1080
        %v2722 = vpop.f32.mrf.mxu0
        %v2723 = vadd.f32 0.0, %v2722
        %v2724 = vpop.f32.mrf.mxu0
        %2725 = vmatprep.mubr.f32.mxu0 0.0
        %2726 = vmatmul.mubr.f32.gmra.mxu0 %v1083
        %v2727 = vpop.f32.mrf.mxu0
        %v2728 = vadd.f32 0.0, %v2727
        %v2729 = vpop.f32.mrf.mxu0
        %2730 = vmatprep.mubr.f32.mxu0 0.0
        %2731 = vmatmul.mubr.f32.gmra.mxu0 %v1085
        %v2732 = vpop.f32.mrf.mxu0
        %v2733 = vadd.f32 0.0, %v2732
        %v2734 = vpop.f32.mrf.mxu0
        %2735 = vmatprep.mubr.f32.mxu0 0.0
        %2736 = vmatmul.mubr.f32.gmra.mxu0 %v1088
        %v2737 = vpop.f32.mrf.mxu0
        %v2738 = vadd.f32 0.0, %v2737
        %v2739 = vpop.f32.mrf.mxu0
        %2740 = vmatprep.mubr.f32.mxu0 0.0
        %2741 = vmatmul.mubr.f32.gmra.mxu0 %v1090
        %v2742 = vpop.f32.mrf.mxu0
        %v2743 = vadd.f32 0.0, %v2742
        %v2744 = vpop.f32.mrf.mxu0
        %2745 = vmatprep.mubr.f32.mxu0 0.0
        %2746 = vmatmul.mubr.f32.gmra.mxu0 %v1093
        %v2747 = vpop.f32.mrf.mxu0
        %v2748 = vadd.f32 0.0, %v2747
        %v2749 = vpop.f32.mrf.mxu0
        %2750 = vmatprep.mubr.f32.mxu0 0.0
        %2751 = vmatmul.mubr.f32.gmra.mxu0 %v1095
        %v2752 = vpop.f32.mrf.mxu0
        %v2753 = vadd.f32 0.0, %v2752
        %v2754 = vpop.f32.mrf.mxu0
        %2755 = vmatprep.mubr.f32.mxu0 0.0
        %2756 = vmatmul.mubr.f32.gmra.mxu0 %v1098
        %v2757 = vpop.f32.mrf.mxu0
        %v2758 = vadd.f32 0.0, %v2757
        %v2759 = vpop.f32.mrf.mxu0
        %2760 = vmatprep.mubr.f32.mxu0 0.0
        %2761 = vmatmul.mubr.f32.gmra.mxu0 %v1100
        %v2762 = vpop.f32.mrf.mxu0
        %v2763 = vadd.f32 0.0, %v2762
        %v2764 = vpop.f32.mrf.mxu0
        %2765 = vmatprep.mubr.f32.mxu0 0.0
        %2766 = vmatmul.mubr.f32.gmra.mxu0 %v1103
        %v2767 = vpop.f32.mrf.mxu0
        %v2768 = vadd.f32 0.0, %v2767
        %v2769 = vpop.f32.mrf.mxu0
        %2770 = vmatprep.mubr.f32.mxu0 0.0
        %2771 = vmatmul.mubr.f32.gmra.mxu0 %v1105
        %v2772 = vpop.f32.mrf.mxu0
        %v2773 = vadd.f32 0.0, %v2772
        %v2774 = vpop.f32.mrf.mxu0
        %2775 = vmatprep.mubr.f32.mxu0 0.0
        %2776 = vmatmul.mubr.f32.gmra.mxu0 %v1108
        %v2777 = vpop.f32.mrf.mxu0
        %v2778 = vadd.f32 0.0, %v2777
        %v2779 = vpop.f32.mrf.mxu0
        %2780 = vmatprep.mubr.f32.mxu0 0.0
        %2781 = vmatmul.mubr.f32.gmra.mxu0 %v1110
        %v2782 = vpop.f32.mrf.mxu0
        %v2783 = vadd.f32 0.0, %v2782
        %v2784 = vpop.f32.mrf.mxu0
        %2785 = vmatprep.mubr.f32.mxu0 0.0
        %2786 = vmatmul.mubr.f32.gmra.mxu0 %v1113
        %v2787 = vpop.f32.mrf.mxu0
        %v2788 = vadd.f32 0.0, %v2787
        %v2789 = vpop.f32.mrf.mxu0
        %2790 = vmatprep.mubr.f32.mxu0 0.0
        %2791 = vmatmul.mubr.f32.gmra.mxu0 %v1115
        %v2792 = vpop.f32.mrf.mxu0
        %v2793 = vadd.f32 0.0, %v2792
        %v2794 = vpop.f32.mrf.mxu0
        %2795 = vmatprep.mubr.f32.mxu0 0.0
        %2796 = vmatmul.mubr.f32.gmra.mxu0 %v1118
        %v2797 = vpop.f32.mrf.mxu0
        %v2798 = vadd.f32 0.0, %v2797
        %v2799 = vpop.f32.mrf.mxu0
        %2800 = vmatprep.mubr.f32.mxu0 0.0
        %2801 = vmatmul.mubr.f32.gmra.mxu0 %v1120
        %v2802 = vpop.f32.mrf.mxu0
        %v2803 = vadd.f32 0.0, %v2802
        %v2804 = vpop.f32.mrf.mxu0
        %2805 = vmatprep.mubr.f32.mxu0 0.0
        %2806 = vmatmul.mubr.f32.gmra.mxu0 %v1872
        %v2807 = vpop.f32.mrf.mxu0
        %v2808 = vadd.f32 0.0, %v2807
        %v2809 = vpop.f32.mrf.mxu0
        %2810 = vmatprep.mubr.f32.mxu0 0.0
        %2811 = vmatmul.mubr.f32.gmra.mxu0 %v1874
        %v2812 = vpop.f32.mrf.mxu0
        %v2813 = vadd.f32 0.0, %v2812
        %v2814 = vpop.f32.mrf.mxu0
        %2815 = vmatprep.mubr.f32.mxu0 0.0
        %2816 = vmatmul.mubr.f32.gmra.mxu0 %v2596
        %v2817 = vpop.f32.mrf.mxu0
        %v2818 = vadd.f32 0.0, %v2817
        %v2819 = vpop.f32.mrf.mxu0
        %2820 = vmatprep.mubr.f32.mxu0 0.0
        %2821 = vmatmul.mubr.f32.gmra.mxu0 %v2598
        %v2822 = vpop.f32.mrf.mxu0
        %v2823 = vadd.f32 0.0, %v2822
        %v2824 = vpop.f32.mrf.mxu0
        %2825 = vdwg.mxu0
        %v2826 = vadd.f32 %v2436, %v2668
        %v2827 = vadd.f32 %v2441, %v2673
        %v2828 = vadd.f32 %v2446, %v2678
        %v2829 = vadd.f32 %v2451, %v2683
        %v2830 = vadd.f32 %v2456, %v2688
        %v2831 = vadd.f32 %v2461, %v2693
        %v2832 = vadd.f32 %v2466, %v2698
        %v2833 = vadd.f32 %v2471, %v2703
        %v2834 = vadd.f32 %v2476, %v2708
        %v2835 = vadd.f32 %v2481, %v2713
        %v2836 = vadd.f32 %v2486, %v2718
        %v2837 = vadd.f32 %v2491, %v2723
        %v2838 = vadd.f32 %v2496, %v2728
        %v2839 = vadd.f32 %v2501, %v2733
        %v2840 = vadd.f32 %v2506, %v2738
        %v2841 = vadd.f32 %v2511, %v2743
        %v2842 = vadd.f32 %v2516, %v2748
        %v2843 = vadd.f32 %v2521, %v2753
        %v2844 = vadd.f32 %v2526, %v2758
        %v2845 = vadd.f32 %v2531, %v2763
        %v2846 = vadd.f32 %v2536, %v2768
        %v2847 = vadd.f32 %v2541, %v2773
        %v2848 = vadd.f32 %v2546, %v2778
        %v2849 = vadd.f32 %v2551, %v2783
        %v2850 = vadd.f32 %v2556, %v2788
        %v2851 = vadd.f32 %v2561, %v2793
        %v2852 = vadd.f32 %v2566, %v2798
        %v2853 = vadd.f32 %v2571, %v2803
        %v2854 = vadd.f32 %v2576, %v2808
        %v2855 = vadd.f32 %v2581, %v2813
        %v2856 = vadd.f32 %v2586, %v2818
        %v2857 = vadd.f32 %v2591, %v2823
        %v2858 = vadd.f32 %v1378, %v2102
        %v2859 = vadd.f32 %v1379, %v2103
        %v2860 = vadd.f32 %v1380, %v2104
        %v2861 = vadd.f32 %v1381, %v2105
        %v2862 = vadd.f32 %v1382, %v2106
        %v2863 = vadd.f32 %v1383, %v2107
        %v2864 = vadd.f32 %v1384, %v2108
        %v2865 = vadd.f32 %v1385, %v2109
        %v2866 = vadd.f32 %v1386, %v2110
        %v2867 = vadd.f32 %v1387, %v2111
        %v2868 = vadd.f32 %v1388, %v2112
        %v2869 = vadd.f32 %v1389, %v2113
        %v2870 = vadd.f32 %v1390, %v2114
        %v2871 = vadd.f32 %v1391, %v2115
        %v2872 = vadd.f32 %v1392, %v2116
        %v2873 = vadd.f32 %v1393, %v2117
        %v2874 = vadd.f32 %v1394, %v2118
        %v2875 = vadd.f32 %v1395, %v2119
        %v2876 = vadd.f32 %v1396, %v2120
        %v2877 = vadd.f32 %v1397, %v2121
        %v2878 = vadd.f32 %v1398, %v2122
        %v2879 = vadd.f32 %v1399, %v2123
        %v2880 = vadd.f32 %v1400, %v2124
        %v2881 = vadd.f32 %v1401, %v2125
        %v2882 = vadd.f32 %v1402, %v2126
        %v2883 = vadd.f32 %v1403, %v2127
        %v2884 = vadd.f32 %v1404, %v2128
        %v2885 = vadd.f32 %v1405, %v2129
        %v2886 = vadd.f32 %v1406, %v2130
        %v2887 = vadd.f32 %v1407, %v2131
        %v2888 = vadd.f32 %v1408, %v2132
        %v2889 = vadd.f32 %v1409, %v2133
        %v2890 = vadd.f32 %v2858, %v2826
        %v2891 = vadd.f32 %v2859, %v2827
        %v2892 = vadd.f32 %v2860, %v2828
        %v2893 = vadd.f32 %v2861, %v2829
        %v2894 = vadd.f32 %v2862, %v2830
        %v2895 = vadd.f32 %v2863, %v2831
        %v2896 = vadd.f32 %v2864, %v2832
        %v2897 = vadd.f32 %v2865, %v2833
        %v2898 = vadd.f32 %v2866, %v2834
        %v2899 = vadd.f32 %v2867, %v2835
        %v2900 = vadd.f32 %v2868, %v2836
        %v2901 = vadd.f32 %v2869, %v2837
        %v2902 = vadd.f32 %v2870, %v2838
        %v2903 = vadd.f32 %v2871, %v2839
        %v2904 = vadd.f32 %v2872, %v2840
        %v2905 = vadd.f32 %v2873, %v2841
        %v2906 = vadd.f32 %v2874, %v2842
        %v2907 = vadd.f32 %v2875, %v2843
        %v2908 = vadd.f32 %v2876, %v2844
        %v2909 = vadd.f32 %v2877, %v2845
        %v2910 = vadd.f32 %v2878, %v2846
        %v2911 = vadd.f32 %v2879, %v2847
        %v2912 = vadd.f32 %v2880, %v2848
        %v2913 = vadd.f32 %v2881, %v2849
        %v2914 = vadd.f32 %v2882, %v2850
        %v2915 = vadd.f32 %v2883, %v2851
        %v2916 = vadd.f32 %v2884, %v2852
        %v2917 = vadd.f32 %v2885, %v2853
        %v2918 = vadd.f32 %v2886, %v2854
        %v2919 = vadd.f32 %v2887, %v2855
        %v2920 = vadd.f32 %v2888, %v2856
        %v2921 = vadd.f32 %v2889, %v2857
        %v2922 = vld [vmem:[%s229] sm:$0x1]
        %v2924 = vlaneseq
        %v2925 = vshrl.u32 %v2924, 7
        %v2926 = vsub.s32 0, %v2925
        %v2927 = vrot.slane %v2922, %v2926
        %v2929 = vadd.f32 %v2890, %v2927
        %v2930 = vadd.f32 %v2891, %v2927
        %v2931 = vadd.f32 %v2892, %v2927
        %v2932 = vadd.f32 %v2893, %v2927
        %v2933 = vadd.f32 %v2894, %v2927
        %v2934 = vadd.f32 %v2895, %v2927
        %v2935 = vadd.f32 %v2896, %v2927
        %v2936 = vadd.f32 %v2897, %v2927
        %v2937 = vadd.f32 %v2898, %v2927
        %v2938 = vadd.f32 %v2899, %v2927
        %v2939 = vadd.f32 %v2900, %v2927
        %v2940 = vadd.f32 %v2901, %v2927
        %v2941 = vadd.f32 %v2902, %v2927
        %v2942 = vadd.f32 %v2903, %v2927
        %v2943 = vadd.f32 %v2904, %v2927
        %v2944 = vadd.f32 %v2905, %v2927
        %v2945 = vadd.f32 %v2906, %v2927
        %v2946 = vadd.f32 %v2907, %v2927
        %v2947 = vadd.f32 %v2908, %v2927
        %v2948 = vadd.f32 %v2909, %v2927
        %v2949 = vadd.f32 %v2910, %v2927
        %v2950 = vadd.f32 %v2911, %v2927
        %v2951 = vadd.f32 %v2912, %v2927
        %v2952 = vadd.f32 %v2913, %v2927
        %v2953 = vadd.f32 %v2914, %v2927
        %v2954 = vadd.f32 %v2915, %v2927
        %v2955 = vadd.f32 %v2916, %v2927
        %v2956 = vadd.f32 %v2917, %v2927
        %v2957 = vadd.f32 %v2918, %v2927
        %v2958 = vadd.f32 %v2919, %v2927
        %v2959 = vadd.f32 %v2920, %v2927
        %v2960 = vadd.f32 %v2921, %v2927
        %2961 = vst [vmem:[%s215] sm:$0xff] %v2929
        %2962 = vst [vmem:[%s215 + $0x8] sm:$0xff] %v2930
        %2963 = vst [vmem:[%s215 + $0x10] sm:$0xff] %v2931
        %2964 = vst [vmem:[%s215 + $0x18] sm:$0xff] %v2932
        %2965 = vst [vmem:[%s215 + $0x20] sm:$0xff] %v2933
        %2966 = vst [vmem:[%s215 + $0x28] sm:$0xff] %v2934
        %2967 = vst [vmem:[%s215 + $0x30] sm:$0xff] %v2935
        %2968 = vst [vmem:[%s215 + $0x38] sm:$0xff] %v2936
        %2969 = vst [vmem:[%s215 + $0x40] sm:$0xff] %v2937
        %2970 = vst [vmem:[%s215 + $0x48] sm:$0xff] %v2938
        %2971 = vst [vmem:[%s215 + $0x50] sm:$0xff] %v2939
        %2972 = vst [vmem:[%s215 + $0x58] sm:$0xff] %v2940
        %2973 = vst [vmem:[%s215 + $0x60] sm:$0xff] %v2941
        %2974 = vst [vmem:[%s215 + $0x68] sm:$0xff] %v2942
        %2975 = vst [vmem:[%s215 + $0x70] sm:$0xff] %v2943
        %2976 = vst [vmem:[%s215 + $0x78] sm:$0xff] %v2944
        %2977 = vst [vmem:[%s215 + $0x80] sm:$0xff] %v2945
        %2978 = vst [vmem:[%s215 + $0x88] sm:$0xff] %v2946
        %2979 = vst [vmem:[%s215 + $0x90] sm:$0xff] %v2947
        %2980 = vst [vmem:[%s215 + $0x98] sm:$0xff] %v2948
        %2981 = vst [vmem:[%s215 + $0xa0] sm:$0xff] %v2949
        %2982 = vst [vmem:[%s215 + $0xa8] sm:$0xff] %v2950
        %2983 = vst [vmem:[%s215 + $0xb0] sm:$0xff] %v2951
        %2984 = vst [vmem:[%s215 + $0xb8] sm:$0xff] %v2952
        %2985 = vst [vmem:[%s215 + $0xc0] sm:$0xff] %v2953
        %2986 = vst [vmem:[%s215 + $0xc8] sm:$0xff] %v2954
        %2987 = vst [vmem:[%s215 + $0xd0] sm:$0xff] %v2955
        %2988 = vst [vmem:[%s215 + $0xd8] sm:$0xff] %v2956
        %2989 = vst [vmem:[%s215 + $0xe0] sm:$0xff] %v2957
        %2990 = vst [vmem:[%s215 + $0xe8] sm:$0xff] %v2958
        %2991 = vst [vmem:[%s215 + $0xf0] sm:$0xff] %v2959
        %2992 = vst [vmem:[%s215 + $0xf8] sm:$0xff] %v2960
        %s2993 = sand.u32 %s128, 1
        %s2994 = scalar_lea.sflag [#allocation3], %s2993
        %s2995 = sand.u32 %s128, 1
        %s2996 = smul.addr %s2995, 256
        %s2997 = scalar_lea.vmem [#allocation2], %s2996
        // Predicated region
        $region33: #{tpu_custom_call.1} parent=31 // pred_check
          %p2998 = pneg %p138
        $region34: #{tpu_custom_call.1} parent=31 // pred_check_branch
          %3000 = sbr.rel (%p2998) target = $region36
        $region35: #{tpu_custom_call.1} parent=31 // pred_region
          %s3001 = smul.u32 16, %s23
          %s3003 = ssub.s32 4096, 4096
          %3004 = vsyncadd %s2994, %s3003
          %s3005 = smul.addr %s3001, 2
          %s3006 = sadd.s32 %s24, %s3005
          %s3007 = smul.addr %s22, 32
          %s3008 = sadd.s32 %s3006, %s3007
          %s3009 = smul.addr %s3008, 128
          %s3010 = scalar_lea.hbm %s3, %s3009
          %s3011 = sshll.u32 %s2997, 4
          %s3012 = int_to_ptr.vmem [resolvable:$true] %s3011
          %3017 = dma.vmem_to_hbm [thread:$0]  %s3012, 4096, %s3010, %s2994, 128, 128, 8
        $region36: #{tpu_custom_call.1} parent=31 // pred_fallthru
          _
      $region32: #{tpu_custom_call.1} parent=5 // pred_fallthru
        _
      %p3018 = scmp.le.s32.totalorder 2, %s12
      // Predicated region
      $region37: #{tpu_custom_call.1} parent=5 // pred_check
        %p3019 = pneg %p3018
      $region38: #{tpu_custom_call.1} parent=5 // pred_check_branch
        %3021 = sbr.rel (%p3019) target = $region40
      $region39: #{tpu_custom_call.1} parent=5 // pred_region
        %s3022 = ssub.s32 %s12, 2
        // Predicated region
        $region41: #{tpu_custom_call.1} parent=39 // pred_check
          %p3023 = pneg %p144
        $region42: #{tpu_custom_call.1} parent=39 // pred_check_branch
          %3025 = sbr.rel (%p3023) target = $region44
        $region43: #{tpu_custom_call.1} parent=39 // pred_region
          %s3026 = sand.u32 %s129, 1
          %s3027 = scalar_lea.sflag [#allocation3], %s3026
          %s3028 = sand.u32 %s129, 1
          %s3029 = smul.addr %s3028, 256
          %s3030 = scalar_lea.vmem [#allocation2], %s3029
          %3031 = dma.done %s3027, 4096
        $region44: #{tpu_custom_call.1} parent=39 // pred_fallthru
          _
      $region40: #{tpu_custom_call.1} parent=5 // pred_fallthru
        _
    $region6: #{tpu_custom_call.1} parent=1 // loop_footer
      %s16 = sadd.s32 1, %s12
    $region7: #{tpu_custom_call.1} parent=1 // loop_footer_branch
      %11 = sbr.rel target = $region3
    $region8: #{tpu_custom_call.1} parent=1 // loop_exit
      _
    %3032 = vsyncpa [#allocation3], 1
    %s3033 = scalar_lea.sflag [#allocation3], 1
    %3034 = vsyncpa %s3033, 1

</llo_original>
